<compile_context>
chip_gen: v5e
topology: v5e:2x2
jax: 0.10.0
libtpu: 0.0.40
codegen_flags: <defaults>
</compile_context>

<pallas_src>
import jax
import jax.numpy as jnp
from jax import random
from jax.experimental import pallas as pl
from jax.experimental.pallas import tpu as pltpu


def _ceil_to(x, m):
    return ((x + m - 1) // m) * m


# ---------------------------------------------------------------------------
# Kernel A: fused aspp_conv1 (1x1 conv + BN*gate + ReLU) + conv_up1 (1x1 conv
# with bias).  Operates on a (tile_p, Cin) bf16 tile; two MXU dots per tile.
# ---------------------------------------------------------------------------
def _aspp_up1_kernel(x_ref, w1_ref, sg_ref, sh_ref, wu_ref, bu_ref, o_ref):
    z = jnp.dot(x_ref[...], w1_ref[...], preferred_element_type=jnp.float32)
    z = jnp.maximum(z * sg_ref[...] + sh_ref[...], 0.0)          # BN*gate + ReLU
    y = jnp.dot(z.astype(jnp.bfloat16), wu_ref[...],
                preferred_element_type=jnp.float32)
    o_ref[...] = (y + bu_ref[...]).astype(o_ref.dtype)


def aspp_up1(x_npc, w1, scale_gate, shift_gate, wu, bu, tile_p=512):
    """x_npc: (N, P, K) bf16 channels-last. scale/shift_gate: (N, Cm) f32."""
    N, P, K = x_npc.shape
    Cm = w1.shape[1]
    Co = wu.shape[1]
    tile_p = min(tile_p, _ceil_to(P, 16))
    P_pad = _ceil_to(P, tile_p)
    if P_pad != P:
        x_npc = jnp.pad(x_npc, ((0, 0), (0, P_pad - P), (0, 0)))

    out = pl.pallas_call(
        _aspp_up1_kernel,
        out_shape=jax.ShapeDtypeStruct((N, P_pad, Co), jnp.float32),
        grid=(N, P_pad // tile_p),
        in_specs=[
            pl.BlockSpec((None, tile_p, K), lambda n, i: (n, i, 0)),
            pl.BlockSpec((K, Cm), lambda n, i: (0, 0)),
            pl.BlockSpec((None, 1, Cm), lambda n, i: (n, 0, 0)),
            pl.BlockSpec((None, 1, Cm), lambda n, i: (n, 0, 0)),
            pl.BlockSpec((Cm, Co), lambda n, i: (0, 0)),
            pl.BlockSpec((1, Co), lambda n, i: (0, 0)),
        ],
        out_specs=pl.BlockSpec((None, tile_p, Co), lambda n, i: (n, i, 0)),
        compiler_params=pltpu.CompilerParams(
            dimension_semantics=("parallel", "parallel")),
    )(x_npc,
      w1.astype(jnp.bfloat16),
      scale_gate.reshape(N, 1, Cm).astype(jnp.float32),
      shift_gate.reshape(N, 1, Cm).astype(jnp.float32),
      wu.astype(jnp.bfloat16),
      bu.reshape(1, Co).astype(jnp.float32))
    return out[:, :P, :]


# ---------------------------------------------------------------------------
# Kernel B: fused (convs{2,4} + concat + conv_up{2,3} + BN + ReLU) as two
# accumulated dots:  relu((a @ Wa + b @ Wb) * scale + shift).
# a is the 128-channel upsampled feature (bf16), b is the raw skip feature
# (tiny Cin, kept f32), Wb = convs_w @ up_w[128:] is precomputed.
# ---------------------------------------------------------------------------
def _dual_conv_bn_relu_kernel(a_ref, b_ref, wa_ref, wb_ref, sc_ref, sh_ref,
                              o_ref):
    acc = jnp.dot(a_ref[...], wa_ref[...], preferred_element_type=jnp.float32)
    acc = acc + jnp.dot(b_ref[...], wb_ref[...],
                        preferred_element_type=jnp.float32)
    o_ref[...] = jnp.maximum(acc * sc_ref[...] + sh_ref[...],
                             0.0).astype(o_ref.dtype)


def dual_conv_bn_relu(a, b, wa, wb, scale, shift, tile_p=512):
    """a: (P, Ca) bf16, b: (P, Cb) f32 -> relu((a@wa + b@wb)*scale + shift)."""
    P, Ca = a.shape
    Cb = b.shape[1]
    Co = wa.shape[1]
    tile_p = min(tile_p, _ceil_to(P, 16))
    P_pad = _ceil_to(P, tile_p)
    if P_pad != P:
        a = jnp.pad(a, ((0, P_pad - P), (0, 0)))
        b = jnp.pad(b, ((0, P_pad - P), (0, 0)))

    out = pl.pallas_call(
        _dual_conv_bn_relu_kernel,
        out_shape=jax.ShapeDtypeStruct((P_pad, Co), jnp.float32),
        grid=(P_pad // tile_p,),
        in_specs=[
            pl.BlockSpec((tile_p, Ca), lambda i: (i, 0)),
            pl.BlockSpec((tile_p, Cb), lambda i: (i, 0)),
            pl.BlockSpec((Ca, Co), lambda i: (0, 0)),
            pl.BlockSpec((Cb, Co), lambda i: (0, 0)),
            pl.BlockSpec((1, Co), lambda i: (0, 0)),
            pl.BlockSpec((1, Co), lambda i: (0, 0)),
        ],
        out_specs=pl.BlockSpec((tile_p, Co), lambda i: (i, 0)),
        compiler_params=pltpu.CompilerParams(
            dimension_semantics=("parallel",)),
    )(a.astype(jnp.bfloat16), b.astype(jnp.float32),
      wa.astype(jnp.bfloat16), wb.astype(jnp.float32),
      scale.reshape(1, Co).astype(jnp.float32),
      shift.reshape(1, Co).astype(jnp.float32))
    return out[:P]


# ---------------------------------------------------------------------------
# Bilinear resize (PyTorch F.interpolate semantics) via separable
# interpolation-matrix contractions, channels-last.  These matrices are tiny
# (K = 16/32/49), so they are left to XLA rather than a pallas_call.
# ---------------------------------------------------------------------------
def _interp_matrix(out_size, in_size, align_corners):
    out_size, in_size = int(out_size), int(in_size)
    d = jnp.arange(out_size, dtype=jnp.float32)
    if align_corners:
        if out_size == 1:
            src = jnp.zeros((out_size,), jnp.float32)
        else:
            src = d * ((in_size - 1) / (out_size - 1))
    else:
        src = (d + 0.5) * (in_size / out_size) - 0.5
        src = jnp.maximum(src, 0.0)
    i0 = jnp.clip(jnp.floor(src).astype(jnp.int32), 0, in_size - 1)
    i1 = jnp.minimum(i0 + 1, in_size - 1)
    lam = src - i0.astype(jnp.float32)
    return (jax.nn.one_hot(i0, in_size, dtype=jnp.float32) * (1.0 - lam)[:, None]
            + jax.nn.one_hot(i1, in_size, dtype=jnp.float32) * lam[:, None])


def bilinear_resize_nhwc(x, out_h, out_w, align_corners=False):
    N, H, W, C = x.shape
    if (H, W) == (out_h, out_w):
        return x
    mh = _interp_matrix(out_h, H, align_corners)       # (Ho, H)
    mw = _interp_matrix(out_w, W, align_corners)       # (Wo, W)
    t = jnp.einsum('oh,nhwc->nowc', mh, x)
    return jnp.einsum('pw,nowc->nopc', mw, t)          # (N, Ho, Wo, C)


# ---------------------------------------------------------------------------
# Parameter init (deterministic; shapes from LRASPP.__init__ with defaults:
# use_aspp=False, num_filters=128, mobilenet_size_large=True -> s2_ch=16,
# s4_ch=24, high_level_ch=960).
# ---------------------------------------------------------------------------
def _bn_fold(key, c, eps=1e-5):
    k1, k2, k3, k4 = random.split(key, 4)
    gamma = random.uniform(k1, (c,), jnp.float32, 0.5, 1.5)
    beta = random.normal(k2, (c,), jnp.float32) * 0.1
    mean = random.normal(k3, (c,), jnp.float32) * 0.1
    var = random.uniform(k4, (c,), jnp.float32, 0.5, 1.5)
    scale = gamma / jnp.sqrt(var + eps)
    shift = beta - mean * scale
    return scale, shift


def init_params(key):
    ks = random.split(key, 12)

    def w(k, cin, cout):
        return random.normal(k, (cin, cout), jnp.float32) / jnp.sqrt(float(cin))

    p = {}
    p["aspp1_w"] = w(ks[0], 960, 128)
    p["aspp1_bn_scale"], p["aspp1_bn_shift"] = _bn_fold(ks[1], 128)
    p["aspp2_w"] = w(ks[2], 960, 128)
    p["up1_w"] = w(ks[3], 128, 128)
    p["up1_b"] = random.normal(ks[4], (128,), jnp.float32) * 0.05
    p["convs4_w"] = w(ks[5], 24, 64)
    p["convs2_w"] = w(ks[6], 16, 32)
    p["up2_w"] = w(ks[7], 192, 128)
    p["up2_bn_scale"], p["up2_bn_shift"] = _bn_fold(ks[8], 128)
    p["up3_w"] = w(ks[9], 160, 128)
    p["up3_bn_scale"], p["up3_bn_shift"] = _bn_fold(ks[10], 128)
    return p


# ---------------------------------------------------------------------------
# Whole-batch forward (one jit).  Inputs/outputs NCHW at the boundary only.
# ---------------------------------------------------------------------------
def _lraspp_forward(params, s2, s4, final):
    N = s2.shape[0]
    H2, W2 = s2.shape[2], s2.shape[3]
    H4, W4 = s4.shape[2], s4.shape[3]
    Hf, Wf = final.shape[2], final.shape[3]

    # AvgPool2d((49,49), stride=(16,20)) equals the global mean only for an
    # exactly 49x49 high-level feature map (then the align_corners=True
    # bilinear upsample of the resulting 1x1 map is a constant broadcast).
    if not (Hf == 49 and Wf == 49):
        # TODO(synk): general sliding-window AvgPool2d not implemented.
        raise ValueError("LRASPP Pallas head requires a 49x49 high-level map")

    # NCHW -> channels-last once, at the boundary.
    s2_cl = jnp.transpose(s2, (0, 2, 3, 1)).astype(jnp.float32)
    s4_cl = jnp.transpose(s4, (0, 2, 3, 1)).astype(jnp.float32)
    final_cl = jnp.transpose(final, (0, 2, 3, 1)).astype(jnp.float32)

    # aspp_conv2 branch: global mean -> 1x1 conv -> sigmoid.  Tiny: plain jnp.
    pooled = jnp.mean(final_cl, axis=(1, 2))                      # (N, 960)
    gate = jax.nn.sigmoid(pooled @ params["aspp2_w"])             # (N, 128)
    # Fold the (strictly positive) gate into the BN affine of aspp_conv1:
    # relu(z*s + t) * g == relu(z*(s*g) + (t*g)).
    scale_g = params["aspp1_bn_scale"][None, :] * gate            # (N, 128)
    shift_g = params["aspp1_bn_shift"][None, :] * gate            # (N, 128)

    # Kernel A: aspp_conv1 + gate + conv_up1 fused.
    x_npc = final_cl.reshape(N, Hf * Wf, 960).astype(jnp.bfloat16)
    y_up1 = aspp_up1(x_npc, params["aspp1_w"], scale_g, shift_g,
                     params["up1_w"], params["up1_b"])            # (N, P, 128)
    y_up1 = y_up1.reshape(N, Hf, Wf, 128)

    # Upsample to s4 resolution -> dx1.
    dx1 = bilinear_resize_nhwc(y_up1, H4, W4, align_corners=False)

    # Kernel B (up2): cat([dx1, convs4(s4)]) @ up2_w + BN + ReLU, fused as
    # dx1 @ up2_w[:128] + s4 @ (convs4_w @ up2_w[128:]).
    wb4 = params["convs4_w"] @ params["up2_w"][128:]              # (24, 128)
    y2 = dual_conv_bn_relu(
        dx1.reshape(N * H4 * W4, 128),
        s4_cl.reshape(N * H4 * W4, -1),
        params["up2_w"][:128], wb4,
        params["up2_bn_scale"], params["up2_bn_shift"])
    y2 = y2.reshape(N, H4, W4, 128)

    # Upsample to s2 resolution -> dx2.
    dx2 = bilinear_resize_nhwc(y2, H2, W2, align_corners=False)

    # Kernel B (up3): cat([dx2, convs2(s2)]) @ up3_w + BN + ReLU.
    wb2 = params["convs2_w"] @ params["up3_w"][128:]              # (16, 128)
    y3 = dual_conv_bn_relu(
        dx2.reshape(N * H2 * W2, 128),
        s2_cl.reshape(N * H2 * W2, -1),
        params["up3_w"][:128], wb2,
        params["up3_bn_scale"], params["up3_bn_shift"])
    dx3 = y3.reshape(N, H2, W2, 128)

    # mode == -1 (default): x_out = dx3, then final bilinear upsample.
    # TODO(synk): the reference interpolates to `x.shape[2:]` where `x` is
    # undefined; we take it to be the full-resolution input (2x the s2 size).
    x_out = bilinear_resize_nhwc(dx3, 2 * H2, 2 * W2, align_corners=False)

    to_nchw = lambda t: jnp.transpose(t, (0, 3, 1, 2))
    return {
        "extra_output_dict": {},
        "dx1": to_nchw(dx1),
        "dx2": to_nchw(dx2),
        "dx3": to_nchw(dx3),
        "x_out": to_nchw(x_out),
    }


lraspp_forward = jax.jit(_lraspp_forward)


if __name__ == "__main__":
    key = random.PRNGKey(0)
    k_par, k_in = random.split(key)
    params = init_params(k_par)

    N = 2
    ks2, ks4, kf = random.split(k_in, 3)
    s2 = random.normal(ks2, (N, 16, 32, 32), jnp.float32)      # stride-2 features
    s4 = random.normal(ks4, (N, 24, 16, 16), jnp.float32)      # stride-4 features
    final = random.normal(kf, (N, 960, 49, 49), jnp.float32)   # high-level features

    out = lraspp_forward(params, s2, s4, final)
    jax.block_until_ready(out)

    assert out["dx1"].shape == (N, 128, 16, 16)
    assert out["dx2"].shape == (N, 128, 32, 32)
    assert out["dx3"].shape == (N, 128, 32, 32)
    assert out["x_out"].shape == (N, 128, 64, 64)
    assert bool(jnp.isfinite(out["x_out"]).all())
    assert bool(jnp.isfinite(out["dx1"]).all())
    print("KERNEL_OK")
</pallas_src>

<mosaic_0001>
module attributes {stable_mosaic.version = 11 : i64} {
  func.func @_aspp_up1_kernel(%arg0: i32, %arg1: i32, %arg2: memref<1x512x960xbf16, #tpu.memory_space<vmem>>, %arg3: memref<960x128xbf16, #tpu.memory_space<vmem>>, %arg4: memref<1x1x128xf32, #tpu.memory_space<vmem>>, %arg5: memref<1x1x128xf32, #tpu.memory_space<vmem>>, %arg6: memref<128x128xbf16, #tpu.memory_space<vmem>>, %arg7: memref<1x128xf32, #tpu.memory_space<vmem>>, %arg8: memref<1x512x128xf32, #tpu.memory_space<vmem>>) attributes {dimension_semantics = [#tpu.dimension_semantics<parallel>, #tpu.dimension_semantics<parallel>], iteration_bounds = array<i64: 2, 5>, scalar_prefetch = 0 : i64, scratch_operands = 0 : i64, tpu.core_type = #tpu.core_type<tc>, window_params = [{transform_indices = @transform_0, window_bounds = array<i64: 1, 512, 960>}, {pipeline_mode = #tpu.pipeline_mode<synchronous>, transform_indices = @transform_1, window_bounds = array<i64: 960, 128>}, {transform_indices = @transform_2, window_bounds = array<i64: 1, 1, 128>}, {transform_indices = @transform_3, window_bounds = array<i64: 1, 1, 128>}, {pipeline_mode = #tpu.pipeline_mode<synchronous>, transform_indices = @transform_4, window_bounds = array<i64: 128, 128>}, {pipeline_mode = #tpu.pipeline_mode<synchronous>, transform_indices = @transform_5, window_bounds = array<i64: 1, 128>}, {transform_indices = @transform_6, window_bounds = array<i64: 1, 512, 128>}]} {
    %c0 = arith.constant 0 : index
    %c0_0 = arith.constant 0 : index
    %c0_1 = arith.constant 0 : index
    %0 = vector.load %arg2[%c0, %c0_0, %c0_1] : memref<1x512x960xbf16, #tpu.memory_space<vmem>>, vector<1x512x960xbf16>
    %1 = vector.shape_cast %0 : vector<1x512x960xbf16> to vector<512x960xbf16>
    %c0_2 = arith.constant 0 : index
    %c0_3 = arith.constant 0 : index
    %2 = vector.load %arg3[%c0_2, %c0_3] : memref<960x128xbf16, #tpu.memory_space<vmem>>, vector<960x128xbf16>
    %cst = arith.constant dense<0.000000e+00> : vector<512x128xf32>
    %3 = tpu.matmul %1, %2, %cst {dimension_numbers = #tpu.dot_dimension_numbers<[1], [0], [0], [1], [0, 0, 1, 1], [], []>} : vector<512x960xbf16>, vector<960x128xbf16>, vector<512x128xf32> -> vector<512x128xf32>
    %c0_4 = arith.constant 0 : index
    %c0_5 = arith.constant 0 : index
    %c0_6 = arith.constant 0 : index
    %4 = vector.load %arg4[%c0_4, %c0_5, %c0_6] : memref<1x1x128xf32, #tpu.memory_space<vmem>>, vector<1x1x128xf32>
    %5 = vector.shape_cast %4 : vector<1x1x128xf32> to vector<1x128xf32>
    %6 = vector.broadcast %5 : vector<1x128xf32> to vector<512x128xf32>
    %7 = arith.mulf %3, %6 : vector<512x128xf32>
    %c0_7 = arith.constant 0 : index
    %c0_8 = arith.constant 0 : index
    %c0_9 = arith.constant 0 : index
    %8 = vector.load %arg5[%c0_7, %c0_8, %c0_9] : memref<1x1x128xf32, #tpu.memory_space<vmem>>, vector<1x1x128xf32>
    %9 = vector.shape_cast %8 : vector<1x1x128xf32> to vector<1x128xf32>
    %10 = vector.broadcast %9 : vector<1x128xf32> to vector<512x128xf32>
    %11 = arith.addf %7, %10 : vector<512x128xf32>
    %cst_10 = arith.constant 0.000000e+00 : f32
    %12 = vector.broadcast %cst_10 : f32 to vector<512x128xf32>
    %13 = arith.maximumf %11, %12 : vector<512x128xf32>
    %14 = arith.truncf %13 : vector<512x128xf32> to vector<512x128xbf16>
    %c0_11 = arith.constant 0 : index
    %c0_12 = arith.constant 0 : index
    %15 = vector.load %arg6[%c0_11, %c0_12] : memref<128x128xbf16, #tpu.memory_space<vmem>>, vector<128x128xbf16>
    %cst_13 = arith.constant dense<0.000000e+00> : vector<512x128xf32>
    %16 = tpu.matmul %14, %15, %cst_13 {dimension_numbers = #tpu.dot_dimension_numbers<[1], [0], [0], [1], [0, 0, 1, 1], [], []>} : vector<512x128xbf16>, vector<128x128xbf16>, vector<512x128xf32> -> vector<512x128xf32>
    %c0_14 = arith.constant 0 : index
    %c0_15 = arith.constant 0 : index
    %17 = vector.load %arg7[%c0_14, %c0_15] : memref<1x128xf32, #tpu.memory_space<vmem>>, vector<1x128xf32>
    %18 = vector.broadcast %17 : vector<1x128xf32> to vector<512x128xf32>
    %19 = arith.addf %16, %18 : vector<512x128xf32>
    %c0_16 = arith.constant 0 : index
    %c0_17 = arith.constant 0 : index
    %c0_18 = arith.constant 0 : index
    %20 = vector.load %arg8[%c0_16, %c0_17, %c0_18] : memref<1x512x128xf32, #tpu.memory_space<vmem>>, vector<1x512x128xf32>
    %21 = vector.shape_cast %20 : vector<1x512x128xf32> to vector<512x128xf32>
    %22 = vector.shape_cast %19 : vector<512x128xf32> to vector<1x512x128xf32>
    tpu.vector_store %arg8[%c0_16, %c0_17, %c0_18], %22 {strides = array<i32>} : memref<1x512x128xf32, #tpu.memory_space<vmem>>, vector<1x512x128xf32>,
    return
  }
  func.func @transform_0(%arg0: i32, %arg1: i32) -> (i32, i32, i32) {
    %c0_i32 = arith.constant 0 : i32
    %c0_i32_0 = arith.constant 0 : i32
    return %arg0, %arg1, %c0_i32 : i32, i32, i32
  }
  func.func @transform_1(%arg0: i32, %arg1: i32) -> (i32, i32) {
    %c0_i32 = arith.constant 0 : i32
    %c0_i32_0 = arith.constant 0 : i32
    %c0_i32_1 = arith.constant 0 : i32
    return %c0_i32, %c0_i32_0 : i32, i32
  }
  func.func @transform_2(%arg0: i32, %arg1: i32) -> (i32, i32, i32) {
    %c0_i32 = arith.constant 0 : i32
    %c0_i32_0 = arith.constant 0 : i32
    %c0_i32_1 = arith.constant 0 : i32
    return %arg0, %c0_i32, %c0_i32_0 : i32, i32, i32
  }
  func.func @transform_3(%arg0: i32, %arg1: i32) -> (i32, i32, i32) {
    %c0_i32 = arith.constant 0 : i32
    %c0_i32_0 = arith.constant 0 : i32
    %c0_i32_1 = arith.constant 0 : i32
    return %arg0, %c0_i32, %c0_i32_0 : i32, i32, i32
  }
  func.func @transform_4(%arg0: i32, %arg1: i32) -> (i32, i32) {
    %c0_i32 = arith.constant 0 : i32
    %c0_i32_0 = arith.constant 0 : i32
    %c0_i32_1 = arith.constant 0 : i32
    return %c0_i32, %c0_i32_0 : i32, i32
  }
  func.func @transform_5(%arg0: i32, %arg1: i32) -> (i32, i32) {
    %c0_i32 = arith.constant 0 : i32
    %c0_i32_0 = arith.constant 0 : i32
    %c0_i32_1 = arith.constant 0 : i32
    return %c0_i32, %c0_i32_0 : i32, i32
  }
  func.func @transform_6(%arg0: i32, %arg1: i32) -> (i32, i32, i32) {
    %c0_i32 = arith.constant 0 : i32
    %c0_i32_0 = arith.constant 0 : i32
    return %arg0, %arg1, %c0_i32 : i32, i32, i32
  }
}

module attributes {stable_mosaic.version = 11 : i64} {
  func.func @_dual_conv_bn_relu_kernel(%arg0: i32, %arg1: memref<512x128xbf16, #tpu.memory_space<vmem>>, %arg2: memref<512x24xf32, #tpu.memory_space<vmem>>, %arg3: memref<128x128xbf16, #tpu.memory_space<vmem>>, %arg4: memref<24x128xf32, #tpu.memory_space<vmem>>, %arg5: memref<1x128xf32, #tpu.memory_space<vmem>>, %arg6: memref<1x128xf32, #tpu.memory_space<vmem>>, %arg7: memref<512x128xf32, #tpu.memory_space<vmem>>) attributes {dimension_semantics = [#tpu.dimension_semantics<parallel>], iteration_bounds = array<i64: 1>, scalar_prefetch = 0 : i64, scratch_operands = 0 : i64, tpu.core_type = #tpu.core_type<tc>, window_params = [{transform_indices = @transform_0, window_bounds = array<i64: 512, 128>}, {transform_indices = @transform_1, window_bounds = array<i64: 512, 24>}, {pipeline_mode = #tpu.pipeline_mode<synchronous>, transform_indices = @transform_2, window_bounds = array<i64: 128, 128>}, {pipeline_mode = #tpu.pipeline_mode<synchronous>, transform_indices = @transform_3, window_bounds = array<i64: 24, 128>}, {pipeline_mode = #tpu.pipeline_mode<synchronous>, transform_indices = @transform_4, window_bounds = array<i64: 1, 128>}, {pipeline_mode = #tpu.pipeline_mode<synchronous>, transform_indices = @transform_5, window_bounds = array<i64: 1, 128>}, {transform_indices = @transform_6, window_bounds = array<i64: 512, 128>}]} {
    %c0 = arith.constant 0 : index
    %c0_0 = arith.constant 0 : index
    %0 = vector.load %arg1[%c0, %c0_0] : memref<512x128xbf16, #tpu.memory_space<vmem>>, vector<512x128xbf16>
    %c0_1 = arith.constant 0 : index
    %c0_2 = arith.constant 0 : index
    %1 = vector.load %arg3[%c0_1, %c0_2] : memref<128x128xbf16, #tpu.memory_space<vmem>>, vector<128x128xbf16>
    %cst = arith.constant dense<0.000000e+00> : vector<512x128xf32>
    %2 = tpu.matmul %0, %1, %cst {dimension_numbers = #tpu.dot_dimension_numbers<[1], [0], [0], [1], [0, 0, 1, 1], [], []>} : vector<512x128xbf16>, vector<128x128xbf16>, vector<512x128xf32> -> vector<512x128xf32>
    %c0_3 = arith.constant 0 : index
    %c0_4 = arith.constant 0 : index
    %3 = vector.load %arg2[%c0_3, %c0_4] : memref<512x24xf32, #tpu.memory_space<vmem>>, vector<512x24xf32>
    %c0_5 = arith.constant 0 : index
    %c0_6 = arith.constant 0 : index
    %4 = vector.load %arg4[%c0_5, %c0_6] : memref<24x128xf32, #tpu.memory_space<vmem>>, vector<24x128xf32>
    %cst_7 = arith.constant dense<0.000000e+00> : vector<512x128xf32>
    %5 = tpu.matmul %3, %4, %cst_7 {dimension_numbers = #tpu.dot_dimension_numbers<[1], [0], [0], [1], [0, 0, 1, 1], [], []>} : vector<512x24xf32>, vector<24x128xf32>, vector<512x128xf32> -> vector<512x128xf32>
    %6 = arith.addf %2, %5 : vector<512x128xf32>
    %c0_8 = arith.constant 0 : index
    %c0_9 = arith.constant 0 : index
    %7 = vector.load %arg5[%c0_8, %c0_9] : memref<1x128xf32, #tpu.memory_space<vmem>>, vector<1x128xf32>
    %8 = vector.broadcast %7 : vector<1x128xf32> to vector<512x128xf32>
    %9 = arith.mulf %6, %8 : vector<512x128xf32>
    %c0_10 = arith.constant 0 : index
    %c0_11 = arith.constant 0 : index
    %10 = vector.load %arg6[%c0_10, %c0_11] : memref<1x128xf32, #tpu.memory_space<vmem>>, vector<1x128xf32>
    %11 = vector.broadcast %10 : vector<1x128xf32> to vector<512x128xf32>
    %12 = arith.addf %9, %11 : vector<512x128xf32>
    %cst_12 = arith.constant 0.000000e+00 : f32
    %13 = vector.broadcast %cst_12 : f32 to vector<512x128xf32>
    %14 = arith.maximumf %12, %13 : vector<512x128xf32>
    %c0_13 = arith.constant 0 : index
    %c0_14 = arith.constant 0 : index
    %15 = vector.load %arg7[%c0_13, %c0_14] : memref<512x128xf32, #tpu.memory_space<vmem>>, vector<512x128xf32>
    tpu.vector_store %arg7[%c0_13, %c0_14], %14 {strides = array<i32>} : memref<512x128xf32, #tpu.memory_space<vmem>>, vector<512x128xf32>,
    return
  }
  func.func @transform_0(%arg0: i32) -> (i32, i32) {
    %c0_i32 = arith.constant 0 : i32
    %c0_i32_0 = arith.constant 0 : i32
    return %arg0, %c0_i32 : i32, i32
  }
  func.func @transform_1(%arg0: i32) -> (i32, i32) {
    %c0_i32 = arith.constant 0 : i32
    %c0_i32_0 = arith.constant 0 : i32
    return %arg0, %c0_i32 : i32, i32
  }
  func.func @transform_2(%arg0: i32) -> (i32, i32) {
    %c0_i32 = arith.constant 0 : i32
    %c0_i32_0 = arith.constant 0 : i32
    %c0_i32_1 = arith.constant 0 : i32
    return %c0_i32, %c0_i32_0 : i32, i32
  }
  func.func @transform_3(%arg0: i32) -> (i32, i32) {
    %c0_i32 = arith.constant 0 : i32
    %c0_i32_0 = arith.constant 0 : i32
    %c0_i32_1 = arith.constant 0 : i32
    return %c0_i32, %c0_i32_0 : i32, i32
  }
  func.func @transform_4(%arg0: i32) -> (i32, i32) {
    %c0_i32 = arith.constant 0 : i32
    %c0_i32_0 = arith.constant 0 : i32
    %c0_i32_1 = arith.constant 0 : i32
    return %c0_i32, %c0_i32_0 : i32, i32
  }
  func.func @transform_5(%arg0: i32) -> (i32, i32) {
    %c0_i32 = arith.constant 0 : i32
    %c0_i32_0 = arith.constant 0 : i32
    %c0_i32_1 = arith.constant 0 : i32
    return %c0_i32, %c0_i32_0 : i32, i32
  }
  func.func @transform_6(%arg0: i32) -> (i32, i32) {
    %c0_i32 = arith.constant 0 : i32
    %c0_i32_0 = arith.constant 0 : i32
    return %arg0, %c0_i32 : i32, i32
  }
}

module attributes {stable_mosaic.version = 11 : i64} {
  func.func @_dual_conv_bn_relu_kernel(%arg0: i32, %arg1: memref<512x128xbf16, #tpu.memory_space<vmem>>, %arg2: memref<512x16xf32, #tpu.memory_space<vmem>>, %arg3: memref<128x128xbf16, #tpu.memory_space<vmem>>, %arg4: memref<16x128xf32, #tpu.memory_space<vmem>>, %arg5: memref<1x128xf32, #tpu.memory_space<vmem>>, %arg6: memref<1x128xf32, #tpu.memory_space<vmem>>, %arg7: memref<512x128xf32, #tpu.memory_space<vmem>>) attributes {dimension_semantics = [#tpu.dimension_semantics<parallel>], iteration_bounds = array<i64: 4>, scalar_prefetch = 0 : i64, scratch_operands = 0 : i64, tpu.core_type = #tpu.core_type<tc>, window_params = [{transform_indices = @transform_0, window_bounds = array<i64: 512, 128>}, {transform_indices = @transform_1, window_bounds = array<i64: 512, 16>}, {pipeline_mode = #tpu.pipeline_mode<synchronous>, transform_indices = @transform_2, window_bounds = array<i64: 128, 128>}, {pipeline_mode = #tpu.pipeline_mode<synchronous>, transform_indices = @transform_3, window_bounds = array<i64: 16, 128>}, {pipeline_mode = #tpu.pipeline_mode<synchronous>, transform_indices = @transform_4, window_bounds = array<i64: 1, 128>}, {pipeline_mode = #tpu.pipeline_mode<synchronous>, transform_indices = @transform_5, window_bounds = array<i64: 1, 128>}, {transform_indices = @transform_6, window_bounds = array<i64: 512, 128>}]} {
    %c0 = arith.constant 0 : index
    %c0_0 = arith.constant 0 : index
    %0 = vector.load %arg1[%c0, %c0_0] : memref<512x128xbf16, #tpu.memory_space<vmem>>, vector<512x128xbf16>
    %c0_1 = arith.constant 0 : index
    %c0_2 = arith.constant 0 : index
    %1 = vector.load %arg3[%c0_1, %c0_2] : memref<128x128xbf16, #tpu.memory_space<vmem>>, vector<128x128xbf16>
    %cst = arith.constant dense<0.000000e+00> : vector<512x128xf32>
    %2 = tpu.matmul %0, %1, %cst {dimension_numbers = #tpu.dot_dimension_numbers<[1], [0], [0], [1], [0, 0, 1, 1], [], []>} : vector<512x128xbf16>, vector<128x128xbf16>, vector<512x128xf32> -> vector<512x128xf32>
    %c0_3 = arith.constant 0 : index
    %c0_4 = arith.constant 0 : index
    %3 = vector.load %arg2[%c0_3, %c0_4] : memref<512x16xf32, #tpu.memory_space<vmem>>, vector<512x16xf32>
    %c0_5 = arith.constant 0 : index
    %c0_6 = arith.constant 0 : index
    %4 = vector.load %arg4[%c0_5, %c0_6] : memref<16x128xf32, #tpu.memory_space<vmem>>, vector<16x128xf32>
    %cst_7 = arith.constant dense<0.000000e+00> : vector<512x128xf32>
    %5 = tpu.matmul %3, %4, %cst_7 {dimension_numbers = #tpu.dot_dimension_numbers<[1], [0], [0], [1], [0, 0, 1, 1], [], []>} : vector<512x16xf32>, vector<16x128xf32>, vector<512x128xf32> -> vector<512x128xf32>
    %6 = arith.addf %2, %5 : vector<512x128xf32>
    %c0_8 = arith.constant 0 : index
    %c0_9 = arith.constant 0 : index
    %7 = vector.load %arg5[%c0_8, %c0_9] : memref<1x128xf32, #tpu.memory_space<vmem>>, vector<1x128xf32>
    %8 = vector.broadcast %7 : vector<1x128xf32> to vector<512x128xf32>
    %9 = arith.mulf %6, %8 : vector<512x128xf32>
    %c0_10 = arith.constant 0 : index
    %c0_11 = arith.constant 0 : index
    %10 = vector.load %arg6[%c0_10, %c0_11] : memref<1x128xf32, #tpu.memory_space<vmem>>, vector<1x128xf32>
    %11 = vector.broadcast %10 : vector<1x128xf32> to vector<512x128xf32>
    %12 = arith.addf %9, %11 : vector<512x128xf32>
    %cst_12 = arith.constant 0.000000e+00 : f32
    %13 = vector.broadcast %cst_12 : f32 to vector<512x128xf32>
    %14 = arith.maximumf %12, %13 : vector<512x128xf32>
    %c0_13 = arith.constant 0 : index
    %c0_14 = arith.constant 0 : index
    %15 = vector.load %arg7[%c0_13, %c0_14] : memref<512x128xf32, #tpu.memory_space<vmem>>, vector<512x128xf32>
    tpu.vector_store %arg7[%c0_13, %c0_14], %14 {strides = array<i32>} : memref<512x128xf32, #tpu.memory_space<vmem>>, vector<512x128xf32>,
    return
  }
  func.func @transform_0(%arg0: i32) -> (i32, i32) {
    %c0_i32 = arith.constant 0 : i32
    %c0_i32_0 = arith.constant 0 : i32
    return %arg0, %c0_i32 : i32, i32
  }
  func.func @transform_1(%arg0: i32) -> (i32, i32) {
    %c0_i32 = arith.constant 0 : i32
    %c0_i32_0 = arith.constant 0 : i32
    return %arg0, %c0_i32 : i32, i32
  }
  func.func @transform_2(%arg0: i32) -> (i32, i32) {
    %c0_i32 = arith.constant 0 : i32
    %c0_i32_0 = arith.constant 0 : i32
    %c0_i32_1 = arith.constant 0 : i32
    return %c0_i32, %c0_i32_0 : i32, i32
  }
  func.func @transform_3(%arg0: i32) -> (i32, i32) {
    %c0_i32 = arith.constant 0 : i32
    %c0_i32_0 = arith.constant 0 : i32
    %c0_i32_1 = arith.constant 0 : i32
    return %c0_i32, %c0_i32_0 : i32, i32
  }
  func.func @transform_4(%arg0: i32) -> (i32, i32) {
    %c0_i32 = arith.constant 0 : i32
    %c0_i32_0 = arith.constant 0 : i32
    %c0_i32_1 = arith.constant 0 : i32
    return %c0_i32, %c0_i32_0 : i32, i32
  }
  func.func @transform_5(%arg0: i32) -> (i32, i32) {
    %c0_i32 = arith.constant 0 : i32
    %c0_i32_0 = arith.constant 0 : i32
    %c0_i32_1 = arith.constant 0 : i32
    return %c0_i32, %c0_i32_0 : i32, i32
  }
  func.func @transform_6(%arg0: i32) -> (i32, i32) {
    %c0_i32 = arith.constant 0 : i32
    %c0_i32_0 = arith.constant 0 : i32
    return %arg0, %c0_i32 : i32, i32
  }
}

</mosaic_0001>

<llo_original>
// kernel: _lraspp_forward.3
$region0: #{_lraspp_forward.3}
  #allocation0 [shape = 'u32[]', space=smem, size = 0x4, offset = 0x4, fixed_abs, tag = 'smem constant byte address 0x4 - core index']
  #allocation1 [shape = 'u32[72,128]{1,0:T(1,128)}', space=vmem, size = 0x9000, scoped, tag = 'internal scratch']
  %s0 = inlined_call_operand.vmem [shape: bf16[2,2560,960], index: 0, kind: input, shape index: {}]
  %s1 = inlined_call_operand.vmem [shape: bf16[960,128], index: 1, kind: input, shape index: {}]
  %s2 = inlined_call_operand.vmem [shape: f32[2,1,128], index: 2, kind: input, shape index: {}]
  %s3 = inlined_call_operand.vmem [shape: f32[2,1,128], index: 3, kind: input, shape index: {}]
  %s4 = inlined_call_operand.vmem [shape: bf16[128,128], index: 4, kind: input, shape index: {}]
  %s5 = inlined_call_operand.vmem [shape: f32[1,128], index: 5, kind: input, shape index: {}]
  %s6 = inlined_call_operand.vmem [shape: f32[2,2560,128], index: 6, kind: output, shape index: {}]
  %s7 = sld [smem:[#allocation0]]
  $region57: #{_lraspp_forward.3} parent=0
    _
  %s9 = ssub.s32 1, %s7
  %s10 = scalar_select 0, %s9, %s7
  loop: start=0, step=1, limit=12
  $region2: #{_lraspp_forward.3} parent=0 // loop_pre_header
    _
  $region3: #{_lraspp_forward.3} parent=0 // loop_header
    %s12 = sphi 0, %s16
    %p13 = scmp.ge.s32.totalorder %s12, 12
    %s19 = sphi 0, %s31
    %s20 = sphi 0, %s27
    %s21 = sphi 0, %s19
    %s22 = sphi 0, %s20
    %s23 = sphi 0, %s21
    %s24 = sphi 0, %s22
    %s36 = sphi 0, %s38
    %s39 = sphi 0, %s36
    %s40 = sphi 0, %s39
    %s56 = sphi 0, %s40
    %s60 = sphi 0, %s60
    %s62 = sphi 0, %s60
    %s63 = sphi 0, %s62
    %s77 = sphi 0, %s63
    %s83 = sphi 0, %s85
    %s86 = sphi 0, %s83
    %s87 = sphi 0, %s86
    %s103 = sphi 0, %s87
    %s109 = sphi 0, %s111
    %s112 = sphi 0, %s109
    %s113 = sphi 0, %s112
    %s129 = sphi 0, %s113
    %s133 = sphi 0, %s133
    %s135 = sphi 0, %s133
    %s136 = sphi 0, %s135
    %s150 = sphi 0, %s136
    %s154 = sphi 0, %s154
    %s156 = sphi 0, %s154
    %s157 = sphi 0, %s156
    %s171 = sphi 0, %s157
    %s179 = sphi 0, %s181
    %s182 = sphi 0, %s179
    %s183 = sphi 0, %s182
    %s199 = sphi 0, %s183
  $region4: #{_lraspp_forward.3} parent=0 // loop_header_branch
    %15 = sbr.rel (%p13) target = $region8
  $region5: #{_lraspp_forward.3} parent=0 // loop_body
    %s17 = ssub.s32 %s12, 1
    %s18 = ssub.s32 %s12, 2
    %s25 = sadd.s32 1, %s20
    %p26 = scmp.ge.s32.totalorder %s25, 5
    %s27 = scalar_select %p26, 0, %s25
    %s28 = sadd.s32 1, %s19
    %s29 = scalar_select %p26, %s28, %s19
    %p30 = scmp.ge.s32.totalorder %s29, 2
    %s31 = scalar_select %p30, 0, %s29
    %s32 = ssub.s32 %s19, %s31
    %s33 = ssub.s32 %s20, %s27
    %s34 = sor.u32 %s32, %s33
    %p35 = scmp.eq.s32.totalorder %s34, 0
    %s37 = sadd.s32 %s36, 1
    %s38 = scalar_select %p35, %s36, %s37
    %p41 = pneg %p35
    %p42 = scmp.eq.s32.totalorder %s12, 9
    %p43 = por %p41, %p42
    %p44 = scmp.ne.s32.totalorder %s36, %s39
    %p45 = scmp.eq.s32.totalorder %s12, 0
    %p46 = por %p44, %p45
    %p47 = scmp.ne.s32.totalorder %s36, %s39
    %p48 = scmp.eq.s32.totalorder %s17, 9
    %p49 = por %p47, %p48
    %p50 = scmp.ne.s32.totalorder %s39, %s40
    %p51 = scmp.eq.s32.totalorder %s17, 0
    %p52 = por %p50, %p51
    %p53 = scmp.ne.s32.totalorder %s39, %s40
    %p54 = scmp.eq.s32.totalorder %s18, 9
    %p55 = por %p53, %p54
    %p57 = scmp.ne.s32.totalorder %s40, %s56
    %p58 = scmp.eq.s32.totalorder %s18, 0
    %p59 = por %p57, %p58
    %s61 = sadd.s32 %s60, 1
    %p64 = scmp.eq.s32.totalorder %s12, 9
    %p65 = scmp.ne.s32.totalorder %s60, %s62
    %p66 = scmp.eq.s32.totalorder %s12, 0
    %p67 = por %p65, %p66
    %p68 = scmp.ne.s32.totalorder %s60, %s62
    %p69 = scmp.eq.s32.totalorder %s17, 9
    %p70 = por %p68, %p69
    %p71 = scmp.ne.s32.totalorder %s62, %s63
    %p72 = scmp.eq.s32.totalorder %s17, 0
    %p73 = por %p71, %p72
    %p74 = scmp.ne.s32.totalorder %s62, %s63
    %p75 = scmp.eq.s32.totalorder %s18, 9
    %p76 = por %p74, %p75
    %p78 = scmp.ne.s32.totalorder %s63, %s77
    %p79 = scmp.eq.s32.totalorder %s18, 0
    %p80 = por %p78, %p79
    %s81 = ssub.s32 %s19, %s31
    %p82 = scmp.eq.s32.totalorder %s81, 0
    %s84 = sadd.s32 %s83, 1
    %s85 = scalar_select %p82, %s83, %s84
    %p88 = pneg %p82
    %p89 = scmp.eq.s32.totalorder %s12, 9
    %p90 = por %p88, %p89
    %p91 = scmp.ne.s32.totalorder %s83, %s86
    %p92 = scmp.eq.s32.totalorder %s12, 0
    %p93 = por %p91, %p92
    %p94 = scmp.ne.s32.totalorder %s83, %s86
    %p95 = scmp.eq.s32.totalorder %s17, 9
    %p96 = por %p94, %p95
    %p97 = scmp.ne.s32.totalorder %s86, %s87
    %p98 = scmp.eq.s32.totalorder %s17, 0
    %p99 = por %p97, %p98
    %p100 = scmp.ne.s32.totalorder %s86, %s87
    %p101 = scmp.eq.s32.totalorder %s18, 9
    %p102 = por %p100, %p101
    %p104 = scmp.ne.s32.totalorder %s87, %s103
    %p105 = scmp.eq.s32.totalorder %s18, 0
    %p106 = por %p104, %p105
    %s107 = ssub.s32 %s19, %s31
    %p108 = scmp.eq.s32.totalorder %s107, 0
    %s110 = sadd.s32 %s109, 1
    %s111 = scalar_select %p108, %s109, %s110
    %p114 = pneg %p108
    %p115 = scmp.eq.s32.totalorder %s12, 9
    %p116 = por %p114, %p115
    %p117 = scmp.ne.s32.totalorder %s109, %s112
    %p118 = scmp.eq.s32.totalorder %s12, 0
    %p119 = por %p117, %p118
    %p120 = scmp.ne.s32.totalorder %s109, %s112
    %p121 = scmp.eq.s32.totalorder %s17, 9
    %p122 = por %p120, %p121
    %p123 = scmp.ne.s32.totalorder %s112, %s113
    %p124 = scmp.eq.s32.totalorder %s17, 0
    %p125 = por %p123, %p124
    %p126 = scmp.ne.s32.totalorder %s112, %s113
    %p127 = scmp.eq.s32.totalorder %s18, 9
    %p128 = por %p126, %p127
    %p130 = scmp.ne.s32.totalorder %s113, %s129
    %p131 = scmp.eq.s32.totalorder %s18, 0
    %p132 = por %p130, %p131
    %s134 = sadd.s32 %s133, 1
    %p137 = scmp.eq.s32.totalorder %s12, 9
    %p138 = scmp.ne.s32.totalorder %s133, %s135
    %p139 = scmp.eq.s32.totalorder %s12, 0
    %p140 = por %p138, %p139
    %p141 = scmp.ne.s32.totalorder %s133, %s135
    %p142 = scmp.eq.s32.totalorder %s17, 9
    %p143 = por %p141, %p142
    %p144 = scmp.ne.s32.totalorder %s135, %s136
    %p145 = scmp.eq.s32.totalorder %s17, 0
    %p146 = por %p144, %p145
    %p147 = scmp.ne.s32.totalorder %s135, %s136
    %p148 = scmp.eq.s32.totalorder %s18, 9
    %p149 = por %p147, %p148
    %p151 = scmp.ne.s32.totalorder %s136, %s150
    %p152 = scmp.eq.s32.totalorder %s18, 0
    %p153 = por %p151, %p152
    %s155 = sadd.s32 %s154, 1
    %p158 = scmp.eq.s32.totalorder %s12, 9
    %p159 = scmp.ne.s32.totalorder %s154, %s156
    %p160 = scmp.eq.s32.totalorder %s12, 0
    %p161 = por %p159, %p160
    %p162 = scmp.ne.s32.totalorder %s154, %s156
    %p163 = scmp.eq.s32.totalorder %s17, 9
    %p164 = por %p162, %p163
    %p165 = scmp.ne.s32.totalorder %s156, %s157
    %p166 = scmp.eq.s32.totalorder %s17, 0
    %p167 = por %p165, %p166
    %p168 = scmp.ne.s32.totalorder %s156, %s157
    %p169 = scmp.eq.s32.totalorder %s18, 9
    %p170 = por %p168, %p169
    %p172 = scmp.ne.s32.totalorder %s157, %s171
    %p173 = scmp.eq.s32.totalorder %s18, 0
    %p174 = por %p172, %p173
    %s175 = ssub.s32 %s19, %s31
    %s176 = ssub.s32 %s20, %s27
    %s177 = sor.u32 %s175, %s176
    %p178 = scmp.eq.s32.totalorder %s177, 0
    %s180 = sadd.s32 %s179, 1
    %s181 = scalar_select %p178, %s179, %s180
    %p184 = pneg %p178
    %p185 = scmp.eq.s32.totalorder %s12, 9
    %p186 = por %p184, %p185
    %p187 = scmp.ne.s32.totalorder %s179, %s182
    %p188 = scmp.eq.s32.totalorder %s12, 0
    %p189 = por %p187, %p188
    %p190 = scmp.ne.s32.totalorder %s179, %s182
    %p191 = scmp.eq.s32.totalorder %s17, 9
    %p192 = por %p190, %p191
    %p193 = scmp.ne.s32.totalorder %s182, %s183
    %p194 = scmp.eq.s32.totalorder %s17, 0
    %p195 = por %p193, %p194
    %p196 = scmp.ne.s32.totalorder %s182, %s183
    %p197 = scmp.eq.s32.totalorder %s18, 9
    %p198 = por %p196, %p197
    %p200 = scmp.ne.s32.totalorder %s183, %s199
    %p201 = scmp.eq.s32.totalorder %s18, 0
    %p202 = por %p200, %p201
    %p203 = scmp.le.s32.totalorder 1, %s12
    %p204 = scmp.lt.s32.totalorder %s12, 11
    %p205 = pnand %p203, %p204
    %p206 = pneg %p205
    // Predicated region
    $region9: #{_lraspp_forward.3} parent=5 // pred_check
      _
    $region10: #{_lraspp_forward.3} parent=5 // pred_check_branch
      %208 = sbr.rel (%p205) target = $region12
    $region11: #{_lraspp_forward.3} parent=5 // pred_region
      %s209 = ssub.s32 %s12, 1
      // Predicated region
      $region13: #{_lraspp_forward.3} parent=11 // pred_check
        %p210 = pneg %p73
      $region14: #{_lraspp_forward.3} parent=11 // pred_check_branch
        %212 = sbr.rel (%p210) target = $region16
      $region15: #{_lraspp_forward.3} parent=11 // pred_region
        _
      $region16: #{_lraspp_forward.3} parent=11 // pred_fallthru
        _
      // Predicated region
      $region17: #{_lraspp_forward.3} parent=11 // pred_check
        %p213 = pneg %p146
      $region18: #{_lraspp_forward.3} parent=11 // pred_check_branch
        %215 = sbr.rel (%p213) target = $region20
      $region19: #{_lraspp_forward.3} parent=11 // pred_region
        _
      $region20: #{_lraspp_forward.3} parent=11 // pred_fallthru
        _
      // Predicated region
      $region21: #{_lraspp_forward.3} parent=11 // pred_check
        %p216 = pneg %p167
      $region22: #{_lraspp_forward.3} parent=11 // pred_check_branch
        %218 = sbr.rel (%p216) target = $region24
      $region23: #{_lraspp_forward.3} parent=11 // pred_region
        _
      $region24: #{_lraspp_forward.3} parent=11 // pred_fallthru
        _
    $region12: #{_lraspp_forward.3} parent=5 // pred_fallthru
      _
    %p219 = scmp.lt.s32.totalorder %s12, 10
    // Predicated region
    $region25: #{_lraspp_forward.3} parent=5 // pred_check
      %p220 = pneg %p219
    $region26: #{_lraspp_forward.3} parent=5 // pred_check_branch
      %222 = sbr.rel (%p220) target = $region28
    $region27: #{_lraspp_forward.3} parent=5 // pred_region
      // Predicated region
      $region29: #{_lraspp_forward.3} parent=27 // pred_check
        %p223 = pneg %p46
      $region30: #{_lraspp_forward.3} parent=27 // pred_check_branch
        %225 = sbr.rel (%p223) target = $region32
      $region31: #{_lraspp_forward.3} parent=27 // pred_region
        %s226 = smul.u32 64, %s20
        %p227 = scmp.lt.s32.totalorder %s19, 1
        %s228 = scalar_select %p227, %s19, 1
        %p229 = scmp.lt.s32.totalorder %s226, 319
        %s230 = scalar_select %p229, %s226, 319
        %s231 = smul.addr %s230, 8
        %s232 = smul.addr %s228, 2560
        %s233 = sadd.s32 %s231, %s232
        %s234 = smul.addr %s233, 4
        %s235 = scalar_lea.vmem %s0, %s234
        %s236 = smul.u32 64, %s20
      $region32: #{_lraspp_forward.3} parent=27 // pred_fallthru
        _
      // Predicated region
      $region33: #{_lraspp_forward.3} parent=27 // pred_check
        %p237 = pneg %p93
      $region34: #{_lraspp_forward.3} parent=27 // pred_check_branch
        %239 = sbr.rel (%p237) target = $region36
      $region35: #{_lraspp_forward.3} parent=27 // pred_region
        %p240 = scmp.lt.s32.totalorder %s19, 1
        %s241 = scalar_select %p240, %s19, 1
        %s242 = scalar_lea.vmem %s2, %s241
      $region36: #{_lraspp_forward.3} parent=27 // pred_fallthru
        _
      // Predicated region
      $region37: #{_lraspp_forward.3} parent=27 // pred_check
        %p243 = pneg %p119
      $region38: #{_lraspp_forward.3} parent=27 // pred_check_branch
        %245 = sbr.rel (%p243) target = $region40
      $region39: #{_lraspp_forward.3} parent=27 // pred_region
        %p246 = scmp.lt.s32.totalorder %s19, 1
        %s247 = scalar_select %p246, %s19, 1
        %s248 = scalar_lea.vmem %s3, %s247
      $region40: #{_lraspp_forward.3} parent=27 // pred_fallthru
        _
    $region28: #{_lraspp_forward.3} parent=5 // pred_fallthru
      _
    %p249 = scmp.le.s32.totalorder 1, %s12
    %p250 = scmp.lt.s32.totalorder %s12, 11
    %p251 = pnand %p249, %p250
    %p252 = pneg %p251
    // Predicated region
    $region41: #{_lraspp_forward.3} parent=5 // pred_check
      _
    $region42: #{_lraspp_forward.3} parent=5 // pred_check_branch
      %254 = sbr.rel (%p251) target = $region44
    $region43: #{_lraspp_forward.3} parent=5 // pred_region
      %s255 = ssub.s32 %s12, 1
      %s256 = smul.u32 64, %s22
      %p257 = scmp.lt.s32.totalorder %s21, 1
      %s258 = scalar_select %p257, %s21, 1
      %p259 = scmp.lt.s32.totalorder %s256, 319
      %s260 = scalar_select %p259, %s256, 319
      %s261 = smul.addr %s260, 8
      %s262 = smul.addr %s258, 2560
      %s263 = sadd.s32 %s261, %s262
      %s264 = smul.addr %s263, 4
      %s265 = scalar_lea.vmem %s0, %s264
      %p266 = pneg %p52
      %p267 = pneg %p49
      %p268 = pneg %p73
      %p269 = pneg %p70
      %p270 = scmp.lt.s32.totalorder %s21, 1
      %s271 = scalar_select %p270, %s21, 1
      %s272 = scalar_lea.vmem %s2, %s271
      %p273 = pneg %p99
      %p274 = pneg %p96
      %p275 = scmp.lt.s32.totalorder %s21, 1
      %s276 = scalar_select %p275, %s21, 1
      %s277 = scalar_lea.vmem %s3, %s276
      %p278 = pneg %p125
      %p279 = pneg %p122
      %p280 = pneg %p146
      %p281 = pneg %p143
      %p282 = pneg %p167
      %p283 = pneg %p164
      %p284 = pneg %p195
      %p285 = pneg %p192
      %s286 = smul.u32 64, %s22
      %p287 = scmp.lt.s32.totalorder %s21, 1
      %s288 = scalar_select %p287, %s21, 1
      %p289 = scmp.lt.s32.totalorder %s286, 319
      %s290 = scalar_select %p289, %s286, 319
      %s291 = smul.addr %s288, 320
      %s292 = sadd.s32 %s290, %s291
      %s293 = smul.addr %s292, 8
      %s294 = scalar_lea.vmem %s6, %s293
      %s295 = smul.u32 64, %s22
      %p296 = scmp.lt.s32.totalorder %s21, 1
      %s297 = scalar_select %p296, %s21, 1
      %p298 = scmp.lt.s32.totalorder %s295, 319
      %s299 = scalar_select %p298, %s295, 319
      %s300 = smul.addr %s299, 8
      %s301 = smul.addr %s297, 2560
      %s302 = sadd.s32 %s300, %s301
      %s303 = smul.addr %s302, 4
      %s304 = scalar_lea.vmem %s0, %s303
      %s305 = smul.u32 64, %s22
      %p306 = scmp.lt.s32.totalorder %s21, 1
      %s307 = scalar_select %p306, %s21, 1
      %s308 = scalar_lea.vmem %s2, %s307
      %p309 = scmp.lt.s32.totalorder %s21, 1
      %s310 = scalar_select %p309, %s21, 1
      %s311 = scalar_lea.vmem %s3, %s310
      %s312 = smul.u32 64, %s22
      %p313 = scmp.lt.s32.totalorder %s21, 1
      %s314 = scalar_select %p313, %s21, 1
      %p315 = scmp.lt.s32.totalorder %s312, 319
      %s316 = scalar_select %p315, %s312, 319
      %s317 = smul.addr %s314, 320
      %s318 = sadd.s32 %s316, %s317
      %s319 = smul.addr %s318, 8
      %s320 = scalar_lea.vmem %s6, %s319
      %s321 = smul.u32 64, %s22
      %v323 = vld [vmem:[%s304] sm:$0xff]
      %v324 = vld [vmem:[%s304 + $0x8] sm:$0xff]
      %v325 = vld [vmem:[%s304 + $0x10] sm:$0xff]
      %v326 = vld [vmem:[%s304 + $0x18] sm:$0xff]
      %v327 = vld [vmem:[%s304 + $0x20] sm:$0xff]
      %v328 = vld [vmem:[%s304 + $0x28] sm:$0xff]
      %v329 = vld [vmem:[%s304 + $0x30] sm:$0xff]
      %v330 = vld [vmem:[%s304 + $0x38] sm:$0xff]
      %v331 = vld [vmem:[%s304 + $0x40] sm:$0xff]
      %v332 = vld [vmem:[%s304 + $0x48] sm:$0xff]
      %v333 = vld [vmem:[%s304 + $0x50] sm:$0xff]
      %v334 = vld [vmem:[%s304 + $0x58] sm:$0xff]
      %v335 = vld [vmem:[%s304 + $0x60] sm:$0xff]
      %v336 = vld [vmem:[%s304 + $0x68] sm:$0xff]
      %v337 = vld [vmem:[%s304 + $0x70] sm:$0xff]
      %v338 = vld [vmem:[%s304 + $0x78] sm:$0xff]
      %v339 = vld [vmem:[%s304 + $0x80] sm:$0xff]
      %v340 = vld [vmem:[%s304 + $0x88] sm:$0xff]
      %v341 = vld [vmem:[%s304 + $0x90] sm:$0xff]
      %v342 = vld [vmem:[%s304 + $0x98] sm:$0xff]
      %v343 = vld [vmem:[%s304 + $0xa0] sm:$0xff]
      %v344 = vld [vmem:[%s304 + $0xa8] sm:$0xff]
      %v345 = vld [vmem:[%s304 + $0xb0] sm:$0xff]
      %v346 = vld [vmem:[%s304 + $0xb8] sm:$0xff]
      %v347 = vld [vmem:[%s304 + $0xc0] sm:$0xff]
      %v348 = vld [vmem:[%s304 + $0xc8] sm:$0xff]
      %v349 = vld [vmem:[%s304 + $0xd0] sm:$0xff]
      %v350 = vld [vmem:[%s304 + $0xd8] sm:$0xff]
      %v351 = vld [vmem:[%s304 + $0xe0] sm:$0xff]
      %v352 = vld [vmem:[%s304 + $0xe8] sm:$0xff]
      %v353 = vld [vmem:[%s304 + $0xf0] sm:$0xff]
      %v354 = vld [vmem:[%s304 + $0xf8] sm:$0xff]
      %v355 = vld [vmem:[%s304 + $0x100] sm:$0xff]
      %v356 = vld [vmem:[%s304 + $0x108] sm:$0xff]
      %v357 = vld [vmem:[%s304 + $0x110] sm:$0xff]
      %v358 = vld [vmem:[%s304 + $0x118] sm:$0xff]
      %v359 = vld [vmem:[%s304 + $0x120] sm:$0xff]
      %v360 = vld [vmem:[%s304 + $0x128] sm:$0xff]
      %v361 = vld [vmem:[%s304 + $0x130] sm:$0xff]
      %v362 = vld [vmem:[%s304 + $0x138] sm:$0xff]
      %v363 = vld [vmem:[%s304 + $0x140] sm:$0xff]
      %v364 = vld [vmem:[%s304 + $0x148] sm:$0xff]
      %v365 = vld [vmem:[%s304 + $0x150] sm:$0xff]
      %v366 = vld [vmem:[%s304 + $0x158] sm:$0xff]
      %v367 = vld [vmem:[%s304 + $0x160] sm:$0xff]
      %v368 = vld [vmem:[%s304 + $0x168] sm:$0xff]
      %v369 = vld [vmem:[%s304 + $0x170] sm:$0xff]
      %v370 = vld [vmem:[%s304 + $0x178] sm:$0xff]
      %v371 = vld [vmem:[%s304 + $0x180] sm:$0xff]
      %v372 = vld [vmem:[%s304 + $0x188] sm:$0xff]
      %v373 = vld [vmem:[%s304 + $0x190] sm:$0xff]
      %v374 = vld [vmem:[%s304 + $0x198] sm:$0xff]
      %v375 = vld [vmem:[%s304 + $0x1a0] sm:$0xff]
      %v376 = vld [vmem:[%s304 + $0x1a8] sm:$0xff]
      %v377 = vld [vmem:[%s304 + $0x1b0] sm:$0xff]
      %v378 = vld [vmem:[%s304 + $0x1b8] sm:$0xff]
      %v379 = vld [vmem:[%s304 + $0x1c0] sm:$0xff]
      %v380 = vld [vmem:[%s304 + $0x1c8] sm:$0xff]
      %v381 = vld [vmem:[%s304 + $0x1d0] sm:$0xff]
      %v382 = vld [vmem:[%s304 + $0x1d8] sm:$0xff]
      %v383 = vld [vmem:[%s304 + $0x1e0] sm:$0xff]
      %v384 = vld [vmem:[%s304 + $0x1e8] sm:$0xff]
      %v385 = vld [vmem:[%s304 + $0x1f0] sm:$0xff]
      %v386 = vld [vmem:[%s304 + $0x1f8] sm:$0xff]
      %v387 = vld [vmem:[%s304 + $0x200] sm:$0xff]
      %v388 = vld [vmem:[%s304 + $0x208] sm:$0xff]
      %v389 = vld [vmem:[%s304 + $0x210] sm:$0xff]
      %v390 = vld [vmem:[%s304 + $0x218] sm:$0xff]
      %v391 = vld [vmem:[%s304 + $0x220] sm:$0xff]
      %v392 = vld [vmem:[%s304 + $0x228] sm:$0xff]
      %v393 = vld [vmem:[%s304 + $0x230] sm:$0xff]
      %v394 = vld [vmem:[%s304 + $0x238] sm:$0xff]
      %v395 = vld [vmem:[%s304 + $0x240] sm:$0xff]
      %v396 = vld [vmem:[%s304 + $0x248] sm:$0xff]
      %v397 = vld [vmem:[%s304 + $0x250] sm:$0xff]
      %v398 = vld [vmem:[%s304 + $0x258] sm:$0xff]
      %v399 = vld [vmem:[%s304 + $0x260] sm:$0xff]
      %v400 = vld [vmem:[%s304 + $0x268] sm:$0xff]
      %v401 = vld [vmem:[%s304 + $0x270] sm:$0xff]
      %v402 = vld [vmem:[%s304 + $0x278] sm:$0xff]
      %v403 = vld [vmem:[%s304 + $0x280] sm:$0xff]
      %v404 = vld [vmem:[%s304 + $0x288] sm:$0xff]
      %v405 = vld [vmem:[%s304 + $0x290] sm:$0xff]
      %v406 = vld [vmem:[%s304 + $0x298] sm:$0xff]
      %v407 = vld [vmem:[%s304 + $0x2a0] sm:$0xff]
      %v408 = vld [vmem:[%s304 + $0x2a8] sm:$0xff]
      %v409 = vld [vmem:[%s304 + $0x2b0] sm:$0xff]
      %v410 = vld [vmem:[%s304 + $0x2b8] sm:$0xff]
      %v411 = vld [vmem:[%s304 + $0x2c0] sm:$0xff]
      %v412 = vld [vmem:[%s304 + $0x2c8] sm:$0xff]
      %v413 = vld [vmem:[%s304 + $0x2d0] sm:$0xff]
      %v414 = vld [vmem:[%s304 + $0x2d8] sm:$0xff]
      %v415 = vld [vmem:[%s304 + $0x2e0] sm:$0xff]
      %v416 = vld [vmem:[%s304 + $0x2e8] sm:$0xff]
      %v417 = vld [vmem:[%s304 + $0x2f0] sm:$0xff]
      %v418 = vld [vmem:[%s304 + $0x2f8] sm:$0xff]
      %v419 = vld [vmem:[%s304 + $0x300] sm:$0xff]
      %v420 = vld [vmem:[%s304 + $0x308] sm:$0xff]
      %v421 = vld [vmem:[%s304 + $0x310] sm:$0xff]
      %v422 = vld [vmem:[%s304 + $0x318] sm:$0xff]
      %v423 = vld [vmem:[%s304 + $0x320] sm:$0xff]
      %v424 = vld [vmem:[%s304 + $0x328] sm:$0xff]
      %v425 = vld [vmem:[%s304 + $0x330] sm:$0xff]
      %v426 = vld [vmem:[%s304 + $0x338] sm:$0xff]
      %v427 = vld [vmem:[%s304 + $0x340] sm:$0xff]
      %v428 = vld [vmem:[%s304 + $0x348] sm:$0xff]
      %v429 = vld [vmem:[%s304 + $0x350] sm:$0xff]
      %v430 = vld [vmem:[%s304 + $0x358] sm:$0xff]
      %v431 = vld [vmem:[%s304 + $0x360] sm:$0xff]
      %v432 = vld [vmem:[%s304 + $0x368] sm:$0xff]
      %v433 = vld [vmem:[%s304 + $0x370] sm:$0xff]
      %v434 = vld [vmem:[%s304 + $0x378] sm:$0xff]
      %v435 = vld [vmem:[%s304 + $0x380] sm:$0xff]
      %v436 = vld [vmem:[%s304 + $0x388] sm:$0xff]
      %v437 = vld [vmem:[%s304 + $0x390] sm:$0xff]
      %v438 = vld [vmem:[%s304 + $0x398] sm:$0xff]
      %v439 = vld [vmem:[%s304 + $0x3a0] sm:$0xff]
      %v440 = vld [vmem:[%s304 + $0x3a8] sm:$0xff]
      %v441 = vld [vmem:[%s304 + $0x3b0] sm:$0xff]
      %v442 = vld [vmem:[%s304 + $0x3b8] sm:$0xff]
      %v443 = vld [vmem:[%s304 + $0x3c0] sm:$0xff]
      %v444 = vld [vmem:[%s304 + $0x3c8] sm:$0xff]
      %v445 = vld [vmem:[%s304 + $0x3d0] sm:$0xff]
      %v446 = vld [vmem:[%s304 + $0x3d8] sm:$0xff]
      %v447 = vld [vmem:[%s304 + $0x3e0] sm:$0xff]
      %v448 = vld [vmem:[%s304 + $0x3e8] sm:$0xff]
      %v449 = vld [vmem:[%s304 + $0x3f0] sm:$0xff]
      %v450 = vld [vmem:[%s304 + $0x3f8] sm:$0xff]
      %v451 = vld [vmem:[%s304 + $0x400] sm:$0xff]
      %v452 = vld [vmem:[%s304 + $0x408] sm:$0xff]
      %v453 = vld [vmem:[%s304 + $0x410] sm:$0xff]
      %v454 = vld [vmem:[%s304 + $0x418] sm:$0xff]
      %v455 = vld [vmem:[%s304 + $0x420] sm:$0xff]
      %v456 = vld [vmem:[%s304 + $0x428] sm:$0xff]
      %v457 = vld [vmem:[%s304 + $0x430] sm:$0xff]
      %v458 = vld [vmem:[%s304 + $0x438] sm:$0xff]
      %v459 = vld [vmem:[%s304 + $0x440] sm:$0xff]
      %v460 = vld [vmem:[%s304 + $0x448] sm:$0xff]
      %v461 = vld [vmem:[%s304 + $0x450] sm:$0xff]
      %v462 = vld [vmem:[%s304 + $0x458] sm:$0xff]
      %v463 = vld [vmem:[%s304 + $0x460] sm:$0xff]
      %v464 = vld [vmem:[%s304 + $0x468] sm:$0xff]
      %v465 = vld [vmem:[%s304 + $0x470] sm:$0xff]
      %v466 = vld [vmem:[%s304 + $0x478] sm:$0xff]
      %v467 = vld [vmem:[%s304 + $0x480] sm:$0xff]
      %v468 = vld [vmem:[%s304 + $0x488] sm:$0xff]
      %v469 = vld [vmem:[%s304 + $0x490] sm:$0xff]
      %v470 = vld [vmem:[%s304 + $0x498] sm:$0xff]
      %v471 = vld [vmem:[%s304 + $0x4a0] sm:$0xff]
      %v472 = vld [vmem:[%s304 + $0x4a8] sm:$0xff]
      %v473 = vld [vmem:[%s304 + $0x4b0] sm:$0xff]
      %v474 = vld [vmem:[%s304 + $0x4b8] sm:$0xff]
      %v475 = vld [vmem:[%s304 + $0x4c0] sm:$0xff]
      %v476 = vld [vmem:[%s304 + $0x4c8] sm:$0xff]
      %v477 = vld [vmem:[%s304 + $0x4d0] sm:$0xff]
      %v478 = vld [vmem:[%s304 + $0x4d8] sm:$0xff]
      %v479 = vld [vmem:[%s304 + $0x4e0] sm:$0xff]
      %v480 = vld [vmem:[%s304 + $0x4e8] sm:$0xff]
      %v481 = vld [vmem:[%s304 + $0x4f0] sm:$0xff]
      %v482 = vld [vmem:[%s304 + $0x4f8] sm:$0xff]
      %v483 = vld [vmem:[%s304 + $0x500] sm:$0xff]
      %v484 = vld [vmem:[%s304 + $0x508] sm:$0xff]
      %v485 = vld [vmem:[%s304 + $0x510] sm:$0xff]
      %v486 = vld [vmem:[%s304 + $0x518] sm:$0xff]
      %v487 = vld [vmem:[%s304 + $0x520] sm:$0xff]
      %v488 = vld [vmem:[%s304 + $0x528] sm:$0xff]
      %v489 = vld [vmem:[%s304 + $0x530] sm:$0xff]
      %v490 = vld [vmem:[%s304 + $0x538] sm:$0xff]
      %v491 = vld [vmem:[%s304 + $0x540] sm:$0xff]
      %v492 = vld [vmem:[%s304 + $0x548] sm:$0xff]
      %v493 = vld [vmem:[%s304 + $0x550] sm:$0xff]
      %v494 = vld [vmem:[%s304 + $0x558] sm:$0xff]
      %v495 = vld [vmem:[%s304 + $0x560] sm:$0xff]
      %v496 = vld [vmem:[%s304 + $0x568] sm:$0xff]
      %v497 = vld [vmem:[%s304 + $0x570] sm:$0xff]
      %v498 = vld [vmem:[%s304 + $0x578] sm:$0xff]
      %v499 = vld [vmem:[%s304 + $0x580] sm:$0xff]
      %v500 = vld [vmem:[%s304 + $0x588] sm:$0xff]
      %v501 = vld [vmem:[%s304 + $0x590] sm:$0xff]
      %v502 = vld [vmem:[%s304 + $0x598] sm:$0xff]
      %v503 = vld [vmem:[%s304 + $0x5a0] sm:$0xff]
      %v504 = vld [vmem:[%s304 + $0x5a8] sm:$0xff]
      %v505 = vld [vmem:[%s304 + $0x5b0] sm:$0xff]
      %v506 = vld [vmem:[%s304 + $0x5b8] sm:$0xff]
      %v507 = vld [vmem:[%s304 + $0x5c0] sm:$0xff]
      %v508 = vld [vmem:[%s304 + $0x5c8] sm:$0xff]
      %v509 = vld [vmem:[%s304 + $0x5d0] sm:$0xff]
      %v510 = vld [vmem:[%s304 + $0x5d8] sm:$0xff]
      %v511 = vld [vmem:[%s304 + $0x5e0] sm:$0xff]
      %v512 = vld [vmem:[%s304 + $0x5e8] sm:$0xff]
      %v513 = vld [vmem:[%s304 + $0x5f0] sm:$0xff]
      %v514 = vld [vmem:[%s304 + $0x5f8] sm:$0xff]
      %v515 = vld [vmem:[%s304 + $0x600] sm:$0xff]
      %v516 = vld [vmem:[%s304 + $0x608] sm:$0xff]
      %v517 = vld [vmem:[%s304 + $0x610] sm:$0xff]
      %v518 = vld [vmem:[%s304 + $0x618] sm:$0xff]
      %v519 = vld [vmem:[%s304 + $0x620] sm:$0xff]
      %v520 = vld [vmem:[%s304 + $0x628] sm:$0xff]
      %v521 = vld [vmem:[%s304 + $0x630] sm:$0xff]
      %v522 = vld [vmem:[%s304 + $0x638] sm:$0xff]
      %v523 = vld [vmem:[%s304 + $0x640] sm:$0xff]
      %v524 = vld [vmem:[%s304 + $0x648] sm:$0xff]
      %v525 = vld [vmem:[%s304 + $0x650] sm:$0xff]
      %v526 = vld [vmem:[%s304 + $0x658] sm:$0xff]
      %v527 = vld [vmem:[%s304 + $0x660] sm:$0xff]
      %v528 = vld [vmem:[%s304 + $0x668] sm:$0xff]
      %v529 = vld [vmem:[%s304 + $0x670] sm:$0xff]
      %v530 = vld [vmem:[%s304 + $0x678] sm:$0xff]
      %v531 = vld [vmem:[%s304 + $0x680] sm:$0xff]
      %v532 = vld [vmem:[%s304 + $0x688] sm:$0xff]
      %v533 = vld [vmem:[%s304 + $0x690] sm:$0xff]
      %v534 = vld [vmem:[%s304 + $0x698] sm:$0xff]
      %v535 = vld [vmem:[%s304 + $0x6a0] sm:$0xff]
      %v536 = vld [vmem:[%s304 + $0x6a8] sm:$0xff]
      %v537 = vld [vmem:[%s304 + $0x6b0] sm:$0xff]
      %v538 = vld [vmem:[%s304 + $0x6b8] sm:$0xff]
      %v539 = vld [vmem:[%s304 + $0x6c0] sm:$0xff]
      %v540 = vld [vmem:[%s304 + $0x6c8] sm:$0xff]
      %v541 = vld [vmem:[%s304 + $0x6d0] sm:$0xff]
      %v542 = vld [vmem:[%s304 + $0x6d8] sm:$0xff]
      %v543 = vld [vmem:[%s304 + $0x6e0] sm:$0xff]
      %v544 = vld [vmem:[%s304 + $0x6e8] sm:$0xff]
      %v545 = vld [vmem:[%s304 + $0x6f0] sm:$0xff]
      %v546 = vld [vmem:[%s304 + $0x6f8] sm:$0xff]
      %v547 = vld [vmem:[%s304 + $0x700] sm:$0xff]
      %v548 = vld [vmem:[%s304 + $0x708] sm:$0xff]
      %v549 = vld [vmem:[%s304 + $0x710] sm:$0xff]
      %v550 = vld [vmem:[%s304 + $0x718] sm:$0xff]
      %v551 = vld [vmem:[%s304 + $0x720] sm:$0xff]
      %v552 = vld [vmem:[%s304 + $0x728] sm:$0xff]
      %v553 = vld [vmem:[%s304 + $0x730] sm:$0xff]
      %v554 = vld [vmem:[%s304 + $0x738] sm:$0xff]
      %v555 = vld [vmem:[%s304 + $0x740] sm:$0xff]
      %v556 = vld [vmem:[%s304 + $0x748] sm:$0xff]
      %v557 = vld [vmem:[%s304 + $0x750] sm:$0xff]
      %v558 = vld [vmem:[%s304 + $0x758] sm:$0xff]
      %v559 = vld [vmem:[%s304 + $0x760] sm:$0xff]
      %v560 = vld [vmem:[%s304 + $0x768] sm:$0xff]
      %v561 = vld [vmem:[%s304 + $0x770] sm:$0xff]
      %v562 = vld [vmem:[%s304 + $0x778] sm:$0xff]
      %v563 = vld [vmem:[%s304 + $0x780] sm:$0xff]
      %v564 = vld [vmem:[%s304 + $0x788] sm:$0xff]
      %v565 = vld [vmem:[%s304 + $0x790] sm:$0xff]
      %v566 = vld [vmem:[%s304 + $0x798] sm:$0xff]
      %v567 = vld [vmem:[%s304 + $0x7a0] sm:$0xff]
      %v568 = vld [vmem:[%s304 + $0x7a8] sm:$0xff]
      %v569 = vld [vmem:[%s304 + $0x7b0] sm:$0xff]
      %v570 = vld [vmem:[%s304 + $0x7b8] sm:$0xff]
      %v571 = vld [vmem:[%s304 + $0x7c0] sm:$0xff]
      %v572 = vld [vmem:[%s304 + $0x7c8] sm:$0xff]
      %v573 = vld [vmem:[%s304 + $0x7d0] sm:$0xff]
      %v574 = vld [vmem:[%s304 + $0x7d8] sm:$0xff]
      %v575 = vld [vmem:[%s304 + $0x7e0] sm:$0xff]
      %v576 = vld [vmem:[%s304 + $0x7e8] sm:$0xff]
      %v577 = vld [vmem:[%s304 + $0x7f0] sm:$0xff]
      %v578 = vld [vmem:[%s304 + $0x7f8] sm:$0xff]
      %v579 = vld [vmem:[%s1] sm:$0xf]
      %v580 = vld [vmem:[%s1 + $0x4] sm:$0xf]
      %v581 = vld [vmem:[%s1 + $0x8] sm:$0xf]
      %v582 = vld [vmem:[%s1 + $0xc] sm:$0xf]
      %v583 = vld [vmem:[%s1 + $0x10] sm:$0xf]
      %v584 = vld [vmem:[%s1 + $0x14] sm:$0xf]
      %v585 = vld [vmem:[%s1 + $0x18] sm:$0xf]
      %v586 = vld [vmem:[%s1 + $0x1c] sm:$0xf]
      %v587 = vld [vmem:[%s1 + $0x20] sm:$0xf]
      %v588 = vld [vmem:[%s1 + $0x24] sm:$0xf]
      %v589 = vld [vmem:[%s1 + $0x28] sm:$0xf]
      %v590 = vld [vmem:[%s1 + $0x2c] sm:$0xf]
      %v591 = vld [vmem:[%s1 + $0x30] sm:$0xf]
      %v592 = vld [vmem:[%s1 + $0x34] sm:$0xf]
      %v593 = vld [vmem:[%s1 + $0x38] sm:$0xf]
      %v594 = vld [vmem:[%s1 + $0x3c] sm:$0xf]
      %v595 = vld [vmem:[%s1 + $0x40] sm:$0xf]
      %v596 = vld [vmem:[%s1 + $0x44] sm:$0xf]
      %v597 = vld [vmem:[%s1 + $0x48] sm:$0xf]
      %v598 = vld [vmem:[%s1 + $0x4c] sm:$0xf]
      %v599 = vld [vmem:[%s1 + $0x50] sm:$0xf]
      %v600 = vld [vmem:[%s1 + $0x54] sm:$0xf]
      %v601 = vld [vmem:[%s1 + $0x58] sm:$0xf]
      %v602 = vld [vmem:[%s1 + $0x5c] sm:$0xf]
      %v603 = vld [vmem:[%s1 + $0x60] sm:$0xf]
      %v604 = vld [vmem:[%s1 + $0x64] sm:$0xf]
      %v605 = vld [vmem:[%s1 + $0x68] sm:$0xf]
      %v606 = vld [vmem:[%s1 + $0x6c] sm:$0xf]
      %v607 = vld [vmem:[%s1 + $0x70] sm:$0xf]
      %v608 = vld [vmem:[%s1 + $0x74] sm:$0xf]
      %v609 = vld [vmem:[%s1 + $0x78] sm:$0xf]
      %v610 = vld [vmem:[%s1 + $0x7c] sm:$0xf]
      %v611 = vld [vmem:[%s1 + $0x80] sm:$0xf]
      %v612 = vld [vmem:[%s1 + $0x84] sm:$0xf]
      %v613 = vld [vmem:[%s1 + $0x88] sm:$0xf]
      %v614 = vld [vmem:[%s1 + $0x8c] sm:$0xf]
      %v615 = vld [vmem:[%s1 + $0x90] sm:$0xf]
      %v616 = vld [vmem:[%s1 + $0x94] sm:$0xf]
      %v617 = vld [vmem:[%s1 + $0x98] sm:$0xf]
      %v618 = vld [vmem:[%s1 + $0x9c] sm:$0xf]
      %v619 = vld [vmem:[%s1 + $0xa0] sm:$0xf]
      %v620 = vld [vmem:[%s1 + $0xa4] sm:$0xf]
      %v621 = vld [vmem:[%s1 + $0xa8] sm:$0xf]
      %v622 = vld [vmem:[%s1 + $0xac] sm:$0xf]
      %v623 = vld [vmem:[%s1 + $0xb0] sm:$0xf]
      %v624 = vld [vmem:[%s1 + $0xb4] sm:$0xf]
      %v625 = vld [vmem:[%s1 + $0xb8] sm:$0xf]
      %v626 = vld [vmem:[%s1 + $0xbc] sm:$0xf]
      %v627 = vld [vmem:[%s1 + $0xc0] sm:$0xf]
      %v628 = vld [vmem:[%s1 + $0xc4] sm:$0xf]
      %v629 = vld [vmem:[%s1 + $0xc8] sm:$0xf]
      %v630 = vld [vmem:[%s1 + $0xcc] sm:$0xf]
      %v631 = vld [vmem:[%s1 + $0xd0] sm:$0xf]
      %v632 = vld [vmem:[%s1 + $0xd4] sm:$0xf]
      %v633 = vld [vmem:[%s1 + $0xd8] sm:$0xf]
      %v634 = vld [vmem:[%s1 + $0xdc] sm:$0xf]
      %v635 = vld [vmem:[%s1 + $0xe0] sm:$0xf]
      %v636 = vld [vmem:[%s1 + $0xe4] sm:$0xf]
      %v637 = vld [vmem:[%s1 + $0xe8] sm:$0xf]
      %v638 = vld [vmem:[%s1 + $0xec] sm:$0xf]
      %v639 = vld [vmem:[%s1 + $0xf0] sm:$0xf]
      %v640 = vld [vmem:[%s1 + $0xf4] sm:$0xf]
      %v641 = vld [vmem:[%s1 + $0xf8] sm:$0xf]
      %v642 = vld [vmem:[%s1 + $0xfc] sm:$0xf]
      %v643 = vld [vmem:[%s1 + $0x100] sm:$0xf]
      %v644 = vld [vmem:[%s1 + $0x104] sm:$0xf]
      %v645 = vld [vmem:[%s1 + $0x108] sm:$0xf]
      %v646 = vld [vmem:[%s1 + $0x10c] sm:$0xf]
      %v647 = vld [vmem:[%s1 + $0x110] sm:$0xf]
      %v648 = vld [vmem:[%s1 + $0x114] sm:$0xf]
      %v649 = vld [vmem:[%s1 + $0x118] sm:$0xf]
      %v650 = vld [vmem:[%s1 + $0x11c] sm:$0xf]
      %v651 = vld [vmem:[%s1 + $0x120] sm:$0xf]
      %v652 = vld [vmem:[%s1 + $0x124] sm:$0xf]
      %v653 = vld [vmem:[%s1 + $0x128] sm:$0xf]
      %v654 = vld [vmem:[%s1 + $0x12c] sm:$0xf]
      %v655 = vld [vmem:[%s1 + $0x130] sm:$0xf]
      %v656 = vld [vmem:[%s1 + $0x134] sm:$0xf]
      %v657 = vld [vmem:[%s1 + $0x138] sm:$0xf]
      %v658 = vld [vmem:[%s1 + $0x13c] sm:$0xf]
      %v659 = vld [vmem:[%s1 + $0x140] sm:$0xf]
      %v660 = vld [vmem:[%s1 + $0x144] sm:$0xf]
      %v661 = vld [vmem:[%s1 + $0x148] sm:$0xf]
      %v662 = vld [vmem:[%s1 + $0x14c] sm:$0xf]
      %v663 = vld [vmem:[%s1 + $0x150] sm:$0xf]
      %v664 = vld [vmem:[%s1 + $0x154] sm:$0xf]
      %v665 = vld [vmem:[%s1 + $0x158] sm:$0xf]
      %v666 = vld [vmem:[%s1 + $0x15c] sm:$0xf]
      %v667 = vld [vmem:[%s1 + $0x160] sm:$0xf]
      %v668 = vld [vmem:[%s1 + $0x164] sm:$0xf]
      %v669 = vld [vmem:[%s1 + $0x168] sm:$0xf]
      %v670 = vld [vmem:[%s1 + $0x16c] sm:$0xf]
      %v671 = vld [vmem:[%s1 + $0x170] sm:$0xf]
      %v672 = vld [vmem:[%s1 + $0x174] sm:$0xf]
      %v673 = vld [vmem:[%s1 + $0x178] sm:$0xf]
      %v674 = vld [vmem:[%s1 + $0x17c] sm:$0xf]
      %v675 = vld [vmem:[%s1 + $0x180] sm:$0xf]
      %v676 = vld [vmem:[%s1 + $0x184] sm:$0xf]
      %v677 = vld [vmem:[%s1 + $0x188] sm:$0xf]
      %v678 = vld [vmem:[%s1 + $0x18c] sm:$0xf]
      %v679 = vld [vmem:[%s1 + $0x190] sm:$0xf]
      %v680 = vld [vmem:[%s1 + $0x194] sm:$0xf]
      %v681 = vld [vmem:[%s1 + $0x198] sm:$0xf]
      %v682 = vld [vmem:[%s1 + $0x19c] sm:$0xf]
      %v683 = vld [vmem:[%s1 + $0x1a0] sm:$0xf]
      %v684 = vld [vmem:[%s1 + $0x1a4] sm:$0xf]
      %v685 = vld [vmem:[%s1 + $0x1a8] sm:$0xf]
      %v686 = vld [vmem:[%s1 + $0x1ac] sm:$0xf]
      %v687 = vld [vmem:[%s1 + $0x1b0] sm:$0xf]
      %v688 = vld [vmem:[%s1 + $0x1b4] sm:$0xf]
      %v689 = vld [vmem:[%s1 + $0x1b8] sm:$0xf]
      %v690 = vld [vmem:[%s1 + $0x1bc] sm:$0xf]
      %v691 = vld [vmem:[%s1 + $0x1c0] sm:$0xf]
      %v692 = vld [vmem:[%s1 + $0x1c4] sm:$0xf]
      %v693 = vld [vmem:[%s1 + $0x1c8] sm:$0xf]
      %v694 = vld [vmem:[%s1 + $0x1cc] sm:$0xf]
      %v695 = vld [vmem:[%s1 + $0x1d0] sm:$0xf]
      %v696 = vld [vmem:[%s1 + $0x1d4] sm:$0xf]
      %v697 = vld [vmem:[%s1 + $0x1d8] sm:$0xf]
      %v698 = vld [vmem:[%s1 + $0x1dc] sm:$0xf]
      %v955 = vunpack.c.l.b16 %v323
      %v956 = vunpack.c.h.b16 %v323
      %v957 = vunpack.c.l.b16 %v324
      %v958 = vunpack.c.h.b16 %v324
      %v959 = vunpack.c.l.b16 %v325
      %v960 = vunpack.c.h.b16 %v325
      %v961 = vunpack.c.l.b16 %v326
      %v962 = vunpack.c.h.b16 %v326
      %v963 = vunpack.c.l.b16 %v327
      %v964 = vunpack.c.h.b16 %v327
      %v965 = vunpack.c.l.b16 %v328
      %v966 = vunpack.c.h.b16 %v328
      %v967 = vunpack.c.l.b16 %v329
      %v968 = vunpack.c.h.b16 %v329
      %v969 = vunpack.c.l.b16 %v330
      %v970 = vunpack.c.h.b16 %v330
      %v971 = vunpack.c.l.b16 %v331
      %v972 = vunpack.c.h.b16 %v331
      %v973 = vunpack.c.l.b16 %v332
      %v974 = vunpack.c.h.b16 %v332
      %v975 = vunpack.c.l.b16 %v333
      %v976 = vunpack.c.h.b16 %v333
      %v977 = vunpack.c.l.b16 %v334
      %v978 = vunpack.c.h.b16 %v334
      %v979 = vunpack.c.l.b16 %v335
      %v980 = vunpack.c.h.b16 %v335
      %v981 = vunpack.c.l.b16 %v336
      %v982 = vunpack.c.h.b16 %v336
      %v983 = vunpack.c.l.b16 %v337
      %v984 = vunpack.c.h.b16 %v337
      %v985 = vunpack.c.l.b16 %v338
      %v986 = vunpack.c.h.b16 %v338
      %v987 = vunpack.c.l.b16 %v339
      %v988 = vunpack.c.h.b16 %v339
      %v989 = vunpack.c.l.b16 %v340
      %v990 = vunpack.c.h.b16 %v340
      %v991 = vunpack.c.l.b16 %v341
      %v992 = vunpack.c.h.b16 %v341
      %v993 = vunpack.c.l.b16 %v342
      %v994 = vunpack.c.h.b16 %v342
      %v995 = vunpack.c.l.b16 %v343
      %v996 = vunpack.c.h.b16 %v343
      %v997 = vunpack.c.l.b16 %v344
      %v998 = vunpack.c.h.b16 %v344
      %v999 = vunpack.c.l.b16 %v345
      %v1000 = vunpack.c.h.b16 %v345
      %v1001 = vunpack.c.l.b16 %v346
      %v1002 = vunpack.c.h.b16 %v346
      %v1003 = vunpack.c.l.b16 %v347
      %v1004 = vunpack.c.h.b16 %v347
      %v1005 = vunpack.c.l.b16 %v348
      %v1006 = vunpack.c.h.b16 %v348
      %v1007 = vunpack.c.l.b16 %v349
      %v1008 = vunpack.c.h.b16 %v349
      %v1009 = vunpack.c.l.b16 %v350
      %v1010 = vunpack.c.h.b16 %v350
      %v1011 = vunpack.c.l.b16 %v351
      %v1012 = vunpack.c.h.b16 %v351
      %v1013 = vunpack.c.l.b16 %v352
      %v1014 = vunpack.c.h.b16 %v352
      %v1015 = vunpack.c.l.b16 %v353
      %v1016 = vunpack.c.h.b16 %v353
      %v1017 = vunpack.c.l.b16 %v354
      %v1018 = vunpack.c.h.b16 %v354
      %v1019 = vunpack.c.l.b16 %v355
      %v1020 = vunpack.c.h.b16 %v355
      %v1021 = vunpack.c.l.b16 %v356
      %v1022 = vunpack.c.h.b16 %v356
      %v1023 = vunpack.c.l.b16 %v357
      %v1024 = vunpack.c.h.b16 %v357
      %v1025 = vunpack.c.l.b16 %v358
      %v1026 = vunpack.c.h.b16 %v358
      %v1027 = vunpack.c.l.b16 %v359
      %v1028 = vunpack.c.h.b16 %v359
      %v1029 = vunpack.c.l.b16 %v360
      %v1030 = vunpack.c.h.b16 %v360
      %v1031 = vunpack.c.l.b16 %v361
      %v1032 = vunpack.c.h.b16 %v361
      %v1033 = vunpack.c.l.b16 %v362
      %v1034 = vunpack.c.h.b16 %v362
      %v1035 = vunpack.c.l.b16 %v363
      %v1036 = vunpack.c.h.b16 %v363
      %v1037 = vunpack.c.l.b16 %v364
      %v1038 = vunpack.c.h.b16 %v364
      %v1039 = vunpack.c.l.b16 %v365
      %v1040 = vunpack.c.h.b16 %v365
      %v1041 = vunpack.c.l.b16 %v366
      %v1042 = vunpack.c.h.b16 %v366
      %v1043 = vunpack.c.l.b16 %v367
      %v1044 = vunpack.c.h.b16 %v367
      %v1045 = vunpack.c.l.b16 %v368
      %v1046 = vunpack.c.h.b16 %v368
      %v1047 = vunpack.c.l.b16 %v369
      %v1048 = vunpack.c.h.b16 %v369
      %v1049 = vunpack.c.l.b16 %v370
      %v1050 = vunpack.c.h.b16 %v370
      %v1051 = vunpack.c.l.b16 %v371
      %v1052 = vunpack.c.h.b16 %v371
      %v1053 = vunpack.c.l.b16 %v372
      %v1054 = vunpack.c.h.b16 %v372
      %v1055 = vunpack.c.l.b16 %v373
      %v1056 = vunpack.c.h.b16 %v373
      %v1057 = vunpack.c.l.b16 %v374
      %v1058 = vunpack.c.h.b16 %v374
      %v1059 = vunpack.c.l.b16 %v375
      %v1060 = vunpack.c.h.b16 %v375
      %v1061 = vunpack.c.l.b16 %v376
      %v1062 = vunpack.c.h.b16 %v376
      %v1063 = vunpack.c.l.b16 %v377
      %v1064 = vunpack.c.h.b16 %v377
      %v1065 = vunpack.c.l.b16 %v378
      %v1066 = vunpack.c.h.b16 %v378
      %v1067 = vunpack.c.l.b16 %v379
      %v1068 = vunpack.c.h.b16 %v379
      %v1069 = vunpack.c.l.b16 %v380
      %v1070 = vunpack.c.h.b16 %v380
      %v1071 = vunpack.c.l.b16 %v381
      %v1072 = vunpack.c.h.b16 %v381
      %v1073 = vunpack.c.l.b16 %v382
      %v1074 = vunpack.c.h.b16 %v382
      %v1075 = vunpack.c.l.b16 %v383
      %v1076 = vunpack.c.h.b16 %v383
      %v1077 = vunpack.c.l.b16 %v384
      %v1078 = vunpack.c.h.b16 %v384
      %v1079 = vunpack.c.l.b16 %v385
      %v1080 = vunpack.c.h.b16 %v385
      %v1081 = vunpack.c.l.b16 %v386
      %v1082 = vunpack.c.h.b16 %v386
      %v1083 = vunpack.c.l.b16 %v387
      %v1084 = vunpack.c.h.b16 %v387
      %v1085 = vunpack.c.l.b16 %v388
      %v1086 = vunpack.c.h.b16 %v388
      %v1087 = vunpack.c.l.b16 %v389
      %v1088 = vunpack.c.h.b16 %v389
      %v1089 = vunpack.c.l.b16 %v390
      %v1090 = vunpack.c.h.b16 %v390
      %v1091 = vunpack.c.l.b16 %v391
      %v1092 = vunpack.c.h.b16 %v391
      %v1093 = vunpack.c.l.b16 %v392
      %v1094 = vunpack.c.h.b16 %v392
      %v1095 = vunpack.c.l.b16 %v393
      %v1096 = vunpack.c.h.b16 %v393
      %v1097 = vunpack.c.l.b16 %v394
      %v1098 = vunpack.c.h.b16 %v394
      %v1099 = vunpack.c.l.b16 %v395
      %v1100 = vunpack.c.h.b16 %v395
      %v1101 = vunpack.c.l.b16 %v396
      %v1102 = vunpack.c.h.b16 %v396
      %v1103 = vunpack.c.l.b16 %v397
      %v1104 = vunpack.c.h.b16 %v397
      %v1105 = vunpack.c.l.b16 %v398
      %v1106 = vunpack.c.h.b16 %v398
      %v1107 = vunpack.c.l.b16 %v399
      %v1108 = vunpack.c.h.b16 %v399
      %v1109 = vunpack.c.l.b16 %v400
      %v1110 = vunpack.c.h.b16 %v400
      %v1111 = vunpack.c.l.b16 %v401
      %v1112 = vunpack.c.h.b16 %v401
      %v1113 = vunpack.c.l.b16 %v402
      %v1114 = vunpack.c.h.b16 %v402
      %v1115 = vunpack.c.l.b16 %v403
      %v1116 = vunpack.c.h.b16 %v403
      %v1117 = vunpack.c.l.b16 %v404
      %v1118 = vunpack.c.h.b16 %v404
      %v1119 = vunpack.c.l.b16 %v405
      %v1120 = vunpack.c.h.b16 %v405
      %v1121 = vunpack.c.l.b16 %v406
      %v1122 = vunpack.c.h.b16 %v406
      %v1123 = vunpack.c.l.b16 %v407
      %v1124 = vunpack.c.h.b16 %v407
      %v1125 = vunpack.c.l.b16 %v408
      %v1126 = vunpack.c.h.b16 %v408
      %v1127 = vunpack.c.l.b16 %v409
      %v1128 = vunpack.c.h.b16 %v409
      %v1129 = vunpack.c.l.b16 %v410
      %v1130 = vunpack.c.h.b16 %v410
      %v1131 = vunpack.c.l.b16 %v411
      %v1132 = vunpack.c.h.b16 %v411
      %v1133 = vunpack.c.l.b16 %v412
      %v1134 = vunpack.c.h.b16 %v412
      %v1135 = vunpack.c.l.b16 %v413
      %v1136 = vunpack.c.h.b16 %v413
      %v1137 = vunpack.c.l.b16 %v414
      %v1138 = vunpack.c.h.b16 %v414
      %v1139 = vunpack.c.l.b16 %v415
      %v1140 = vunpack.c.h.b16 %v415
      %v1141 = vunpack.c.l.b16 %v416
      %v1142 = vunpack.c.h.b16 %v416
      %v1143 = vunpack.c.l.b16 %v417
      %v1144 = vunpack.c.h.b16 %v417
      %v1145 = vunpack.c.l.b16 %v418
      %v1146 = vunpack.c.h.b16 %v418
      %v1147 = vunpack.c.l.b16 %v419
      %v1148 = vunpack.c.h.b16 %v419
      %v1149 = vunpack.c.l.b16 %v420
      %v1150 = vunpack.c.h.b16 %v420
      %v1151 = vunpack.c.l.b16 %v421
      %v1152 = vunpack.c.h.b16 %v421
      %v1153 = vunpack.c.l.b16 %v422
      %v1154 = vunpack.c.h.b16 %v422
      %v1155 = vunpack.c.l.b16 %v423
      %v1156 = vunpack.c.h.b16 %v423
      %v1157 = vunpack.c.l.b16 %v424
      %v1158 = vunpack.c.h.b16 %v424
      %v1159 = vunpack.c.l.b16 %v425
      %v1160 = vunpack.c.h.b16 %v425
      %v1161 = vunpack.c.l.b16 %v426
      %v1162 = vunpack.c.h.b16 %v426
      %v1163 = vunpack.c.l.b16 %v427
      %v1164 = vunpack.c.h.b16 %v427
      %v1165 = vunpack.c.l.b16 %v428
      %v1166 = vunpack.c.h.b16 %v428
      %v1167 = vunpack.c.l.b16 %v429
      %v1168 = vunpack.c.h.b16 %v429
      %v1169 = vunpack.c.l.b16 %v430
      %v1170 = vunpack.c.h.b16 %v430
      %v1171 = vunpack.c.l.b16 %v431
      %v1172 = vunpack.c.h.b16 %v431
      %v1173 = vunpack.c.l.b16 %v432
      %v1174 = vunpack.c.h.b16 %v432
      %v1175 = vunpack.c.l.b16 %v433
      %v1176 = vunpack.c.h.b16 %v433
      %v1177 = vunpack.c.l.b16 %v434
      %v1178 = vunpack.c.h.b16 %v434
      %v1179 = vunpack.c.l.b16 %v435
      %v1180 = vunpack.c.h.b16 %v435
      %v1181 = vunpack.c.l.b16 %v436
      %v1182 = vunpack.c.h.b16 %v436
      %v1183 = vunpack.c.l.b16 %v437
      %v1184 = vunpack.c.h.b16 %v437
      %v1185 = vunpack.c.l.b16 %v438
      %v1186 = vunpack.c.h.b16 %v438
      %v1187 = vunpack.c.l.b16 %v439
      %v1188 = vunpack.c.h.b16 %v439
      %v1189 = vunpack.c.l.b16 %v440
      %v1190 = vunpack.c.h.b16 %v440
      %v1191 = vunpack.c.l.b16 %v441
      %v1192 = vunpack.c.h.b16 %v441
      %v1193 = vunpack.c.l.b16 %v442
      %v1194 = vunpack.c.h.b16 %v442
      %v1195 = vunpack.c.l.b16 %v443
      %v1196 = vunpack.c.h.b16 %v443
      %v1197 = vunpack.c.l.b16 %v444
      %v1198 = vunpack.c.h.b16 %v444
      %v1199 = vunpack.c.l.b16 %v445
      %v1200 = vunpack.c.h.b16 %v445
      %v1201 = vunpack.c.l.b16 %v446
      %v1202 = vunpack.c.h.b16 %v446
      %v1203 = vunpack.c.l.b16 %v447
      %v1204 = vunpack.c.h.b16 %v447
      %v1205 = vunpack.c.l.b16 %v448
      %v1206 = vunpack.c.h.b16 %v448
      %v1207 = vunpack.c.l.b16 %v449
      %v1208 = vunpack.c.h.b16 %v449
      %v1209 = vunpack.c.l.b16 %v450
      %v1210 = vunpack.c.h.b16 %v450
      %v1211 = vunpack.c.l.b16 %v451
      %v1212 = vunpack.c.h.b16 %v451
      %v1213 = vunpack.c.l.b16 %v452
      %v1214 = vunpack.c.h.b16 %v452
      %v1215 = vunpack.c.l.b16 %v453
      %v1216 = vunpack.c.h.b16 %v453
      %v1217 = vunpack.c.l.b16 %v454
      %v1218 = vunpack.c.h.b16 %v454
      %v1219 = vunpack.c.l.b16 %v455
      %v1220 = vunpack.c.h.b16 %v455
      %v1221 = vunpack.c.l.b16 %v456
      %v1222 = vunpack.c.h.b16 %v456
      %v1223 = vunpack.c.l.b16 %v457
      %v1224 = vunpack.c.h.b16 %v457
      %v1225 = vunpack.c.l.b16 %v458
      %v1226 = vunpack.c.h.b16 %v458
      %v1227 = vunpack.c.l.b16 %v459
      %v1228 = vunpack.c.h.b16 %v459
      %v1229 = vunpack.c.l.b16 %v460
      %v1230 = vunpack.c.h.b16 %v460
      %v1231 = vunpack.c.l.b16 %v461
      %v1232 = vunpack.c.h.b16 %v461
      %v1233 = vunpack.c.l.b16 %v462
      %v1234 = vunpack.c.h.b16 %v462
      %v1235 = vunpack.c.l.b16 %v463
      %v1236 = vunpack.c.h.b16 %v463
      %v1237 = vunpack.c.l.b16 %v464
      %v1238 = vunpack.c.h.b16 %v464
      %v1239 = vunpack.c.l.b16 %v465
      %v1240 = vunpack.c.h.b16 %v465
      %v1241 = vunpack.c.l.b16 %v466
      %v1242 = vunpack.c.h.b16 %v466
      %v1243 = vunpack.c.l.b16 %v467
      %v1244 = vunpack.c.h.b16 %v467
      %v1245 = vunpack.c.l.b16 %v468
      %v1246 = vunpack.c.h.b16 %v468
      %v1247 = vunpack.c.l.b16 %v469
      %v1248 = vunpack.c.h.b16 %v469
      %v1249 = vunpack.c.l.b16 %v470
      %v1250 = vunpack.c.h.b16 %v470
      %v1251 = vunpack.c.l.b16 %v471
      %v1252 = vunpack.c.h.b16 %v471
      %v1253 = vunpack.c.l.b16 %v472
      %v1254 = vunpack.c.h.b16 %v472
      %v1255 = vunpack.c.l.b16 %v473
      %v1256 = vunpack.c.h.b16 %v473
      %v1257 = vunpack.c.l.b16 %v474
      %v1258 = vunpack.c.h.b16 %v474
      %v1259 = vunpack.c.l.b16 %v475
      %v1260 = vunpack.c.h.b16 %v475
      %v1261 = vunpack.c.l.b16 %v476
      %v1262 = vunpack.c.h.b16 %v476
      %v1263 = vunpack.c.l.b16 %v477
      %v1264 = vunpack.c.h.b16 %v477
      %v1265 = vunpack.c.l.b16 %v478
      %v1266 = vunpack.c.h.b16 %v478
      %v1267 = vunpack.c.l.b16 %v479
      %v1268 = vunpack.c.h.b16 %v479
      %v1269 = vunpack.c.l.b16 %v480
      %v1270 = vunpack.c.h.b16 %v480
      %v1271 = vunpack.c.l.b16 %v481
      %v1272 = vunpack.c.h.b16 %v481
      %v1273 = vunpack.c.l.b16 %v482
      %v1274 = vunpack.c.h.b16 %v482
      %v1275 = vunpack.c.l.b16 %v483
      %v1276 = vunpack.c.h.b16 %v483
      %v1277 = vunpack.c.l.b16 %v484
      %v1278 = vunpack.c.h.b16 %v484
      %v1279 = vunpack.c.l.b16 %v485
      %v1280 = vunpack.c.h.b16 %v485
      %v1281 = vunpack.c.l.b16 %v486
      %v1282 = vunpack.c.h.b16 %v486
      %v1283 = vunpack.c.l.b16 %v487
      %v1284 = vunpack.c.h.b16 %v487
      %v1285 = vunpack.c.l.b16 %v488
      %v1286 = vunpack.c.h.b16 %v488
      %v1287 = vunpack.c.l.b16 %v489
      %v1288 = vunpack.c.h.b16 %v489
      %v1289 = vunpack.c.l.b16 %v490
      %v1290 = vunpack.c.h.b16 %v490
      %v1291 = vunpack.c.l.b16 %v491
      %v1292 = vunpack.c.h.b16 %v491
      %v1293 = vunpack.c.l.b16 %v492
      %v1294 = vunpack.c.h.b16 %v492
      %v1295 = vunpack.c.l.b16 %v493
      %v1296 = vunpack.c.h.b16 %v493
      %v1297 = vunpack.c.l.b16 %v494
      %v1298 = vunpack.c.h.b16 %v494
      %v1299 = vunpack.c.l.b16 %v495
      %v1300 = vunpack.c.h.b16 %v495
      %v1301 = vunpack.c.l.b16 %v496
      %v1302 = vunpack.c.h.b16 %v496
      %v1303 = vunpack.c.l.b16 %v497
      %v1304 = vunpack.c.h.b16 %v497
      %v1305 = vunpack.c.l.b16 %v498
      %v1306 = vunpack.c.h.b16 %v498
      %v1307 = vunpack.c.l.b16 %v499
      %v1308 = vunpack.c.h.b16 %v499
      %v1309 = vunpack.c.l.b16 %v500
      %v1310 = vunpack.c.h.b16 %v500
      %v1311 = vunpack.c.l.b16 %v501
      %v1312 = vunpack.c.h.b16 %v501
      %v1313 = vunpack.c.l.b16 %v502
      %v1314 = vunpack.c.h.b16 %v502
      %v1315 = vunpack.c.l.b16 %v503
      %v1316 = vunpack.c.h.b16 %v503
      %v1317 = vunpack.c.l.b16 %v504
      %v1318 = vunpack.c.h.b16 %v504
      %v1319 = vunpack.c.l.b16 %v505
      %v1320 = vunpack.c.h.b16 %v505
      %v1321 = vunpack.c.l.b16 %v506
      %v1322 = vunpack.c.h.b16 %v506
      %v1323 = vunpack.c.l.b16 %v507
      %v1324 = vunpack.c.h.b16 %v507
      %v1325 = vunpack.c.l.b16 %v508
      %v1326 = vunpack.c.h.b16 %v508
      %v1327 = vunpack.c.l.b16 %v509
      %v1328 = vunpack.c.h.b16 %v509
      %v1329 = vunpack.c.l.b16 %v510
      %v1330 = vunpack.c.h.b16 %v510
      %v1331 = vunpack.c.l.b16 %v511
      %v1332 = vunpack.c.h.b16 %v511
      %v1333 = vunpack.c.l.b16 %v512
      %v1334 = vunpack.c.h.b16 %v512
      %v1335 = vunpack.c.l.b16 %v513
      %v1336 = vunpack.c.h.b16 %v513
      %v1337 = vunpack.c.l.b16 %v514
      %v1338 = vunpack.c.h.b16 %v514
      %v1339 = vunpack.c.l.b16 %v515
      %v1340 = vunpack.c.h.b16 %v515
      %v1341 = vunpack.c.l.b16 %v516
      %v1342 = vunpack.c.h.b16 %v516
      %v1343 = vunpack.c.l.b16 %v517
      %v1344 = vunpack.c.h.b16 %v517
      %v1345 = vunpack.c.l.b16 %v518
      %v1346 = vunpack.c.h.b16 %v518
      %v1347 = vunpack.c.l.b16 %v519
      %v1348 = vunpack.c.h.b16 %v519
      %v1349 = vunpack.c.l.b16 %v520
      %v1350 = vunpack.c.h.b16 %v520
      %v1351 = vunpack.c.l.b16 %v521
      %v1352 = vunpack.c.h.b16 %v521
      %v1353 = vunpack.c.l.b16 %v522
      %v1354 = vunpack.c.h.b16 %v522
      %v1355 = vunpack.c.l.b16 %v523
      %v1356 = vunpack.c.h.b16 %v523
      %v1357 = vunpack.c.l.b16 %v524
      %v1358 = vunpack.c.h.b16 %v524
      %v1359 = vunpack.c.l.b16 %v525
      %v1360 = vunpack.c.h.b16 %v525
      %v1361 = vunpack.c.l.b16 %v526
      %v1362 = vunpack.c.h.b16 %v526
      %v1363 = vunpack.c.l.b16 %v527
      %v1364 = vunpack.c.h.b16 %v527
      %v1365 = vunpack.c.l.b16 %v528
      %v1366 = vunpack.c.h.b16 %v528
      %v1367 = vunpack.c.l.b16 %v529
      %v1368 = vunpack.c.h.b16 %v529
      %v1369 = vunpack.c.l.b16 %v530
      %v1370 = vunpack.c.h.b16 %v530
      %v1371 = vunpack.c.l.b16 %v531
      %v1372 = vunpack.c.h.b16 %v531
      %v1373 = vunpack.c.l.b16 %v532
      %v1374 = vunpack.c.h.b16 %v532
      %v1375 = vunpack.c.l.b16 %v533
      %v1376 = vunpack.c.h.b16 %v533
      %v1377 = vunpack.c.l.b16 %v534
      %v1378 = vunpack.c.h.b16 %v534
      %v1379 = vunpack.c.l.b16 %v535
      %v1380 = vunpack.c.h.b16 %v535
      %v1381 = vunpack.c.l.b16 %v536
      %v1382 = vunpack.c.h.b16 %v536
      %v1383 = vunpack.c.l.b16 %v537
      %v1384 = vunpack.c.h.b16 %v537
      %v1385 = vunpack.c.l.b16 %v538
      %v1386 = vunpack.c.h.b16 %v538
      %v1387 = vunpack.c.l.b16 %v539
      %v1388 = vunpack.c.h.b16 %v539
      %v1389 = vunpack.c.l.b16 %v540
      %v1390 = vunpack.c.h.b16 %v540
      %v1391 = vunpack.c.l.b16 %v541
      %v1392 = vunpack.c.h.b16 %v541
      %v1393 = vunpack.c.l.b16 %v542
      %v1394 = vunpack.c.h.b16 %v542
      %v1395 = vunpack.c.l.b16 %v543
      %v1396 = vunpack.c.h.b16 %v543
      %v1397 = vunpack.c.l.b16 %v544
      %v1398 = vunpack.c.h.b16 %v544
      %v1399 = vunpack.c.l.b16 %v545
      %v1400 = vunpack.c.h.b16 %v545
      %v1401 = vunpack.c.l.b16 %v546
      %v1402 = vunpack.c.h.b16 %v546
      %v1403 = vunpack.c.l.b16 %v547
      %v1404 = vunpack.c.h.b16 %v547
      %v1405 = vunpack.c.l.b16 %v548
      %v1406 = vunpack.c.h.b16 %v548
      %v1407 = vunpack.c.l.b16 %v549
      %v1408 = vunpack.c.h.b16 %v549
      %v1409 = vunpack.c.l.b16 %v550
      %v1410 = vunpack.c.h.b16 %v550
      %v1411 = vunpack.c.l.b16 %v551
      %v1412 = vunpack.c.h.b16 %v551
      %v1413 = vunpack.c.l.b16 %v552
      %v1414 = vunpack.c.h.b16 %v552
      %v1415 = vunpack.c.l.b16 %v553
      %v1416 = vunpack.c.h.b16 %v553
      %v1417 = vunpack.c.l.b16 %v554
      %v1418 = vunpack.c.h.b16 %v554
      %v1419 = vunpack.c.l.b16 %v555
      %v1420 = vunpack.c.h.b16 %v555
      %v1421 = vunpack.c.l.b16 %v556
      %v1422 = vunpack.c.h.b16 %v556
      %v1423 = vunpack.c.l.b16 %v557
      %v1424 = vunpack.c.h.b16 %v557
      %v1425 = vunpack.c.l.b16 %v558
      %v1426 = vunpack.c.h.b16 %v558
      %v1427 = vunpack.c.l.b16 %v559
      %v1428 = vunpack.c.h.b16 %v559
      %v1429 = vunpack.c.l.b16 %v560
      %v1430 = vunpack.c.h.b16 %v560
      %v1431 = vunpack.c.l.b16 %v561
      %v1432 = vunpack.c.h.b16 %v561
      %v1433 = vunpack.c.l.b16 %v562
      %v1434 = vunpack.c.h.b16 %v562
      %v1435 = vunpack.c.l.b16 %v563
      %v1436 = vunpack.c.h.b16 %v563
      %v1437 = vunpack.c.l.b16 %v564
      %v1438 = vunpack.c.h.b16 %v564
      %v1439 = vunpack.c.l.b16 %v565
      %v1440 = vunpack.c.h.b16 %v565
      %v1441 = vunpack.c.l.b16 %v566
      %v1442 = vunpack.c.h.b16 %v566
      %v1443 = vunpack.c.l.b16 %v567
      %v1444 = vunpack.c.h.b16 %v567
      %v1445 = vunpack.c.l.b16 %v568
      %v1446 = vunpack.c.h.b16 %v568
      %v1447 = vunpack.c.l.b16 %v569
      %v1448 = vunpack.c.h.b16 %v569
      %v1449 = vunpack.c.l.b16 %v570
      %v1450 = vunpack.c.h.b16 %v570
      %v1451 = vunpack.c.l.b16 %v571
      %v1452 = vunpack.c.h.b16 %v571
      %v1453 = vunpack.c.l.b16 %v572
      %v1454 = vunpack.c.h.b16 %v572
      %v1455 = vunpack.c.l.b16 %v573
      %v1456 = vunpack.c.h.b16 %v573
      %v1457 = vunpack.c.l.b16 %v574
      %v1458 = vunpack.c.h.b16 %v574
      %v1459 = vunpack.c.l.b16 %v575
      %v1460 = vunpack.c.h.b16 %v575
      %v1461 = vunpack.c.l.b16 %v576
      %v1462 = vunpack.c.h.b16 %v576
      %v1463 = vunpack.c.l.b16 %v577
      %v1464 = vunpack.c.h.b16 %v577
      %v1465 = vunpack.c.l.b16 %v578
      %v1466 = vunpack.c.h.b16 %v578
      %v1467 = vpack.c.b16 %v963, %v955
      %v1468 = vpack.c.b16 %v964, %v956
      %v1469 = vpack.c.b16 %v965, %v957
      %v1470 = vpack.c.b16 %v966, %v958
      %v1471 = vpack.c.b16 %v967, %v959
      %v1472 = vpack.c.b16 %v968, %v960
      %v1473 = vpack.c.b16 %v969, %v961
      %v1474 = vpack.c.b16 %v970, %v962
      %v1475 = vpack.c.b16 %v979, %v971
      %v1476 = vpack.c.b16 %v980, %v972
      %v1477 = vpack.c.b16 %v981, %v973
      %v1478 = vpack.c.b16 %v982, %v974
      %v1479 = vpack.c.b16 %v983, %v975
      %v1480 = vpack.c.b16 %v984, %v976
      %v1481 = vpack.c.b16 %v985, %v977
      %v1482 = vpack.c.b16 %v986, %v978
      %v1483 = vpack.c.b16 %v995, %v987
      %v1484 = vpack.c.b16 %v996, %v988
      %v1485 = vpack.c.b16 %v997, %v989
      %v1486 = vpack.c.b16 %v998, %v990
      %v1487 = vpack.c.b16 %v999, %v991
      %v1488 = vpack.c.b16 %v1000, %v992
      %v1489 = vpack.c.b16 %v1001, %v993
      %v1490 = vpack.c.b16 %v1002, %v994
      %v1491 = vpack.c.b16 %v1011, %v1003
      %v1492 = vpack.c.b16 %v1012, %v1004
      %v1493 = vpack.c.b16 %v1013, %v1005
      %v1494 = vpack.c.b16 %v1014, %v1006
      %v1495 = vpack.c.b16 %v1015, %v1007
      %v1496 = vpack.c.b16 %v1016, %v1008
      %v1497 = vpack.c.b16 %v1017, %v1009
      %v1498 = vpack.c.b16 %v1018, %v1010
      %v1499 = vpack.c.b16 %v1027, %v1019
      %v1500 = vpack.c.b16 %v1028, %v1020
      %v1501 = vpack.c.b16 %v1029, %v1021
      %v1502 = vpack.c.b16 %v1030, %v1022
      %v1503 = vpack.c.b16 %v1031, %v1023
      %v1504 = vpack.c.b16 %v1032, %v1024
      %v1505 = vpack.c.b16 %v1033, %v1025
      %v1506 = vpack.c.b16 %v1034, %v1026
      %v1507 = vpack.c.b16 %v1043, %v1035
      %v1508 = vpack.c.b16 %v1044, %v1036
      %v1509 = vpack.c.b16 %v1045, %v1037
      %v1510 = vpack.c.b16 %v1046, %v1038
      %v1511 = vpack.c.b16 %v1047, %v1039
      %v1512 = vpack.c.b16 %v1048, %v1040
      %v1513 = vpack.c.b16 %v1049, %v1041
      %v1514 = vpack.c.b16 %v1050, %v1042
      %v1515 = vpack.c.b16 %v1059, %v1051
      %v1516 = vpack.c.b16 %v1060, %v1052
      %v1517 = vpack.c.b16 %v1061, %v1053
      %v1518 = vpack.c.b16 %v1062, %v1054
      %v1519 = vpack.c.b16 %v1063, %v1055
      %v1520 = vpack.c.b16 %v1064, %v1056
      %v1521 = vpack.c.b16 %v1065, %v1057
      %v1522 = vpack.c.b16 %v1066, %v1058
      %v1523 = vpack.c.b16 %v1075, %v1067
      %v1524 = vpack.c.b16 %v1076, %v1068
      %v1525 = vpack.c.b16 %v1077, %v1069
      %v1526 = vpack.c.b16 %v1078, %v1070
      %v1527 = vpack.c.b16 %v1079, %v1071
      %v1528 = vpack.c.b16 %v1080, %v1072
      %v1529 = vpack.c.b16 %v1081, %v1073
      %v1530 = vpack.c.b16 %v1082, %v1074
      %v1531 = vpack.c.b16 %v1091, %v1083
      %v1532 = vpack.c.b16 %v1092, %v1084
      %v1533 = vpack.c.b16 %v1093, %v1085
      %v1534 = vpack.c.b16 %v1094, %v1086
      %v1535 = vpack.c.b16 %v1095, %v1087
      %v1536 = vpack.c.b16 %v1096, %v1088
      %v1537 = vpack.c.b16 %v1097, %v1089
      %v1538 = vpack.c.b16 %v1098, %v1090
      %v1539 = vpack.c.b16 %v1107, %v1099
      %v1540 = vpack.c.b16 %v1108, %v1100
      %v1541 = vpack.c.b16 %v1109, %v1101
      %v1542 = vpack.c.b16 %v1110, %v1102
      %v1543 = vpack.c.b16 %v1111, %v1103
      %v1544 = vpack.c.b16 %v1112, %v1104
      %v1545 = vpack.c.b16 %v1113, %v1105
      %v1546 = vpack.c.b16 %v1114, %v1106
      %v1547 = vpack.c.b16 %v1123, %v1115
      %v1548 = vpack.c.b16 %v1124, %v1116
      %v1549 = vpack.c.b16 %v1125, %v1117
      %v1550 = vpack.c.b16 %v1126, %v1118
      %v1551 = vpack.c.b16 %v1127, %v1119
      %v1552 = vpack.c.b16 %v1128, %v1120
      %v1553 = vpack.c.b16 %v1129, %v1121
      %v1554 = vpack.c.b16 %v1130, %v1122
      %v1555 = vpack.c.b16 %v1139, %v1131
      %v1556 = vpack.c.b16 %v1140, %v1132
      %v1557 = vpack.c.b16 %v1141, %v1133
      %v1558 = vpack.c.b16 %v1142, %v1134
      %v1559 = vpack.c.b16 %v1143, %v1135
      %v1560 = vpack.c.b16 %v1144, %v1136
      %v1561 = vpack.c.b16 %v1145, %v1137
      %v1562 = vpack.c.b16 %v1146, %v1138
      %v1563 = vpack.c.b16 %v1155, %v1147
      %v1564 = vpack.c.b16 %v1156, %v1148
      %v1565 = vpack.c.b16 %v1157, %v1149
      %v1566 = vpack.c.b16 %v1158, %v1150
      %v1567 = vpack.c.b16 %v1159, %v1151
      %v1568 = vpack.c.b16 %v1160, %v1152
      %v1569 = vpack.c.b16 %v1161, %v1153
      %v1570 = vpack.c.b16 %v1162, %v1154
      %v1571 = vpack.c.b16 %v1171, %v1163
      %v1572 = vpack.c.b16 %v1172, %v1164
      %v1573 = vpack.c.b16 %v1173, %v1165
      %v1574 = vpack.c.b16 %v1174, %v1166
      %v1575 = vpack.c.b16 %v1175, %v1167
      %v1576 = vpack.c.b16 %v1176, %v1168
      %v1577 = vpack.c.b16 %v1177, %v1169
      %v1578 = vpack.c.b16 %v1178, %v1170
      %v1579 = vpack.c.b16 %v1187, %v1179
      %v1580 = vpack.c.b16 %v1188, %v1180
      %v1581 = vpack.c.b16 %v1189, %v1181
      %v1582 = vpack.c.b16 %v1190, %v1182
      %v1583 = vpack.c.b16 %v1191, %v1183
      %v1584 = vpack.c.b16 %v1192, %v1184
      %v1585 = vpack.c.b16 %v1193, %v1185
      %v1586 = vpack.c.b16 %v1194, %v1186
      %v1587 = vpack.c.b16 %v1203, %v1195
      %v1588 = vpack.c.b16 %v1204, %v1196
      %v1589 = vpack.c.b16 %v1205, %v1197
      %v1590 = vpack.c.b16 %v1206, %v1198
      %v1591 = vpack.c.b16 %v1207, %v1199
      %v1592 = vpack.c.b16 %v1208, %v1200
      %v1593 = vpack.c.b16 %v1209, %v1201
      %v1594 = vpack.c.b16 %v1210, %v1202
      %v1595 = vpack.c.b16 %v1219, %v1211
      %v1596 = vpack.c.b16 %v1220, %v1212
      %v1597 = vpack.c.b16 %v1221, %v1213
      %v1598 = vpack.c.b16 %v1222, %v1214
      %v1599 = vpack.c.b16 %v1223, %v1215
      %v1600 = vpack.c.b16 %v1224, %v1216
      %v1601 = vpack.c.b16 %v1225, %v1217
      %v1602 = vpack.c.b16 %v1226, %v1218
      %v1603 = vpack.c.b16 %v1235, %v1227
      %v1604 = vpack.c.b16 %v1236, %v1228
      %v1605 = vpack.c.b16 %v1237, %v1229
      %v1606 = vpack.c.b16 %v1238, %v1230
      %v1607 = vpack.c.b16 %v1239, %v1231
      %v1608 = vpack.c.b16 %v1240, %v1232
      %v1609 = vpack.c.b16 %v1241, %v1233
      %v1610 = vpack.c.b16 %v1242, %v1234
      %v1611 = vpack.c.b16 %v1251, %v1243
      %v1612 = vpack.c.b16 %v1252, %v1244
      %v1613 = vpack.c.b16 %v1253, %v1245
      %v1614 = vpack.c.b16 %v1254, %v1246
      %v1615 = vpack.c.b16 %v1255, %v1247
      %v1616 = vpack.c.b16 %v1256, %v1248
      %v1617 = vpack.c.b16 %v1257, %v1249
      %v1618 = vpack.c.b16 %v1258, %v1250
      %v1619 = vpack.c.b16 %v1267, %v1259
      %v1620 = vpack.c.b16 %v1268, %v1260
      %v1621 = vpack.c.b16 %v1269, %v1261
      %v1622 = vpack.c.b16 %v1270, %v1262
      %v1623 = vpack.c.b16 %v1271, %v1263
      %v1624 = vpack.c.b16 %v1272, %v1264
      %v1625 = vpack.c.b16 %v1273, %v1265
      %v1626 = vpack.c.b16 %v1274, %v1266
      %v1627 = vpack.c.b16 %v1283, %v1275
      %v1628 = vpack.c.b16 %v1284, %v1276
      %v1629 = vpack.c.b16 %v1285, %v1277
      %v1630 = vpack.c.b16 %v1286, %v1278
      %v1631 = vpack.c.b16 %v1287, %v1279
      %v1632 = vpack.c.b16 %v1288, %v1280
      %v1633 = vpack.c.b16 %v1289, %v1281
      %v1634 = vpack.c.b16 %v1290, %v1282
      %v1635 = vpack.c.b16 %v1299, %v1291
      %v1636 = vpack.c.b16 %v1300, %v1292
      %v1637 = vpack.c.b16 %v1301, %v1293
      %v1638 = vpack.c.b16 %v1302, %v1294
      %v1639 = vpack.c.b16 %v1303, %v1295
      %v1640 = vpack.c.b16 %v1304, %v1296
      %v1641 = vpack.c.b16 %v1305, %v1297
      %v1642 = vpack.c.b16 %v1306, %v1298
      %v1643 = vpack.c.b16 %v1315, %v1307
      %v1644 = vpack.c.b16 %v1316, %v1308
      %v1645 = vpack.c.b16 %v1317, %v1309
      %v1646 = vpack.c.b16 %v1318, %v1310
      %v1647 = vpack.c.b16 %v1319, %v1311
      %v1648 = vpack.c.b16 %v1320, %v1312
      %v1649 = vpack.c.b16 %v1321, %v1313
      %v1650 = vpack.c.b16 %v1322, %v1314
      %v1651 = vpack.c.b16 %v1331, %v1323
      %v1652 = vpack.c.b16 %v1332, %v1324
      %v1653 = vpack.c.b16 %v1333, %v1325
      %v1654 = vpack.c.b16 %v1334, %v1326
      %v1655 = vpack.c.b16 %v1335, %v1327
      %v1656 = vpack.c.b16 %v1336, %v1328
      %v1657 = vpack.c.b16 %v1337, %v1329
      %v1658 = vpack.c.b16 %v1338, %v1330
      %v1659 = vpack.c.b16 %v1347, %v1339
      %v1660 = vpack.c.b16 %v1348, %v1340
      %v1661 = vpack.c.b16 %v1349, %v1341
      %v1662 = vpack.c.b16 %v1350, %v1342
      %v1663 = vpack.c.b16 %v1351, %v1343
      %v1664 = vpack.c.b16 %v1352, %v1344
      %v1665 = vpack.c.b16 %v1353, %v1345
      %v1666 = vpack.c.b16 %v1354, %v1346
      %v1667 = vpack.c.b16 %v1363, %v1355
      %v1668 = vpack.c.b16 %v1364, %v1356
      %v1669 = vpack.c.b16 %v1365, %v1357
      %v1670 = vpack.c.b16 %v1366, %v1358
      %v1671 = vpack.c.b16 %v1367, %v1359
      %v1672 = vpack.c.b16 %v1368, %v1360
      %v1673 = vpack.c.b16 %v1369, %v1361
      %v1674 = vpack.c.b16 %v1370, %v1362
      %v1675 = vpack.c.b16 %v1379, %v1371
      %v1676 = vpack.c.b16 %v1380, %v1372
      %v1677 = vpack.c.b16 %v1381, %v1373
      %v1678 = vpack.c.b16 %v1382, %v1374
      %v1679 = vpack.c.b16 %v1383, %v1375
      %v1680 = vpack.c.b16 %v1384, %v1376
      %v1681 = vpack.c.b16 %v1385, %v1377
      %v1682 = vpack.c.b16 %v1386, %v1378
      %v1683 = vpack.c.b16 %v1395, %v1387
      %v1684 = vpack.c.b16 %v1396, %v1388
      %v1685 = vpack.c.b16 %v1397, %v1389
      %v1686 = vpack.c.b16 %v1398, %v1390
      %v1687 = vpack.c.b16 %v1399, %v1391
      %v1688 = vpack.c.b16 %v1400, %v1392
      %v1689 = vpack.c.b16 %v1401, %v1393
      %v1690 = vpack.c.b16 %v1402, %v1394
      %v1691 = vpack.c.b16 %v1411, %v1403
      %v1692 = vpack.c.b16 %v1412, %v1404
      %v1693 = vpack.c.b16 %v1413, %v1405
      %v1694 = vpack.c.b16 %v1414, %v1406
      %v1695 = vpack.c.b16 %v1415, %v1407
      %v1696 = vpack.c.b16 %v1416, %v1408
      %v1697 = vpack.c.b16 %v1417, %v1409
      %v1698 = vpack.c.b16 %v1418, %v1410
      %v1699 = vpack.c.b16 %v1427, %v1419
      %v1700 = vpack.c.b16 %v1428, %v1420
      %v1701 = vpack.c.b16 %v1429, %v1421
      %v1702 = vpack.c.b16 %v1430, %v1422
      %v1703 = vpack.c.b16 %v1431, %v1423
      %v1704 = vpack.c.b16 %v1432, %v1424
      %v1705 = vpack.c.b16 %v1433, %v1425
      %v1706 = vpack.c.b16 %v1434, %v1426
      %v1707 = vpack.c.b16 %v1443, %v1435
      %v1708 = vpack.c.b16 %v1444, %v1436
      %v1709 = vpack.c.b16 %v1445, %v1437
      %v1710 = vpack.c.b16 %v1446, %v1438
      %v1711 = vpack.c.b16 %v1447, %v1439
      %v1712 = vpack.c.b16 %v1448, %v1440
      %v1713 = vpack.c.b16 %v1449, %v1441
      %v1714 = vpack.c.b16 %v1450, %v1442
      %v1715 = vpack.c.b16 %v1459, %v1451
      %v1716 = vpack.c.b16 %v1460, %v1452
      %v1717 = vpack.c.b16 %v1461, %v1453
      %v1718 = vpack.c.b16 %v1462, %v1454
      %v1719 = vpack.c.b16 %v1463, %v1455
      %v1720 = vpack.c.b16 %v1464, %v1456
      %v1721 = vpack.c.b16 %v1465, %v1457
      %v1722 = vpack.c.b16 %v1466, %v1458
      %v2067 = vunpack.c.l.b16 %v579
      %v2068 = vunpack.c.l.b16 %v580
      %v2069 = vunpack.c.l.b16 %v581
      %v2070 = vunpack.c.l.b16 %v582
      %v2071 = vunpack.c.l.b16 %v583
      %v2072 = vunpack.c.l.b16 %v584
      %v2073 = vunpack.c.l.b16 %v585
      %v2074 = vunpack.c.l.b16 %v586
      %v2075 = vunpack.c.l.b16 %v587
      %v2076 = vunpack.c.l.b16 %v588
      %v2077 = vunpack.c.l.b16 %v589
      %v2078 = vunpack.c.l.b16 %v590
      %v2079 = vunpack.c.l.b16 %v591
      %v2080 = vunpack.c.l.b16 %v592
      %v2081 = vunpack.c.l.b16 %v593
      %v2082 = vunpack.c.l.b16 %v594
      %v2083 = vunpack.c.l.b16 %v595
      %v2084 = vunpack.c.l.b16 %v596
      %v2085 = vunpack.c.l.b16 %v597
      %v2086 = vunpack.c.l.b16 %v598
      %v2087 = vunpack.c.l.b16 %v599
      %v2088 = vunpack.c.l.b16 %v600
      %v2089 = vunpack.c.l.b16 %v601
      %v2090 = vunpack.c.l.b16 %v602
      %v2091 = vunpack.c.l.b16 %v603
      %v2092 = vunpack.c.l.b16 %v604
      %v2093 = vunpack.c.l.b16 %v605
      %v2094 = vunpack.c.l.b16 %v606
      %v2095 = vunpack.c.l.b16 %v607
      %v2096 = vunpack.c.l.b16 %v608
      %v2097 = vunpack.c.l.b16 %v609
      %v2098 = vunpack.c.l.b16 %v610
      %v2099 = vunpack.c.l.b16 %v611
      %v2100 = vunpack.c.l.b16 %v612
      %v2101 = vunpack.c.l.b16 %v613
      %v2102 = vunpack.c.l.b16 %v614
      %v2103 = vunpack.c.l.b16 %v615
      %v2104 = vunpack.c.l.b16 %v616
      %v2105 = vunpack.c.l.b16 %v617
      %v2106 = vunpack.c.l.b16 %v618
      %v2107 = vunpack.c.l.b16 %v619
      %v2108 = vunpack.c.l.b16 %v620
      %v2109 = vunpack.c.l.b16 %v621
      %v2110 = vunpack.c.l.b16 %v622
      %v2111 = vunpack.c.l.b16 %v623
      %v2112 = vunpack.c.l.b16 %v624
      %v2113 = vunpack.c.l.b16 %v625
      %v2114 = vunpack.c.l.b16 %v626
      %v2115 = vunpack.c.l.b16 %v627
      %v2116 = vunpack.c.l.b16 %v628
      %v2117 = vunpack.c.l.b16 %v629
      %v2118 = vunpack.c.l.b16 %v630
      %v2119 = vunpack.c.l.b16 %v631
      %v2120 = vunpack.c.l.b16 %v632
      %v2121 = vunpack.c.l.b16 %v633
      %v2122 = vunpack.c.l.b16 %v634
      %v2123 = vunpack.c.l.b16 %v635
      %v2124 = vunpack.c.l.b16 %v636
      %v2125 = vunpack.c.l.b16 %v637
      %v2126 = vunpack.c.l.b16 %v638
      %v2127 = vunpack.c.l.b16 %v639
      %v2128 = vunpack.c.l.b16 %v640
      %v2129 = vunpack.c.l.b16 %v641
      %v2130 = vunpack.c.l.b16 %v642
      %v2131 = vunpack.c.l.b16 %v643
      %v2132 = vunpack.c.l.b16 %v644
      %v2133 = vunpack.c.l.b16 %v645
      %v2134 = vunpack.c.l.b16 %v646
      %v2135 = vunpack.c.l.b16 %v647
      %v2136 = vunpack.c.l.b16 %v648
      %v2137 = vunpack.c.l.b16 %v649
      %v2138 = vunpack.c.l.b16 %v650
      %v2139 = vunpack.c.l.b16 %v651
      %v2140 = vunpack.c.l.b16 %v652
      %v2141 = vunpack.c.l.b16 %v653
      %v2142 = vunpack.c.l.b16 %v654
      %v2143 = vunpack.c.l.b16 %v655
      %v2144 = vunpack.c.l.b16 %v656
      %v2145 = vunpack.c.l.b16 %v657
      %v2146 = vunpack.c.l.b16 %v658
      %v2147 = vunpack.c.l.b16 %v659
      %v2148 = vunpack.c.l.b16 %v660
      %v2149 = vunpack.c.l.b16 %v661
      %v2150 = vunpack.c.l.b16 %v662
      %v2151 = vunpack.c.l.b16 %v663
      %v2152 = vunpack.c.l.b16 %v664
      %v2153 = vunpack.c.l.b16 %v665
      %v2154 = vunpack.c.l.b16 %v666
      %v2155 = vunpack.c.l.b16 %v667
      %v2156 = vunpack.c.l.b16 %v668
      %v2157 = vunpack.c.l.b16 %v669
      %v2158 = vunpack.c.l.b16 %v670
      %v2159 = vunpack.c.l.b16 %v671
      %v2160 = vunpack.c.l.b16 %v672
      %v2161 = vunpack.c.l.b16 %v673
      %v2162 = vunpack.c.l.b16 %v674
      %v2163 = vunpack.c.l.b16 %v675
      %v2164 = vunpack.c.l.b16 %v676
      %v2165 = vunpack.c.l.b16 %v677
      %v2166 = vunpack.c.l.b16 %v678
      %v2167 = vunpack.c.l.b16 %v679
      %v2168 = vunpack.c.l.b16 %v680
      %v2169 = vunpack.c.l.b16 %v681
      %v2170 = vunpack.c.l.b16 %v682
      %v2171 = vunpack.c.l.b16 %v683
      %v2172 = vunpack.c.l.b16 %v684
      %v2173 = vunpack.c.l.b16 %v685
      %v2174 = vunpack.c.l.b16 %v686
      %v2175 = vunpack.c.l.b16 %v687
      %v2176 = vunpack.c.l.b16 %v688
      %v2177 = vunpack.c.l.b16 %v689
      %v2178 = vunpack.c.l.b16 %v690
      %v2179 = vunpack.c.l.b16 %v691
      %v2180 = vunpack.c.l.b16 %v692
      %v2181 = vunpack.c.l.b16 %v693
      %v2182 = vunpack.c.l.b16 %v694
      %v2183 = vunpack.c.l.b16 %v695
      %v2184 = vunpack.c.l.b16 %v696
      %v2185 = vunpack.c.l.b16 %v697
      %v2186 = vunpack.c.l.b16 %v698
      %v2187 = vpack.c.b16 %v2068, %v2067
      %v2188 = vpack.c.b16 %v2070, %v2069
      %v2189 = vpack.c.b16 %v2072, %v2071
      %v2190 = vpack.c.b16 %v2074, %v2073
      %v2191 = vpack.c.b16 %v2076, %v2075
      %v2192 = vpack.c.b16 %v2078, %v2077
      %v2193 = vpack.c.b16 %v2080, %v2079
      %v2194 = vpack.c.b16 %v2082, %v2081
      %v2195 = vpack.c.b16 %v2084, %v2083
      %v2196 = vpack.c.b16 %v2086, %v2085
      %v2197 = vpack.c.b16 %v2088, %v2087
      %v2198 = vpack.c.b16 %v2090, %v2089
      %v2199 = vpack.c.b16 %v2092, %v2091
      %v2200 = vpack.c.b16 %v2094, %v2093
      %v2201 = vpack.c.b16 %v2096, %v2095
      %v2202 = vpack.c.b16 %v2098, %v2097
      %v2203 = vpack.c.b16 %v2100, %v2099
      %v2204 = vpack.c.b16 %v2102, %v2101
      %v2205 = vpack.c.b16 %v2104, %v2103
      %v2206 = vpack.c.b16 %v2106, %v2105
      %v2207 = vpack.c.b16 %v2108, %v2107
      %v2208 = vpack.c.b16 %v2110, %v2109
      %v2209 = vpack.c.b16 %v2112, %v2111
      %v2210 = vpack.c.b16 %v2114, %v2113
      %v2211 = vpack.c.b16 %v2116, %v2115
      %v2212 = vpack.c.b16 %v2118, %v2117
      %v2213 = vpack.c.b16 %v2120, %v2119
      %v2214 = vpack.c.b16 %v2122, %v2121
      %v2215 = vpack.c.b16 %v2124, %v2123
      %v2216 = vpack.c.b16 %v2126, %v2125
      %v2217 = vpack.c.b16 %v2128, %v2127
      %v2218 = vpack.c.b16 %v2130, %v2129
      %v2219 = vpack.c.b16 %v2132, %v2131
      %v2220 = vpack.c.b16 %v2134, %v2133
      %v2221 = vpack.c.b16 %v2136, %v2135
      %v2222 = vpack.c.b16 %v2138, %v2137
      %v2223 = vpack.c.b16 %v2140, %v2139
      %v2224 = vpack.c.b16 %v2142, %v2141
      %v2225 = vpack.c.b16 %v2144, %v2143
      %v2226 = vpack.c.b16 %v2146, %v2145
      %v2227 = vpack.c.b16 %v2148, %v2147
      %v2228 = vpack.c.b16 %v2150, %v2149
      %v2229 = vpack.c.b16 %v2152, %v2151
      %v2230 = vpack.c.b16 %v2154, %v2153
      %v2231 = vpack.c.b16 %v2156, %v2155
      %v2232 = vpack.c.b16 %v2158, %v2157
      %v2233 = vpack.c.b16 %v2160, %v2159
      %v2234 = vpack.c.b16 %v2162, %v2161
      %v2235 = vpack.c.b16 %v2164, %v2163
      %v2236 = vpack.c.b16 %v2166, %v2165
      %v2237 = vpack.c.b16 %v2168, %v2167
      %v2238 = vpack.c.b16 %v2170, %v2169
      %v2239 = vpack.c.b16 %v2172, %v2171
      %v2240 = vpack.c.b16 %v2174, %v2173
      %v2241 = vpack.c.b16 %v2176, %v2175
      %v2242 = vpack.c.b16 %v2178, %v2177
      %v2243 = vpack.c.b16 %v2180, %v2179
      %v2244 = vpack.c.b16 %v2182, %v2181
      %v2245 = vpack.c.b16 %v2184, %v2183
      %v2246 = vpack.c.b16 %v2186, %v2185
      %vm2307 = vcmask 523264
      %v2309 = vsel %vm2307, %v1474, 0
      %v2312 = vsel %vm2307, %v1482, 0
      %v2315 = vsel %vm2307, %v1490, 0
      %v2318 = vsel %vm2307, %v1498, 0
      %v2321 = vsel %vm2307, %v1506, 0
      %v2324 = vsel %vm2307, %v1514, 0
      %v2327 = vsel %vm2307, %v1522, 0
      %v2330 = vsel %vm2307, %v1530, 0
      %v2333 = vsel %vm2307, %v1538, 0
      %v2336 = vsel %vm2307, %v1546, 0
      %v2339 = vsel %vm2307, %v1554, 0
      %v2342 = vsel %vm2307, %v1562, 0
      %v2345 = vsel %vm2307, %v1570, 0
      %v2348 = vsel %vm2307, %v1578, 0
      %v2351 = vsel %vm2307, %v1586, 0
      %v2354 = vsel %vm2307, %v1594, 0
      %v2357 = vsel %vm2307, %v1602, 0
      %v2360 = vsel %vm2307, %v1610, 0
      %v2363 = vsel %vm2307, %v1618, 0
      %v2366 = vsel %vm2307, %v1626, 0
      %v2369 = vsel %vm2307, %v1634, 0
      %v2372 = vsel %vm2307, %v1642, 0
      %v2375 = vsel %vm2307, %v1650, 0
      %v2378 = vsel %vm2307, %v1658, 0
      %v2381 = vsel %vm2307, %v1666, 0
      %v2384 = vsel %vm2307, %v1674, 0
      %v2387 = vsel %vm2307, %v1682, 0
      %v2390 = vsel %vm2307, %v1690, 0
      %v2393 = vsel %vm2307, %v1698, 0
      %v2396 = vsel %vm2307, %v1706, 0
      %v2399 = vsel %vm2307, %v1714, 0
      %v2402 = vsel %vm2307, %v1722, 0
      %2404 = vmatpush.bf16.msra.mxu0 %v2194
      %2405 = vmatpush.bf16.msra.mxu0 %v2193
      %2406 = vmatpush.bf16.msra.mxu0 %v2192
      %2407 = vmatpush.bf16.msra.mxu0 %v2191
      %2408 = vmatpush.bf16.msra.mxu0 %v2190
      %2409 = vmatpush.bf16.msra.mxu0 %v2189
      %2410 = vmatpush.bf16.msra.mxu0 %v2188
      %2411 = vmatpush.bf16.msra.mxu0 %v2187
      %2412 = vmatmul.bf16.gmra.mxu0 %v1467
      %v2413 = vpop.f32.mrf.mxu0
      %v2414 = vadd.f32 0.0, %v2413
      %v2415 = vpop.f32.mrf.mxu0
      %v2416 = vadd.f32 0.0, %v2415
      %2417 = vmatmul.bf16.gmra.mxu0 %v1475
      %v2418 = vpop.f32.mrf.mxu0
      %v2419 = vadd.f32 0.0, %v2418
      %v2420 = vpop.f32.mrf.mxu0
      %v2421 = vadd.f32 0.0, %v2420
      %2422 = vmatmul.bf16.gmra.mxu0 %v1483
      %v2423 = vpop.f32.mrf.mxu0
      %v2424 = vadd.f32 0.0, %v2423
      %v2425 = vpop.f32.mrf.mxu0
      %v2426 = vadd.f32 0.0, %v2425
      %2427 = vmatmul.bf16.gmra.mxu0 %v1491
      %v2428 = vpop.f32.mrf.mxu0
      %v2429 = vadd.f32 0.0, %v2428
      %v2430 = vpop.f32.mrf.mxu0
      %v2431 = vadd.f32 0.0, %v2430
      %2432 = vmatmul.bf16.gmra.mxu0 %v1499
      %v2433 = vpop.f32.mrf.mxu0
      %v2434 = vadd.f32 0.0, %v2433
      %v2435 = vpop.f32.mrf.mxu0
      %v2436 = vadd.f32 0.0, %v2435
      %2437 = vmatmul.bf16.gmra.mxu0 %v1507
      %v2438 = vpop.f32.mrf.mxu0
      %v2439 = vadd.f32 0.0, %v2438
      %v2440 = vpop.f32.mrf.mxu0
      %v2441 = vadd.f32 0.0, %v2440
      %2442 = vmatmul.bf16.gmra.mxu0 %v1515
      %v2443 = vpop.f32.mrf.mxu0
      %v2444 = vadd.f32 0.0, %v2443
      %v2445 = vpop.f32.mrf.mxu0
      %v2446 = vadd.f32 0.0, %v2445
      %2447 = vmatmul.bf16.gmra.mxu0 %v1523
      %v2448 = vpop.f32.mrf.mxu0
      %v2449 = vadd.f32 0.0, %v2448
      %v2450 = vpop.f32.mrf.mxu0
      %v2451 = vadd.f32 0.0, %v2450
      %2452 = vmatmul.bf16.gmra.mxu0 %v1531
      %v2453 = vpop.f32.mrf.mxu0
      %v2454 = vadd.f32 0.0, %v2453
      %v2455 = vpop.f32.mrf.mxu0
      %v2456 = vadd.f32 0.0, %v2455
      %2457 = vmatmul.bf16.gmra.mxu0 %v1539
      %v2458 = vpop.f32.mrf.mxu0
      %v2459 = vadd.f32 0.0, %v2458
      %v2460 = vpop.f32.mrf.mxu0
      %v2461 = vadd.f32 0.0, %v2460
      %2462 = vmatmul.bf16.gmra.mxu0 %v1547
      %v2463 = vpop.f32.mrf.mxu0
      %v2464 = vadd.f32 0.0, %v2463
      %v2465 = vpop.f32.mrf.mxu0
      %v2466 = vadd.f32 0.0, %v2465
      %2467 = vmatmul.bf16.gmra.mxu0 %v1555
      %v2468 = vpop.f32.mrf.mxu0
      %v2469 = vadd.f32 0.0, %v2468
      %v2470 = vpop.f32.mrf.mxu0
      %v2471 = vadd.f32 0.0, %v2470
      %2472 = vmatmul.bf16.gmra.mxu0 %v1563
      %v2473 = vpop.f32.mrf.mxu0
      %v2474 = vadd.f32 0.0, %v2473
      %v2475 = vpop.f32.mrf.mxu0
      %v2476 = vadd.f32 0.0, %v2475
      %2477 = vmatmul.bf16.gmra.mxu0 %v1571
      %v2478 = vpop.f32.mrf.mxu0
      %v2479 = vadd.f32 0.0, %v2478
      %v2480 = vpop.f32.mrf.mxu0
      %v2481 = vadd.f32 0.0, %v2480
      %2482 = vmatmul.bf16.gmra.mxu0 %v1579
      %v2483 = vpop.f32.mrf.mxu0
      %v2484 = vadd.f32 0.0, %v2483
      %v2485 = vpop.f32.mrf.mxu0
      %v2486 = vadd.f32 0.0, %v2485
      %2487 = vmatmul.bf16.gmra.mxu0 %v1587
      %v2488 = vpop.f32.mrf.mxu0
      %v2489 = vadd.f32 0.0, %v2488
      %v2490 = vpop.f32.mrf.mxu0
      %v2491 = vadd.f32 0.0, %v2490
      %2492 = vmatmul.bf16.gmra.mxu0 %v1595
      %v2493 = vpop.f32.mrf.mxu0
      %v2494 = vadd.f32 0.0, %v2493
      %v2495 = vpop.f32.mrf.mxu0
      %v2496 = vadd.f32 0.0, %v2495
      %2497 = vmatmul.bf16.gmra.mxu0 %v1603
      %v2498 = vpop.f32.mrf.mxu0
      %v2499 = vadd.f32 0.0, %v2498
      %v2500 = vpop.f32.mrf.mxu0
      %v2501 = vadd.f32 0.0, %v2500
      %2502 = vmatmul.bf16.gmra.mxu0 %v1611
      %v2503 = vpop.f32.mrf.mxu0
      %v2504 = vadd.f32 0.0, %v2503
      %v2505 = vpop.f32.mrf.mxu0
      %v2506 = vadd.f32 0.0, %v2505
      %2507 = vmatmul.bf16.gmra.mxu0 %v1619
      %v2508 = vpop.f32.mrf.mxu0
      %v2509 = vadd.f32 0.0, %v2508
      %v2510 = vpop.f32.mrf.mxu0
      %v2511 = vadd.f32 0.0, %v2510
      %2512 = vmatmul.bf16.gmra.mxu0 %v1627
      %v2513 = vpop.f32.mrf.mxu0
      %v2514 = vadd.f32 0.0, %v2513
      %v2515 = vpop.f32.mrf.mxu0
      %v2516 = vadd.f32 0.0, %v2515
      %2517 = vmatmul.bf16.gmra.mxu0 %v1635
      %v2518 = vpop.f32.mrf.mxu0
      %v2519 = vadd.f32 0.0, %v2518
      %v2520 = vpop.f32.mrf.mxu0
      %v2521 = vadd.f32 0.0, %v2520
      %2522 = vmatmul.bf16.gmra.mxu0 %v1643
      %v2523 = vpop.f32.mrf.mxu0
      %v2524 = vadd.f32 0.0, %v2523
      %v2525 = vpop.f32.mrf.mxu0
      %v2526 = vadd.f32 0.0, %v2525
      %2527 = vmatmul.bf16.gmra.mxu0 %v1651
      %v2528 = vpop.f32.mrf.mxu0
      %v2529 = vadd.f32 0.0, %v2528
      %v2530 = vpop.f32.mrf.mxu0
      %v2531 = vadd.f32 0.0, %v2530
      %2532 = vmatmul.bf16.gmra.mxu0 %v1659
      %v2533 = vpop.f32.mrf.mxu0
      %v2534 = vadd.f32 0.0, %v2533
      %v2535 = vpop.f32.mrf.mxu0
      %v2536 = vadd.f32 0.0, %v2535
      %2537 = vmatmul.bf16.gmra.mxu0 %v1667
      %v2538 = vpop.f32.mrf.mxu0
      %v2539 = vadd.f32 0.0, %v2538
      %v2540 = vpop.f32.mrf.mxu0
      %v2541 = vadd.f32 0.0, %v2540
      %2542 = vmatmul.bf16.gmra.mxu0 %v1675
      %v2543 = vpop.f32.mrf.mxu0
      %v2544 = vadd.f32 0.0, %v2543
      %v2545 = vpop.f32.mrf.mxu0
      %v2546 = vadd.f32 0.0, %v2545
      %2547 = vmatmul.bf16.gmra.mxu0 %v1683
      %v2548 = vpop.f32.mrf.mxu0
      %v2549 = vadd.f32 0.0, %v2548
      %v2550 = vpop.f32.mrf.mxu0
      %v2551 = vadd.f32 0.0, %v2550
      %2552 = vmatmul.bf16.gmra.mxu0 %v1691
      %v2553 = vpop.f32.mrf.mxu0
      %v2554 = vadd.f32 0.0, %v2553
      %v2555 = vpop.f32.mrf.mxu0
      %v2556 = vadd.f32 0.0, %v2555
      %2557 = vmatmul.bf16.gmra.mxu0 %v1699
      %v2558 = vpop.f32.mrf.mxu0
      %v2559 = vadd.f32 0.0, %v2558
      %v2560 = vpop.f32.mrf.mxu0
      %v2561 = vadd.f32 0.0, %v2560
      %2562 = vmatmul.bf16.gmra.mxu0 %v1707
      %v2563 = vpop.f32.mrf.mxu0
      %v2564 = vadd.f32 0.0, %v2563
      %v2565 = vpop.f32.mrf.mxu0
      %v2566 = vadd.f32 0.0, %v2565
      %2567 = vmatmul.bf16.gmra.mxu0 %v1715
      %v2568 = vpop.f32.mrf.mxu0
      %v2569 = vadd.f32 0.0, %v2568
      %v2570 = vpop.f32.mrf.mxu0
      %v2571 = vadd.f32 0.0, %v2570
      %2572 = vdwg.mxu0
      %2573 = vmatpush.bf16.msra.mxu0 %v2202
      %2574 = vmatpush.bf16.msra.mxu0 %v2201
      %2575 = vmatpush.bf16.msra.mxu0 %v2200
      %2576 = vmatpush.bf16.msra.mxu0 %v2199
      %2577 = vmatpush.bf16.msra.mxu0 %v2198
      %2578 = vmatpush.bf16.msra.mxu0 %v2197
      %2579 = vmatpush.bf16.msra.mxu0 %v2196
      %2580 = vmatpush.bf16.msra.mxu0 %v2195
      %2581 = vmatmul.bf16.gmra.mxu0 %v1468
      %v2582 = vpop.f32.mrf.mxu0
      %v2583 = vadd.f32 %v2414, %v2582
      %v2584 = vpop.f32.mrf.mxu0
      %v2585 = vadd.f32 %v2416, %v2584
      %2586 = vmatmul.bf16.gmra.mxu0 %v1476
      %v2587 = vpop.f32.mrf.mxu0
      %v2588 = vadd.f32 %v2419, %v2587
      %v2589 = vpop.f32.mrf.mxu0
      %v2590 = vadd.f32 %v2421, %v2589
      %2591 = vmatmul.bf16.gmra.mxu0 %v1484
      %v2592 = vpop.f32.mrf.mxu0
      %v2593 = vadd.f32 %v2424, %v2592
      %v2594 = vpop.f32.mrf.mxu0
      %v2595 = vadd.f32 %v2426, %v2594
      %2596 = vmatmul.bf16.gmra.mxu0 %v1492
      %v2597 = vpop.f32.mrf.mxu0
      %v2598 = vadd.f32 %v2429, %v2597
      %v2599 = vpop.f32.mrf.mxu0
      %v2600 = vadd.f32 %v2431, %v2599
      %2601 = vmatmul.bf16.gmra.mxu0 %v1500
      %v2602 = vpop.f32.mrf.mxu0
      %v2603 = vadd.f32 %v2434, %v2602
      %v2604 = vpop.f32.mrf.mxu0
      %v2605 = vadd.f32 %v2436, %v2604
      %2606 = vmatmul.bf16.gmra.mxu0 %v1508
      %v2607 = vpop.f32.mrf.mxu0
      %v2608 = vadd.f32 %v2439, %v2607
      %v2609 = vpop.f32.mrf.mxu0
      %v2610 = vadd.f32 %v2441, %v2609
      %2611 = vmatmul.bf16.gmra.mxu0 %v1516
      %v2612 = vpop.f32.mrf.mxu0
      %v2613 = vadd.f32 %v2444, %v2612
      %v2614 = vpop.f32.mrf.mxu0
      %v2615 = vadd.f32 %v2446, %v2614
      %2616 = vmatmul.bf16.gmra.mxu0 %v1524
      %v2617 = vpop.f32.mrf.mxu0
      %v2618 = vadd.f32 %v2449, %v2617
      %v2619 = vpop.f32.mrf.mxu0
      %v2620 = vadd.f32 %v2451, %v2619
      %2621 = vmatmul.bf16.gmra.mxu0 %v1532
      %v2622 = vpop.f32.mrf.mxu0
      %v2623 = vadd.f32 %v2454, %v2622
      %v2624 = vpop.f32.mrf.mxu0
      %v2625 = vadd.f32 %v2456, %v2624
      %2626 = vmatmul.bf16.gmra.mxu0 %v1540
      %v2627 = vpop.f32.mrf.mxu0
      %v2628 = vadd.f32 %v2459, %v2627
      %v2629 = vpop.f32.mrf.mxu0
      %v2630 = vadd.f32 %v2461, %v2629
      %2631 = vmatmul.bf16.gmra.mxu0 %v1548
      %v2632 = vpop.f32.mrf.mxu0
      %v2633 = vadd.f32 %v2464, %v2632
      %v2634 = vpop.f32.mrf.mxu0
      %v2635 = vadd.f32 %v2466, %v2634
      %2636 = vmatmul.bf16.gmra.mxu0 %v1556
      %v2637 = vpop.f32.mrf.mxu0
      %v2638 = vadd.f32 %v2469, %v2637
      %v2639 = vpop.f32.mrf.mxu0
      %v2640 = vadd.f32 %v2471, %v2639
      %2641 = vmatmul.bf16.gmra.mxu0 %v1564
      %v2642 = vpop.f32.mrf.mxu0
      %v2643 = vadd.f32 %v2474, %v2642
      %v2644 = vpop.f32.mrf.mxu0
      %v2645 = vadd.f32 %v2476, %v2644
      %2646 = vmatmul.bf16.gmra.mxu0 %v1572
      %v2647 = vpop.f32.mrf.mxu0
      %v2648 = vadd.f32 %v2479, %v2647
      %v2649 = vpop.f32.mrf.mxu0
      %v2650 = vadd.f32 %v2481, %v2649
      %2651 = vmatmul.bf16.gmra.mxu0 %v1580
      %v2652 = vpop.f32.mrf.mxu0
      %v2653 = vadd.f32 %v2484, %v2652
      %v2654 = vpop.f32.mrf.mxu0
      %v2655 = vadd.f32 %v2486, %v2654
      %2656 = vmatmul.bf16.gmra.mxu0 %v1588
      %v2657 = vpop.f32.mrf.mxu0
      %v2658 = vadd.f32 %v2489, %v2657
      %v2659 = vpop.f32.mrf.mxu0
      %v2660 = vadd.f32 %v2491, %v2659
      %2661 = vmatmul.bf16.gmra.mxu0 %v1596
      %v2662 = vpop.f32.mrf.mxu0
      %v2663 = vadd.f32 %v2494, %v2662
      %v2664 = vpop.f32.mrf.mxu0
      %v2665 = vadd.f32 %v2496, %v2664
      %2666 = vmatmul.bf16.gmra.mxu0 %v1604
      %v2667 = vpop.f32.mrf.mxu0
      %v2668 = vadd.f32 %v2499, %v2667
      %v2669 = vpop.f32.mrf.mxu0
      %v2670 = vadd.f32 %v2501, %v2669
      %2671 = vmatmul.bf16.gmra.mxu0 %v1612
      %v2672 = vpop.f32.mrf.mxu0
      %v2673 = vadd.f32 %v2504, %v2672
      %v2674 = vpop.f32.mrf.mxu0
      %v2675 = vadd.f32 %v2506, %v2674
      %2676 = vmatmul.bf16.gmra.mxu0 %v1620
      %v2677 = vpop.f32.mrf.mxu0
      %v2678 = vadd.f32 %v2509, %v2677
      %v2679 = vpop.f32.mrf.mxu0
      %v2680 = vadd.f32 %v2511, %v2679
      %2681 = vmatmul.bf16.gmra.mxu0 %v1628
      %v2682 = vpop.f32.mrf.mxu0
      %v2683 = vadd.f32 %v2514, %v2682
      %v2684 = vpop.f32.mrf.mxu0
      %v2685 = vadd.f32 %v2516, %v2684
      %2686 = vmatmul.bf16.gmra.mxu0 %v1636
      %v2687 = vpop.f32.mrf.mxu0
      %v2688 = vadd.f32 %v2519, %v2687
      %v2689 = vpop.f32.mrf.mxu0
      %v2690 = vadd.f32 %v2521, %v2689
      %2691 = vmatmul.bf16.gmra.mxu0 %v1644
      %v2692 = vpop.f32.mrf.mxu0
      %v2693 = vadd.f32 %v2524, %v2692
      %v2694 = vpop.f32.mrf.mxu0
      %v2695 = vadd.f32 %v2526, %v2694
      %2696 = vmatmul.bf16.gmra.mxu0 %v1652
      %v2697 = vpop.f32.mrf.mxu0
      %v2698 = vadd.f32 %v2529, %v2697
      %v2699 = vpop.f32.mrf.mxu0
      %v2700 = vadd.f32 %v2531, %v2699
      %2701 = vmatmul.bf16.gmra.mxu0 %v1660
      %v2702 = vpop.f32.mrf.mxu0
      %v2703 = vadd.f32 %v2534, %v2702
      %v2704 = vpop.f32.mrf.mxu0
      %v2705 = vadd.f32 %v2536, %v2704
      %2706 = vmatmul.bf16.gmra.mxu0 %v1668
      %v2707 = vpop.f32.mrf.mxu0
      %v2708 = vadd.f32 %v2539, %v2707
      %v2709 = vpop.f32.mrf.mxu0
      %v2710 = vadd.f32 %v2541, %v2709
      %2711 = vmatmul.bf16.gmra.mxu0 %v1676
      %v2712 = vpop.f32.mrf.mxu0
      %v2713 = vadd.f32 %v2544, %v2712
      %v2714 = vpop.f32.mrf.mxu0
      %v2715 = vadd.f32 %v2546, %v2714
      %2716 = vmatmul.bf16.gmra.mxu0 %v1684
      %v2717 = vpop.f32.mrf.mxu0
      %v2718 = vadd.f32 %v2549, %v2717
      %v2719 = vpop.f32.mrf.mxu0
      %v2720 = vadd.f32 %v2551, %v2719
      %2721 = vmatmul.bf16.gmra.mxu0 %v1692
      %v2722 = vpop.f32.mrf.mxu0
      %v2723 = vadd.f32 %v2554, %v2722
      %v2724 = vpop.f32.mrf.mxu0
      %v2725 = vadd.f32 %v2556, %v2724
      %2726 = vmatmul.bf16.gmra.mxu0 %v1700
      %v2727 = vpop.f32.mrf.mxu0
      %v2728 = vadd.f32 %v2559, %v2727
      %v2729 = vpop.f32.mrf.mxu0
      %v2730 = vadd.f32 %v2561, %v2729
      %2731 = vmatmul.bf16.gmra.mxu0 %v1708
      %v2732 = vpop.f32.mrf.mxu0
      %v2733 = vadd.f32 %v2564, %v2732
      %v2734 = vpop.f32.mrf.mxu0
      %v2735 = vadd.f32 %v2566, %v2734
      %2736 = vmatmul.bf16.gmra.mxu0 %v1716
      %v2737 = vpop.f32.mrf.mxu0
      %v2738 = vadd.f32 %v2569, %v2737
      %v2739 = vpop.f32.mrf.mxu0
      %v2740 = vadd.f32 %v2571, %v2739
      %2741 = vdwg.mxu0
      %2742 = vmatpush.bf16.msra.mxu0 %v2210
      %2743 = vmatpush.bf16.msra.mxu0 %v2209
      %2744 = vmatpush.bf16.msra.mxu0 %v2208
      %2745 = vmatpush.bf16.msra.mxu0 %v2207
      %2746 = vmatpush.bf16.msra.mxu0 %v2206
      %2747 = vmatpush.bf16.msra.mxu0 %v2205
      %2748 = vmatpush.bf16.msra.mxu0 %v2204
      %2749 = vmatpush.bf16.msra.mxu0 %v2203
      %2750 = vmatmul.bf16.gmra.mxu0 %v1469
      %v2751 = vpop.f32.mrf.mxu0
      %v2752 = vadd.f32 %v2583, %v2751
      %v2753 = vpop.f32.mrf.mxu0
      %v2754 = vadd.f32 %v2585, %v2753
      %2755 = vmatmul.bf16.gmra.mxu0 %v1477
      %v2756 = vpop.f32.mrf.mxu0
      %v2757 = vadd.f32 %v2588, %v2756
      %v2758 = vpop.f32.mrf.mxu0
      %v2759 = vadd.f32 %v2590, %v2758
      %2760 = vmatmul.bf16.gmra.mxu0 %v1485
      %v2761 = vpop.f32.mrf.mxu0
      %v2762 = vadd.f32 %v2593, %v2761
      %v2763 = vpop.f32.mrf.mxu0
      %v2764 = vadd.f32 %v2595, %v2763
      %2765 = vmatmul.bf16.gmra.mxu0 %v1493
      %v2766 = vpop.f32.mrf.mxu0
      %v2767 = vadd.f32 %v2598, %v2766
      %v2768 = vpop.f32.mrf.mxu0
      %v2769 = vadd.f32 %v2600, %v2768
      %2770 = vmatmul.bf16.gmra.mxu0 %v1501
      %v2771 = vpop.f32.mrf.mxu0
      %v2772 = vadd.f32 %v2603, %v2771
      %v2773 = vpop.f32.mrf.mxu0
      %v2774 = vadd.f32 %v2605, %v2773
      %2775 = vmatmul.bf16.gmra.mxu0 %v1509
      %v2776 = vpop.f32.mrf.mxu0
      %v2777 = vadd.f32 %v2608, %v2776
      %v2778 = vpop.f32.mrf.mxu0
      %v2779 = vadd.f32 %v2610, %v2778
      %2780 = vmatmul.bf16.gmra.mxu0 %v1517
      %v2781 = vpop.f32.mrf.mxu0
      %v2782 = vadd.f32 %v2613, %v2781
      %v2783 = vpop.f32.mrf.mxu0
      %v2784 = vadd.f32 %v2615, %v2783
      %2785 = vmatmul.bf16.gmra.mxu0 %v1525
      %v2786 = vpop.f32.mrf.mxu0
      %v2787 = vadd.f32 %v2618, %v2786
      %v2788 = vpop.f32.mrf.mxu0
      %v2789 = vadd.f32 %v2620, %v2788
      %2790 = vmatmul.bf16.gmra.mxu0 %v1533
      %v2791 = vpop.f32.mrf.mxu0
      %v2792 = vadd.f32 %v2623, %v2791
      %v2793 = vpop.f32.mrf.mxu0
      %v2794 = vadd.f32 %v2625, %v2793
      %2795 = vmatmul.bf16.gmra.mxu0 %v1541
      %v2796 = vpop.f32.mrf.mxu0
      %v2797 = vadd.f32 %v2628, %v2796
      %v2798 = vpop.f32.mrf.mxu0
      %v2799 = vadd.f32 %v2630, %v2798
      %2800 = vmatmul.bf16.gmra.mxu0 %v1549
      %v2801 = vpop.f32.mrf.mxu0
      %v2802 = vadd.f32 %v2633, %v2801
      %v2803 = vpop.f32.mrf.mxu0
      %v2804 = vadd.f32 %v2635, %v2803
      %2805 = vmatmul.bf16.gmra.mxu0 %v1557
      %v2806 = vpop.f32.mrf.mxu0
      %v2807 = vadd.f32 %v2638, %v2806
      %v2808 = vpop.f32.mrf.mxu0
      %v2809 = vadd.f32 %v2640, %v2808
      %2810 = vmatmul.bf16.gmra.mxu0 %v1565
      %v2811 = vpop.f32.mrf.mxu0
      %v2812 = vadd.f32 %v2643, %v2811
      %v2813 = vpop.f32.mrf.mxu0
      %v2814 = vadd.f32 %v2645, %v2813
      %2815 = vmatmul.bf16.gmra.mxu0 %v1573
      %v2816 = vpop.f32.mrf.mxu0
      %v2817 = vadd.f32 %v2648, %v2816
      %v2818 = vpop.f32.mrf.mxu0
      %v2819 = vadd.f32 %v2650, %v2818
      %2820 = vmatmul.bf16.gmra.mxu0 %v1581
      %v2821 = vpop.f32.mrf.mxu0
      %v2822 = vadd.f32 %v2653, %v2821
      %v2823 = vpop.f32.mrf.mxu0
      %v2824 = vadd.f32 %v2655, %v2823
      %2825 = vmatmul.bf16.gmra.mxu0 %v1589
      %v2826 = vpop.f32.mrf.mxu0
      %v2827 = vadd.f32 %v2658, %v2826
      %v2828 = vpop.f32.mrf.mxu0
      %v2829 = vadd.f32 %v2660, %v2828
      %2830 = vmatmul.bf16.gmra.mxu0 %v1597
      %v2831 = vpop.f32.mrf.mxu0
      %v2832 = vadd.f32 %v2663, %v2831
      %v2833 = vpop.f32.mrf.mxu0
      %v2834 = vadd.f32 %v2665, %v2833
      %2835 = vmatmul.bf16.gmra.mxu0 %v1605
      %v2836 = vpop.f32.mrf.mxu0
      %v2837 = vadd.f32 %v2668, %v2836
      %v2838 = vpop.f32.mrf.mxu0
      %v2839 = vadd.f32 %v2670, %v2838
      %2840 = vmatmul.bf16.gmra.mxu0 %v1613
      %v2841 = vpop.f32.mrf.mxu0
      %v2842 = vadd.f32 %v2673, %v2841
      %v2843 = vpop.f32.mrf.mxu0
      %v2844 = vadd.f32 %v2675, %v2843
      %2845 = vmatmul.bf16.gmra.mxu0 %v1621
      %v2846 = vpop.f32.mrf.mxu0
      %v2847 = vadd.f32 %v2678, %v2846
      %v2848 = vpop.f32.mrf.mxu0
      %v2849 = vadd.f32 %v2680, %v2848
      %2850 = vmatmul.bf16.gmra.mxu0 %v1629
      %v2851 = vpop.f32.mrf.mxu0
      %v2852 = vadd.f32 %v2683, %v2851
      %v2853 = vpop.f32.mrf.mxu0
      %v2854 = vadd.f32 %v2685, %v2853
      %2855 = vmatmul.bf16.gmra.mxu0 %v1637
      %v2856 = vpop.f32.mrf.mxu0
      %v2857 = vadd.f32 %v2688, %v2856
      %v2858 = vpop.f32.mrf.mxu0
      %v2859 = vadd.f32 %v2690, %v2858
      %2860 = vmatmul.bf16.gmra.mxu0 %v1645
      %v2861 = vpop.f32.mrf.mxu0
      %v2862 = vadd.f32 %v2693, %v2861
      %v2863 = vpop.f32.mrf.mxu0
      %v2864 = vadd.f32 %v2695, %v2863
      %2865 = vmatmul.bf16.gmra.mxu0 %v1653
      %v2866 = vpop.f32.mrf.mxu0
      %v2867 = vadd.f32 %v2698, %v2866
      %v2868 = vpop.f32.mrf.mxu0
      %v2869 = vadd.f32 %v2700, %v2868
      %2870 = vmatmul.bf16.gmra.mxu0 %v1661
      %v2871 = vpop.f32.mrf.mxu0
      %v2872 = vadd.f32 %v2703, %v2871
      %v2873 = vpop.f32.mrf.mxu0
      %v2874 = vadd.f32 %v2705, %v2873
      %2875 = vmatmul.bf16.gmra.mxu0 %v1669
      %v2876 = vpop.f32.mrf.mxu0
      %v2877 = vadd.f32 %v2708, %v2876
      %v2878 = vpop.f32.mrf.mxu0
      %v2879 = vadd.f32 %v2710, %v2878
      %2880 = vmatmul.bf16.gmra.mxu0 %v1677
      %v2881 = vpop.f32.mrf.mxu0
      %v2882 = vadd.f32 %v2713, %v2881
      %v2883 = vpop.f32.mrf.mxu0
      %v2884 = vadd.f32 %v2715, %v2883
      %2885 = vmatmul.bf16.gmra.mxu0 %v1685
      %v2886 = vpop.f32.mrf.mxu0
      %v2887 = vadd.f32 %v2718, %v2886
      %v2888 = vpop.f32.mrf.mxu0
      %v2889 = vadd.f32 %v2720, %v2888
      %2890 = vmatmul.bf16.gmra.mxu0 %v1693
      %v2891 = vpop.f32.mrf.mxu0
      %v2892 = vadd.f32 %v2723, %v2891
      %v2893 = vpop.f32.mrf.mxu0
      %v2894 = vadd.f32 %v2725, %v2893
      %2895 = vmatmul.bf16.gmra.mxu0 %v1701
      %v2896 = vpop.f32.mrf.mxu0
      %v2897 = vadd.f32 %v2728, %v2896
      %v2898 = vpop.f32.mrf.mxu0
      %v2899 = vadd.f32 %v2730, %v2898
      %2900 = vmatmul.bf16.gmra.mxu0 %v1709
      %v2901 = vpop.f32.mrf.mxu0
      %v2902 = vadd.f32 %v2733, %v2901
      %v2903 = vpop.f32.mrf.mxu0
      %v2904 = vadd.f32 %v2735, %v2903
      %2905 = vmatmul.bf16.gmra.mxu0 %v1717
      %v2906 = vpop.f32.mrf.mxu0
      %v2907 = vadd.f32 %v2738, %v2906
      %v2908 = vpop.f32.mrf.mxu0
      %v2909 = vadd.f32 %v2740, %v2908
      %2910 = vdwg.mxu0
      %2911 = vmatpush.bf16.msra.mxu0 %v2218
      %2912 = vmatpush.bf16.msra.mxu0 %v2217
      %2913 = vmatpush.bf16.msra.mxu0 %v2216
      %2914 = vmatpush.bf16.msra.mxu0 %v2215
      %2915 = vmatpush.bf16.msra.mxu0 %v2214
      %2916 = vmatpush.bf16.msra.mxu0 %v2213
      %2917 = vmatpush.bf16.msra.mxu0 %v2212
      %2918 = vmatpush.bf16.msra.mxu0 %v2211
      %2919 = vmatmul.bf16.gmra.mxu0 %v1470
      %v2920 = vpop.f32.mrf.mxu0
      %v2921 = vadd.f32 %v2752, %v2920
      %v2922 = vpop.f32.mrf.mxu0
      %v2923 = vadd.f32 %v2754, %v2922
      %2924 = vmatmul.bf16.gmra.mxu0 %v1478
      %v2925 = vpop.f32.mrf.mxu0
      %v2926 = vadd.f32 %v2757, %v2925
      %v2927 = vpop.f32.mrf.mxu0
      %v2928 = vadd.f32 %v2759, %v2927
      %2929 = vmatmul.bf16.gmra.mxu0 %v1486
      %v2930 = vpop.f32.mrf.mxu0
      %v2931 = vadd.f32 %v2762, %v2930
      %v2932 = vpop.f32.mrf.mxu0
      %v2933 = vadd.f32 %v2764, %v2932
      %2934 = vmatmul.bf16.gmra.mxu0 %v1494
      %v2935 = vpop.f32.mrf.mxu0
      %v2936 = vadd.f32 %v2767, %v2935
      %v2937 = vpop.f32.mrf.mxu0
      %v2938 = vadd.f32 %v2769, %v2937
      %2939 = vmatmul.bf16.gmra.mxu0 %v1502
      %v2940 = vpop.f32.mrf.mxu0
      %v2941 = vadd.f32 %v2772, %v2940
      %v2942 = vpop.f32.mrf.mxu0
      %v2943 = vadd.f32 %v2774, %v2942
      %2944 = vmatmul.bf16.gmra.mxu0 %v1510
      %v2945 = vpop.f32.mrf.mxu0
      %v2946 = vadd.f32 %v2777, %v2945
      %v2947 = vpop.f32.mrf.mxu0
      %v2948 = vadd.f32 %v2779, %v2947
      %2949 = vmatmul.bf16.gmra.mxu0 %v1518
      %v2950 = vpop.f32.mrf.mxu0
      %v2951 = vadd.f32 %v2782, %v2950
      %v2952 = vpop.f32.mrf.mxu0
      %v2953 = vadd.f32 %v2784, %v2952
      %2954 = vmatmul.bf16.gmra.mxu0 %v1526
      %v2955 = vpop.f32.mrf.mxu0
      %v2956 = vadd.f32 %v2787, %v2955
      %v2957 = vpop.f32.mrf.mxu0
      %v2958 = vadd.f32 %v2789, %v2957
      %2959 = vmatmul.bf16.gmra.mxu0 %v1534
      %v2960 = vpop.f32.mrf.mxu0
      %v2961 = vadd.f32 %v2792, %v2960
      %v2962 = vpop.f32.mrf.mxu0
      %v2963 = vadd.f32 %v2794, %v2962
      %2964 = vmatmul.bf16.gmra.mxu0 %v1542
      %v2965 = vpop.f32.mrf.mxu0
      %v2966 = vadd.f32 %v2797, %v2965
      %v2967 = vpop.f32.mrf.mxu0
      %v2968 = vadd.f32 %v2799, %v2967
      %2969 = vmatmul.bf16.gmra.mxu0 %v1550
      %v2970 = vpop.f32.mrf.mxu0
      %v2971 = vadd.f32 %v2802, %v2970
      %v2972 = vpop.f32.mrf.mxu0
      %v2973 = vadd.f32 %v2804, %v2972
      %2974 = vmatmul.bf16.gmra.mxu0 %v1558
      %v2975 = vpop.f32.mrf.mxu0
      %v2976 = vadd.f32 %v2807, %v2975
      %v2977 = vpop.f32.mrf.mxu0
      %v2978 = vadd.f32 %v2809, %v2977
      %2979 = vmatmul.bf16.gmra.mxu0 %v1566
      %v2980 = vpop.f32.mrf.mxu0
      %v2981 = vadd.f32 %v2812, %v2980
      %v2982 = vpop.f32.mrf.mxu0
      %v2983 = vadd.f32 %v2814, %v2982
      %2984 = vmatmul.bf16.gmra.mxu0 %v1574
      %v2985 = vpop.f32.mrf.mxu0
      %v2986 = vadd.f32 %v2817, %v2985
      %v2987 = vpop.f32.mrf.mxu0
      %v2988 = vadd.f32 %v2819, %v2987
      %2989 = vmatmul.bf16.gmra.mxu0 %v1582
      %v2990 = vpop.f32.mrf.mxu0
      %v2991 = vadd.f32 %v2822, %v2990
      %v2992 = vpop.f32.mrf.mxu0
      %v2993 = vadd.f32 %v2824, %v2992
      %2994 = vmatmul.bf16.gmra.mxu0 %v1590
      %v2995 = vpop.f32.mrf.mxu0
      %v2996 = vadd.f32 %v2827, %v2995
      %v2997 = vpop.f32.mrf.mxu0
      %v2998 = vadd.f32 %v2829, %v2997
      %2999 = vmatmul.bf16.gmra.mxu0 %v1598
      %v3000 = vpop.f32.mrf.mxu0
      %v3001 = vadd.f32 %v2832, %v3000
      %v3002 = vpop.f32.mrf.mxu0
      %v3003 = vadd.f32 %v2834, %v3002
      %3004 = vmatmul.bf16.gmra.mxu0 %v1606
      %v3005 = vpop.f32.mrf.mxu0
      %v3006 = vadd.f32 %v2837, %v3005
      %v3007 = vpop.f32.mrf.mxu0
      %v3008 = vadd.f32 %v2839, %v3007
      %3009 = vmatmul.bf16.gmra.mxu0 %v1614
      %v3010 = vpop.f32.mrf.mxu0
      %v3011 = vadd.f32 %v2842, %v3010
      %v3012 = vpop.f32.mrf.mxu0
      %v3013 = vadd.f32 %v2844, %v3012
      %3014 = vmatmul.bf16.gmra.mxu0 %v1622
      %v3015 = vpop.f32.mrf.mxu0
      %v3016 = vadd.f32 %v2847, %v3015
      %v3017 = vpop.f32.mrf.mxu0
      %v3018 = vadd.f32 %v2849, %v3017
      %3019 = vmatmul.bf16.gmra.mxu0 %v1630
      %v3020 = vpop.f32.mrf.mxu0
      %v3021 = vadd.f32 %v2852, %v3020
      %v3022 = vpop.f32.mrf.mxu0
      %v3023 = vadd.f32 %v2854, %v3022
      %3024 = vmatmul.bf16.gmra.mxu0 %v1638
      %v3025 = vpop.f32.mrf.mxu0
      %v3026 = vadd.f32 %v2857, %v3025
      %v3027 = vpop.f32.mrf.mxu0
      %v3028 = vadd.f32 %v2859, %v3027
      %3029 = vmatmul.bf16.gmra.mxu0 %v1646
      %v3030 = vpop.f32.mrf.mxu0
      %v3031 = vadd.f32 %v2862, %v3030
      %v3032 = vpop.f32.mrf.mxu0
      %v3033 = vadd.f32 %v2864, %v3032
      %3034 = vmatmul.bf16.gmra.mxu0 %v1654
      %v3035 = vpop.f32.mrf.mxu0
      %v3036 = vadd.f32 %v2867, %v3035
      %v3037 = vpop.f32.mrf.mxu0
      %v3038 = vadd.f32 %v2869, %v3037
      %3039 = vmatmul.bf16.gmra.mxu0 %v1662
      %v3040 = vpop.f32.mrf.mxu0
      %v3041 = vadd.f32 %v2872, %v3040
      %v3042 = vpop.f32.mrf.mxu0
      %v3043 = vadd.f32 %v2874, %v3042
      %3044 = vmatmul.bf16.gmra.mxu0 %v1670
      %v3045 = vpop.f32.mrf.mxu0
      %v3046 = vadd.f32 %v2877, %v3045
      %v3047 = vpop.f32.mrf.mxu0
      %v3048 = vadd.f32 %v2879, %v3047
      %3049 = vmatmul.bf16.gmra.mxu0 %v1678
      %v3050 = vpop.f32.mrf.mxu0
      %v3051 = vadd.f32 %v2882, %v3050
      %v3052 = vpop.f32.mrf.mxu0
      %v3053 = vadd.f32 %v2884, %v3052
      %3054 = vmatmul.bf16.gmra.mxu0 %v1686
      %v3055 = vpop.f32.mrf.mxu0
      %v3056 = vadd.f32 %v2887, %v3055
      %v3057 = vpop.f32.mrf.mxu0
      %v3058 = vadd.f32 %v2889, %v3057
      %3059 = vmatmul.bf16.gmra.mxu0 %v1694
      %v3060 = vpop.f32.mrf.mxu0
      %v3061 = vadd.f32 %v2892, %v3060
      %v3062 = vpop.f32.mrf.mxu0
      %v3063 = vadd.f32 %v2894, %v3062
      %3064 = vmatmul.bf16.gmra.mxu0 %v1702
      %v3065 = vpop.f32.mrf.mxu0
      %v3066 = vadd.f32 %v2897, %v3065
      %v3067 = vpop.f32.mrf.mxu0
      %v3068 = vadd.f32 %v2899, %v3067
      %3069 = vmatmul.bf16.gmra.mxu0 %v1710
      %v3070 = vpop.f32.mrf.mxu0
      %v3071 = vadd.f32 %v2902, %v3070
      %v3072 = vpop.f32.mrf.mxu0
      %v3073 = vadd.f32 %v2904, %v3072
      %3074 = vmatmul.bf16.gmra.mxu0 %v1718
      %v3075 = vpop.f32.mrf.mxu0
      %v3076 = vadd.f32 %v2907, %v3075
      %v3077 = vpop.f32.mrf.mxu0
      %v3078 = vadd.f32 %v2909, %v3077
      %3079 = vdwg.mxu0
      %3080 = vmatpush.bf16.msra.mxu0 %v2226
      %3081 = vmatpush.bf16.msra.mxu0 %v2225
      %3082 = vmatpush.bf16.msra.mxu0 %v2224
      %3083 = vmatpush.bf16.msra.mxu0 %v2223
      %3084 = vmatpush.bf16.msra.mxu0 %v2222
      %3085 = vmatpush.bf16.msra.mxu0 %v2221
      %3086 = vmatpush.bf16.msra.mxu0 %v2220
      %3087 = vmatpush.bf16.msra.mxu0 %v2219
      %3088 = vmatmul.bf16.gmra.mxu0 %v1471
      %v3089 = vpop.f32.mrf.mxu0
      %v3090 = vadd.f32 %v2921, %v3089
      %v3091 = vpop.f32.mrf.mxu0
      %v3092 = vadd.f32 %v2923, %v3091
      %3093 = vmatmul.bf16.gmra.mxu0 %v1479
      %v3094 = vpop.f32.mrf.mxu0
      %v3095 = vadd.f32 %v2926, %v3094
      %v3096 = vpop.f32.mrf.mxu0
      %v3097 = vadd.f32 %v2928, %v3096
      %3098 = vmatmul.bf16.gmra.mxu0 %v1487
      %v3099 = vpop.f32.mrf.mxu0
      %v3100 = vadd.f32 %v2931, %v3099
      %v3101 = vpop.f32.mrf.mxu0
      %v3102 = vadd.f32 %v2933, %v3101
      %3103 = vmatmul.bf16.gmra.mxu0 %v1495
      %v3104 = vpop.f32.mrf.mxu0
      %v3105 = vadd.f32 %v2936, %v3104
      %v3106 = vpop.f32.mrf.mxu0
      %v3107 = vadd.f32 %v2938, %v3106
      %3108 = vmatmul.bf16.gmra.mxu0 %v1503
      %v3109 = vpop.f32.mrf.mxu0
      %v3110 = vadd.f32 %v2941, %v3109
      %v3111 = vpop.f32.mrf.mxu0
      %v3112 = vadd.f32 %v2943, %v3111
      %3113 = vmatmul.bf16.gmra.mxu0 %v1511
      %v3114 = vpop.f32.mrf.mxu0
      %v3115 = vadd.f32 %v2946, %v3114
      %v3116 = vpop.f32.mrf.mxu0
      %v3117 = vadd.f32 %v2948, %v3116
      %3118 = vmatmul.bf16.gmra.mxu0 %v1519
      %v3119 = vpop.f32.mrf.mxu0
      %v3120 = vadd.f32 %v2951, %v3119
      %v3121 = vpop.f32.mrf.mxu0
      %v3122 = vadd.f32 %v2953, %v3121
      %3123 = vmatmul.bf16.gmra.mxu0 %v1527
      %v3124 = vpop.f32.mrf.mxu0
      %v3125 = vadd.f32 %v2956, %v3124
      %v3126 = vpop.f32.mrf.mxu0
      %v3127 = vadd.f32 %v2958, %v3126
      %3128 = vmatmul.bf16.gmra.mxu0 %v1535
      %v3129 = vpop.f32.mrf.mxu0
      %v3130 = vadd.f32 %v2961, %v3129
      %v3131 = vpop.f32.mrf.mxu0
      %v3132 = vadd.f32 %v2963, %v3131
      %3133 = vmatmul.bf16.gmra.mxu0 %v1543
      %v3134 = vpop.f32.mrf.mxu0
      %v3135 = vadd.f32 %v2966, %v3134
      %v3136 = vpop.f32.mrf.mxu0
      %v3137 = vadd.f32 %v2968, %v3136
      %3138 = vmatmul.bf16.gmra.mxu0 %v1551
      %v3139 = vpop.f32.mrf.mxu0
      %v3140 = vadd.f32 %v2971, %v3139
      %v3141 = vpop.f32.mrf.mxu0
      %v3142 = vadd.f32 %v2973, %v3141
      %3143 = vmatmul.bf16.gmra.mxu0 %v1559
      %v3144 = vpop.f32.mrf.mxu0
      %v3145 = vadd.f32 %v2976, %v3144
      %v3146 = vpop.f32.mrf.mxu0
      %v3147 = vadd.f32 %v2978, %v3146
      %3148 = vmatmul.bf16.gmra.mxu0 %v1567
      %v3149 = vpop.f32.mrf.mxu0
      %v3150 = vadd.f32 %v2981, %v3149
      %v3151 = vpop.f32.mrf.mxu0
      %v3152 = vadd.f32 %v2983, %v3151
      %3153 = vmatmul.bf16.gmra.mxu0 %v1575
      %v3154 = vpop.f32.mrf.mxu0
      %v3155 = vadd.f32 %v2986, %v3154
      %v3156 = vpop.f32.mrf.mxu0
      %v3157 = vadd.f32 %v2988, %v3156
      %3158 = vmatmul.bf16.gmra.mxu0 %v1583
      %v3159 = vpop.f32.mrf.mxu0
      %v3160 = vadd.f32 %v2991, %v3159
      %v3161 = vpop.f32.mrf.mxu0
      %v3162 = vadd.f32 %v2993, %v3161
      %3163 = vmatmul.bf16.gmra.mxu0 %v1591
      %v3164 = vpop.f32.mrf.mxu0
      %v3165 = vadd.f32 %v2996, %v3164
      %v3166 = vpop.f32.mrf.mxu0
      %v3167 = vadd.f32 %v2998, %v3166
      %3168 = vmatmul.bf16.gmra.mxu0 %v1599
      %v3169 = vpop.f32.mrf.mxu0
      %v3170 = vadd.f32 %v3001, %v3169
      %v3171 = vpop.f32.mrf.mxu0
      %v3172 = vadd.f32 %v3003, %v3171
      %3173 = vmatmul.bf16.gmra.mxu0 %v1607
      %v3174 = vpop.f32.mrf.mxu0
      %v3175 = vadd.f32 %v3006, %v3174
      %v3176 = vpop.f32.mrf.mxu0
      %v3177 = vadd.f32 %v3008, %v3176
      %3178 = vmatmul.bf16.gmra.mxu0 %v1615
      %v3179 = vpop.f32.mrf.mxu0
      %v3180 = vadd.f32 %v3011, %v3179
      %v3181 = vpop.f32.mrf.mxu0
      %v3182 = vadd.f32 %v3013, %v3181
      %3183 = vmatmul.bf16.gmra.mxu0 %v1623
      %v3184 = vpop.f32.mrf.mxu0
      %v3185 = vadd.f32 %v3016, %v3184
      %v3186 = vpop.f32.mrf.mxu0
      %v3187 = vadd.f32 %v3018, %v3186
      %3188 = vmatmul.bf16.gmra.mxu0 %v1631
      %v3189 = vpop.f32.mrf.mxu0
      %v3190 = vadd.f32 %v3021, %v3189
      %v3191 = vpop.f32.mrf.mxu0
      %v3192 = vadd.f32 %v3023, %v3191
      %3193 = vmatmul.bf16.gmra.mxu0 %v1639
      %v3194 = vpop.f32.mrf.mxu0
      %v3195 = vadd.f32 %v3026, %v3194
      %v3196 = vpop.f32.mrf.mxu0
      %v3197 = vadd.f32 %v3028, %v3196
      %3198 = vmatmul.bf16.gmra.mxu0 %v1647
      %v3199 = vpop.f32.mrf.mxu0
      %v3200 = vadd.f32 %v3031, %v3199
      %v3201 = vpop.f32.mrf.mxu0
      %v3202 = vadd.f32 %v3033, %v3201
      %3203 = vmatmul.bf16.gmra.mxu0 %v1655
      %v3204 = vpop.f32.mrf.mxu0
      %v3205 = vadd.f32 %v3036, %v3204
      %v3206 = vpop.f32.mrf.mxu0
      %v3207 = vadd.f32 %v3038, %v3206
      %3208 = vmatmul.bf16.gmra.mxu0 %v1663
      %v3209 = vpop.f32.mrf.mxu0
      %v3210 = vadd.f32 %v3041, %v3209
      %v3211 = vpop.f32.mrf.mxu0
      %v3212 = vadd.f32 %v3043, %v3211
      %3213 = vmatmul.bf16.gmra.mxu0 %v1671
      %v3214 = vpop.f32.mrf.mxu0
      %v3215 = vadd.f32 %v3046, %v3214
      %v3216 = vpop.f32.mrf.mxu0
      %v3217 = vadd.f32 %v3048, %v3216
      %3218 = vmatmul.bf16.gmra.mxu0 %v1679
      %v3219 = vpop.f32.mrf.mxu0
      %v3220 = vadd.f32 %v3051, %v3219
      %v3221 = vpop.f32.mrf.mxu0
      %v3222 = vadd.f32 %v3053, %v3221
      %3223 = vmatmul.bf16.gmra.mxu0 %v1687
      %v3224 = vpop.f32.mrf.mxu0
      %v3225 = vadd.f32 %v3056, %v3224
      %v3226 = vpop.f32.mrf.mxu0
      %v3227 = vadd.f32 %v3058, %v3226
      %3228 = vmatmul.bf16.gmra.mxu0 %v1695
      %v3229 = vpop.f32.mrf.mxu0
      %v3230 = vadd.f32 %v3061, %v3229
      %v3231 = vpop.f32.mrf.mxu0
      %v3232 = vadd.f32 %v3063, %v3231
      %3233 = vmatmul.bf16.gmra.mxu0 %v1703
      %v3234 = vpop.f32.mrf.mxu0
      %v3235 = vadd.f32 %v3066, %v3234
      %v3236 = vpop.f32.mrf.mxu0
      %v3237 = vadd.f32 %v3068, %v3236
      %3238 = vmatmul.bf16.gmra.mxu0 %v1711
      %v3239 = vpop.f32.mrf.mxu0
      %v3240 = vadd.f32 %v3071, %v3239
      %v3241 = vpop.f32.mrf.mxu0
      %v3242 = vadd.f32 %v3073, %v3241
      %3243 = vmatmul.bf16.gmra.mxu0 %v1719
      %v3244 = vpop.f32.mrf.mxu0
      %v3245 = vadd.f32 %v3076, %v3244
      %v3246 = vpop.f32.mrf.mxu0
      %v3247 = vadd.f32 %v3078, %v3246
      %3248 = vdwg.mxu0
      %3249 = vmatpush.bf16.msra.mxu0 %v2234
      %3250 = vmatpush.bf16.msra.mxu0 %v2233
      %3251 = vmatpush.bf16.msra.mxu0 %v2232
      %3252 = vmatpush.bf16.msra.mxu0 %v2231
      %3253 = vmatpush.bf16.msra.mxu0 %v2230
      %3254 = vmatpush.bf16.msra.mxu0 %v2229
      %3255 = vmatpush.bf16.msra.mxu0 %v2228
      %3256 = vmatpush.bf16.msra.mxu0 %v2227
      %3257 = vmatmul.bf16.gmra.mxu0 %v1472
      %v3258 = vpop.f32.mrf.mxu0
      %v3259 = vadd.f32 %v3090, %v3258
      %v3260 = vpop.f32.mrf.mxu0
      %v3261 = vadd.f32 %v3092, %v3260
      %3262 = vmatmul.bf16.gmra.mxu0 %v1480
      %v3263 = vpop.f32.mrf.mxu0
      %v3264 = vadd.f32 %v3095, %v3263
      %v3265 = vpop.f32.mrf.mxu0
      %v3266 = vadd.f32 %v3097, %v3265
      %3267 = vmatmul.bf16.gmra.mxu0 %v1488
      %v3268 = vpop.f32.mrf.mxu0
      %v3269 = vadd.f32 %v3100, %v3268
      %v3270 = vpop.f32.mrf.mxu0
      %v3271 = vadd.f32 %v3102, %v3270
      %3272 = vmatmul.bf16.gmra.mxu0 %v1496
      %v3273 = vpop.f32.mrf.mxu0
      %v3274 = vadd.f32 %v3105, %v3273
      %v3275 = vpop.f32.mrf.mxu0
      %v3276 = vadd.f32 %v3107, %v3275
      %3277 = vmatmul.bf16.gmra.mxu0 %v1504
      %v3278 = vpop.f32.mrf.mxu0
      %v3279 = vadd.f32 %v3110, %v3278
      %v3280 = vpop.f32.mrf.mxu0
      %v3281 = vadd.f32 %v3112, %v3280
      %3282 = vmatmul.bf16.gmra.mxu0 %v1512
      %v3283 = vpop.f32.mrf.mxu0
      %v3284 = vadd.f32 %v3115, %v3283
      %v3285 = vpop.f32.mrf.mxu0
      %v3286 = vadd.f32 %v3117, %v3285
      %3287 = vmatmul.bf16.gmra.mxu0 %v1520
      %v3288 = vpop.f32.mrf.mxu0
      %v3289 = vadd.f32 %v3120, %v3288
      %v3290 = vpop.f32.mrf.mxu0
      %v3291 = vadd.f32 %v3122, %v3290
      %3292 = vmatmul.bf16.gmra.mxu0 %v1528
      %v3293 = vpop.f32.mrf.mxu0
      %v3294 = vadd.f32 %v3125, %v3293
      %v3295 = vpop.f32.mrf.mxu0
      %v3296 = vadd.f32 %v3127, %v3295
      %3297 = vmatmul.bf16.gmra.mxu0 %v1536
      %v3298 = vpop.f32.mrf.mxu0
      %v3299 = vadd.f32 %v3130, %v3298
      %v3300 = vpop.f32.mrf.mxu0
      %v3301 = vadd.f32 %v3132, %v3300
      %3302 = vmatmul.bf16.gmra.mxu0 %v1544
      %v3303 = vpop.f32.mrf.mxu0
      %v3304 = vadd.f32 %v3135, %v3303
      %v3305 = vpop.f32.mrf.mxu0
      %v3306 = vadd.f32 %v3137, %v3305
      %3307 = vmatmul.bf16.gmra.mxu0 %v1552
      %v3308 = vpop.f32.mrf.mxu0
      %v3309 = vadd.f32 %v3140, %v3308
      %v3310 = vpop.f32.mrf.mxu0
      %v3311 = vadd.f32 %v3142, %v3310
      %3312 = vmatmul.bf16.gmra.mxu0 %v1560
      %v3313 = vpop.f32.mrf.mxu0
      %v3314 = vadd.f32 %v3145, %v3313
      %v3315 = vpop.f32.mrf.mxu0
      %v3316 = vadd.f32 %v3147, %v3315
      %3317 = vmatmul.bf16.gmra.mxu0 %v1568
      %v3318 = vpop.f32.mrf.mxu0
      %v3319 = vadd.f32 %v3150, %v3318
      %v3320 = vpop.f32.mrf.mxu0
      %v3321 = vadd.f32 %v3152, %v3320
      %3322 = vmatmul.bf16.gmra.mxu0 %v1576
      %v3323 = vpop.f32.mrf.mxu0
      %v3324 = vadd.f32 %v3155, %v3323
      %v3325 = vpop.f32.mrf.mxu0
      %v3326 = vadd.f32 %v3157, %v3325
      %3327 = vmatmul.bf16.gmra.mxu0 %v1584
      %v3328 = vpop.f32.mrf.mxu0
      %v3329 = vadd.f32 %v3160, %v3328
      %v3330 = vpop.f32.mrf.mxu0
      %v3331 = vadd.f32 %v3162, %v3330
      %3332 = vmatmul.bf16.gmra.mxu0 %v1592
      %v3333 = vpop.f32.mrf.mxu0
      %v3334 = vadd.f32 %v3165, %v3333
      %v3335 = vpop.f32.mrf.mxu0
      %v3336 = vadd.f32 %v3167, %v3335
      %3337 = vmatmul.bf16.gmra.mxu0 %v1600
      %v3338 = vpop.f32.mrf.mxu0
      %v3339 = vadd.f32 %v3170, %v3338
      %v3340 = vpop.f32.mrf.mxu0
      %v3341 = vadd.f32 %v3172, %v3340
      %3342 = vmatmul.bf16.gmra.mxu0 %v1608
      %v3343 = vpop.f32.mrf.mxu0
      %v3344 = vadd.f32 %v3175, %v3343
      %v3345 = vpop.f32.mrf.mxu0
      %v3346 = vadd.f32 %v3177, %v3345
      %3347 = vmatmul.bf16.gmra.mxu0 %v1616
      %v3348 = vpop.f32.mrf.mxu0
      %v3349 = vadd.f32 %v3180, %v3348
      %v3350 = vpop.f32.mrf.mxu0
      %v3351 = vadd.f32 %v3182, %v3350
      %3352 = vmatmul.bf16.gmra.mxu0 %v1624
      %v3353 = vpop.f32.mrf.mxu0
      %v3354 = vadd.f32 %v3185, %v3353
      %v3355 = vpop.f32.mrf.mxu0
      %v3356 = vadd.f32 %v3187, %v3355
      %3357 = vmatmul.bf16.gmra.mxu0 %v1632
      %v3358 = vpop.f32.mrf.mxu0
      %v3359 = vadd.f32 %v3190, %v3358
      %v3360 = vpop.f32.mrf.mxu0
      %v3361 = vadd.f32 %v3192, %v3360
      %3362 = vmatmul.bf16.gmra.mxu0 %v1640
      %v3363 = vpop.f32.mrf.mxu0
      %v3364 = vadd.f32 %v3195, %v3363
      %v3365 = vpop.f32.mrf.mxu0
      %v3366 = vadd.f32 %v3197, %v3365
      %3367 = vmatmul.bf16.gmra.mxu0 %v1648
      %v3368 = vpop.f32.mrf.mxu0
      %v3369 = vadd.f32 %v3200, %v3368
      %v3370 = vpop.f32.mrf.mxu0
      %v3371 = vadd.f32 %v3202, %v3370
      %3372 = vmatmul.bf16.gmra.mxu0 %v1656
      %v3373 = vpop.f32.mrf.mxu0
      %v3374 = vadd.f32 %v3205, %v3373
      %v3375 = vpop.f32.mrf.mxu0
      %v3376 = vadd.f32 %v3207, %v3375
      %3377 = vmatmul.bf16.gmra.mxu0 %v1664
      %v3378 = vpop.f32.mrf.mxu0
      %v3379 = vadd.f32 %v3210, %v3378
      %v3380 = vpop.f32.mrf.mxu0
      %v3381 = vadd.f32 %v3212, %v3380
      %3382 = vmatmul.bf16.gmra.mxu0 %v1672
      %v3383 = vpop.f32.mrf.mxu0
      %v3384 = vadd.f32 %v3215, %v3383
      %v3385 = vpop.f32.mrf.mxu0
      %v3386 = vadd.f32 %v3217, %v3385
      %3387 = vmatmul.bf16.gmra.mxu0 %v1680
      %v3388 = vpop.f32.mrf.mxu0
      %v3389 = vadd.f32 %v3220, %v3388
      %v3390 = vpop.f32.mrf.mxu0
      %v3391 = vadd.f32 %v3222, %v3390
      %3392 = vmatmul.bf16.gmra.mxu0 %v1688
      %v3393 = vpop.f32.mrf.mxu0
      %v3394 = vadd.f32 %v3225, %v3393
      %v3395 = vpop.f32.mrf.mxu0
      %v3396 = vadd.f32 %v3227, %v3395
      %3397 = vmatmul.bf16.gmra.mxu0 %v1696
      %v3398 = vpop.f32.mrf.mxu0
      %v3399 = vadd.f32 %v3230, %v3398
      %v3400 = vpop.f32.mrf.mxu0
      %v3401 = vadd.f32 %v3232, %v3400
      %3402 = vmatmul.bf16.gmra.mxu0 %v1704
      %v3403 = vpop.f32.mrf.mxu0
      %v3404 = vadd.f32 %v3235, %v3403
      %v3405 = vpop.f32.mrf.mxu0
      %v3406 = vadd.f32 %v3237, %v3405
      %3407 = vmatmul.bf16.gmra.mxu0 %v1712
      %v3408 = vpop.f32.mrf.mxu0
      %v3409 = vadd.f32 %v3240, %v3408
      %v3410 = vpop.f32.mrf.mxu0
      %v3411 = vadd.f32 %v3242, %v3410
      %3412 = vmatmul.bf16.gmra.mxu0 %v1720
      %v3413 = vpop.f32.mrf.mxu0
      %v3414 = vadd.f32 %v3245, %v3413
      %v3415 = vpop.f32.mrf.mxu0
      %v3416 = vadd.f32 %v3247, %v3415
      %3417 = vdwg.mxu0
      %3418 = vmatpush.bf16.msra.mxu0 %v2242
      %3419 = vmatpush.bf16.msra.mxu0 %v2241
      %3420 = vmatpush.bf16.msra.mxu0 %v2240
      %3421 = vmatpush.bf16.msra.mxu0 %v2239
      %3422 = vmatpush.bf16.msra.mxu0 %v2238
      %3423 = vmatpush.bf16.msra.mxu0 %v2237
      %3424 = vmatpush.bf16.msra.mxu0 %v2236
      %3425 = vmatpush.bf16.msra.mxu0 %v2235
      %3426 = vmatmul.bf16.gmra.mxu0 %v1473
      %v3427 = vpop.f32.mrf.mxu0
      %v3428 = vadd.f32 %v3259, %v3427
      %v3429 = vpop.f32.mrf.mxu0
      %v3430 = vadd.f32 %v3261, %v3429
      %3431 = vmatmul.bf16.gmra.mxu0 %v1481
      %v3432 = vpop.f32.mrf.mxu0
      %v3433 = vadd.f32 %v3264, %v3432
      %v3434 = vpop.f32.mrf.mxu0
      %v3435 = vadd.f32 %v3266, %v3434
      %3436 = vmatmul.bf16.gmra.mxu0 %v1489
      %v3437 = vpop.f32.mrf.mxu0
      %v3438 = vadd.f32 %v3269, %v3437
      %v3439 = vpop.f32.mrf.mxu0
      %v3440 = vadd.f32 %v3271, %v3439
      %3441 = vmatmul.bf16.gmra.mxu0 %v1497
      %v3442 = vpop.f32.mrf.mxu0
      %v3443 = vadd.f32 %v3274, %v3442
      %v3444 = vpop.f32.mrf.mxu0
      %v3445 = vadd.f32 %v3276, %v3444
      %3446 = vmatmul.bf16.gmra.mxu0 %v1505
      %v3447 = vpop.f32.mrf.mxu0
      %v3448 = vadd.f32 %v3279, %v3447
      %v3449 = vpop.f32.mrf.mxu0
      %v3450 = vadd.f32 %v3281, %v3449
      %3451 = vmatmul.bf16.gmra.mxu0 %v1513
      %v3452 = vpop.f32.mrf.mxu0
      %v3453 = vadd.f32 %v3284, %v3452
      %v3454 = vpop.f32.mrf.mxu0
      %v3455 = vadd.f32 %v3286, %v3454
      %3456 = vmatmul.bf16.gmra.mxu0 %v1521
      %v3457 = vpop.f32.mrf.mxu0
      %v3458 = vadd.f32 %v3289, %v3457
      %v3459 = vpop.f32.mrf.mxu0
      %v3460 = vadd.f32 %v3291, %v3459
      %3461 = vmatmul.bf16.gmra.mxu0 %v1529
      %v3462 = vpop.f32.mrf.mxu0
      %v3463 = vadd.f32 %v3294, %v3462
      %v3464 = vpop.f32.mrf.mxu0
      %v3465 = vadd.f32 %v3296, %v3464
      %3466 = vmatmul.bf16.gmra.mxu0 %v1537
      %v3467 = vpop.f32.mrf.mxu0
      %v3468 = vadd.f32 %v3299, %v3467
      %v3469 = vpop.f32.mrf.mxu0
      %v3470 = vadd.f32 %v3301, %v3469
      %3471 = vmatmul.bf16.gmra.mxu0 %v1545
      %v3472 = vpop.f32.mrf.mxu0
      %v3473 = vadd.f32 %v3304, %v3472
      %v3474 = vpop.f32.mrf.mxu0
      %v3475 = vadd.f32 %v3306, %v3474
      %3476 = vmatmul.bf16.gmra.mxu0 %v1553
      %v3477 = vpop.f32.mrf.mxu0
      %v3478 = vadd.f32 %v3309, %v3477
      %v3479 = vpop.f32.mrf.mxu0
      %v3480 = vadd.f32 %v3311, %v3479
      %3481 = vmatmul.bf16.gmra.mxu0 %v1561
      %v3482 = vpop.f32.mrf.mxu0
      %v3483 = vadd.f32 %v3314, %v3482
      %v3484 = vpop.f32.mrf.mxu0
      %v3485 = vadd.f32 %v3316, %v3484
      %3486 = vmatmul.bf16.gmra.mxu0 %v1569
      %v3487 = vpop.f32.mrf.mxu0
      %v3488 = vadd.f32 %v3319, %v3487
      %v3489 = vpop.f32.mrf.mxu0
      %v3490 = vadd.f32 %v3321, %v3489
      %3491 = vmatmul.bf16.gmra.mxu0 %v1577
      %v3492 = vpop.f32.mrf.mxu0
      %v3493 = vadd.f32 %v3324, %v3492
      %v3494 = vpop.f32.mrf.mxu0
      %v3495 = vadd.f32 %v3326, %v3494
      %3496 = vmatmul.bf16.gmra.mxu0 %v1585
      %v3497 = vpop.f32.mrf.mxu0
      %v3498 = vadd.f32 %v3329, %v3497
      %v3499 = vpop.f32.mrf.mxu0
      %v3500 = vadd.f32 %v3331, %v3499
      %3501 = vmatmul.bf16.gmra.mxu0 %v1593
      %v3502 = vpop.f32.mrf.mxu0
      %v3503 = vadd.f32 %v3334, %v3502
      %v3504 = vpop.f32.mrf.mxu0
      %v3505 = vadd.f32 %v3336, %v3504
      %3506 = vmatmul.bf16.gmra.mxu0 %v1601
      %v3507 = vpop.f32.mrf.mxu0
      %v3508 = vadd.f32 %v3339, %v3507
      %v3509 = vpop.f32.mrf.mxu0
      %v3510 = vadd.f32 %v3341, %v3509
      %3511 = vmatmul.bf16.gmra.mxu0 %v1609
      %v3512 = vpop.f32.mrf.mxu0
      %v3513 = vadd.f32 %v3344, %v3512
      %v3514 = vpop.f32.mrf.mxu0
      %v3515 = vadd.f32 %v3346, %v3514
      %3516 = vmatmul.bf16.gmra.mxu0 %v1617
      %v3517 = vpop.f32.mrf.mxu0
      %v3518 = vadd.f32 %v3349, %v3517
      %v3519 = vpop.f32.mrf.mxu0
      %v3520 = vadd.f32 %v3351, %v3519
      %3521 = vmatmul.bf16.gmra.mxu0 %v1625
      %v3522 = vpop.f32.mrf.mxu0
      %v3523 = vadd.f32 %v3354, %v3522
      %v3524 = vpop.f32.mrf.mxu0
      %v3525 = vadd.f32 %v3356, %v3524
      %3526 = vmatmul.bf16.gmra.mxu0 %v1633
      %v3527 = vpop.f32.mrf.mxu0
      %v3528 = vadd.f32 %v3359, %v3527
      %v3529 = vpop.f32.mrf.mxu0
      %v3530 = vadd.f32 %v3361, %v3529
      %3531 = vmatmul.bf16.gmra.mxu0 %v1641
      %v3532 = vpop.f32.mrf.mxu0
      %v3533 = vadd.f32 %v3364, %v3532
      %v3534 = vpop.f32.mrf.mxu0
      %v3535 = vadd.f32 %v3366, %v3534
      %3536 = vmatmul.bf16.gmra.mxu0 %v1649
      %v3537 = vpop.f32.mrf.mxu0
      %v3538 = vadd.f32 %v3369, %v3537
      %v3539 = vpop.f32.mrf.mxu0
      %v3540 = vadd.f32 %v3371, %v3539
      %3541 = vmatmul.bf16.gmra.mxu0 %v1657
      %v3542 = vpop.f32.mrf.mxu0
      %v3543 = vadd.f32 %v3374, %v3542
      %v3544 = vpop.f32.mrf.mxu0
      %v3545 = vadd.f32 %v3376, %v3544
      %3546 = vmatmul.bf16.gmra.mxu0 %v1665
      %v3547 = vpop.f32.mrf.mxu0
      %v3548 = vadd.f32 %v3379, %v3547
      %v3549 = vpop.f32.mrf.mxu0
      %v3550 = vadd.f32 %v3381, %v3549
      %3551 = vmatmul.bf16.gmra.mxu0 %v1673
      %v3552 = vpop.f32.mrf.mxu0
      %v3553 = vadd.f32 %v3384, %v3552
      %v3554 = vpop.f32.mrf.mxu0
      %v3555 = vadd.f32 %v3386, %v3554
      %3556 = vmatmul.bf16.gmra.mxu0 %v1681
      %v3557 = vpop.f32.mrf.mxu0
      %v3558 = vadd.f32 %v3389, %v3557
      %v3559 = vpop.f32.mrf.mxu0
      %v3560 = vadd.f32 %v3391, %v3559
      %3561 = vmatmul.bf16.gmra.mxu0 %v1689
      %v3562 = vpop.f32.mrf.mxu0
      %v3563 = vadd.f32 %v3394, %v3562
      %v3564 = vpop.f32.mrf.mxu0
      %v3565 = vadd.f32 %v3396, %v3564
      %3566 = vmatmul.bf16.gmra.mxu0 %v1697
      %v3567 = vpop.f32.mrf.mxu0
      %v3568 = vadd.f32 %v3399, %v3567
      %v3569 = vpop.f32.mrf.mxu0
      %v3570 = vadd.f32 %v3401, %v3569
      %3571 = vmatmul.bf16.gmra.mxu0 %v1705
      %v3572 = vpop.f32.mrf.mxu0
      %v3573 = vadd.f32 %v3404, %v3572
      %v3574 = vpop.f32.mrf.mxu0
      %v3575 = vadd.f32 %v3406, %v3574
      %3576 = vmatmul.bf16.gmra.mxu0 %v1713
      %v3577 = vpop.f32.mrf.mxu0
      %v3578 = vadd.f32 %v3409, %v3577
      %v3579 = vpop.f32.mrf.mxu0
      %v3580 = vadd.f32 %v3411, %v3579
      %3581 = vmatmul.bf16.gmra.mxu0 %v1721
      %v3582 = vpop.f32.mrf.mxu0
      %v3583 = vadd.f32 %v3414, %v3582
      %v3584 = vpop.f32.mrf.mxu0
      %v3585 = vadd.f32 %v3416, %v3584
      %3586 = vdwg.mxu0
      %3587 = vmatpush.bf16.msra.mxu0 0
      %3588 = vmatpush.bf16.msra.mxu0 0
      %3589 = vmatpush.bf16.msra.mxu0 0
      %3590 = vmatpush.bf16.msra.mxu0 0
      %3591 = vmatpush.bf16.msra.mxu0 %v2246
      %3592 = vmatpush.bf16.msra.mxu0 %v2245
      %3593 = vmatpush.bf16.msra.mxu0 %v2244
      %3594 = vmatpush.bf16.msra.mxu0 %v2243
      %3595 = vmatmul.bf16.gmra.mxu0 %v2309
      %v3596 = vpop.f32.mrf.mxu0
      %v3597 = vadd.f32 %v3428, %v3596
      %v3598 = vpop.f32.mrf.mxu0
      %v3599 = vadd.f32 %v3430, %v3598
      %3600 = vmatmul.bf16.gmra.mxu0 %v2312
      %v3601 = vpop.f32.mrf.mxu0
      %v3602 = vadd.f32 %v3433, %v3601
      %v3603 = vpop.f32.mrf.mxu0
      %v3604 = vadd.f32 %v3435, %v3603
      %3605 = vmatmul.bf16.gmra.mxu0 %v2315
      %v3606 = vpop.f32.mrf.mxu0
      %v3607 = vadd.f32 %v3438, %v3606
      %v3608 = vpop.f32.mrf.mxu0
      %v3609 = vadd.f32 %v3440, %v3608
      %3610 = vmatmul.bf16.gmra.mxu0 %v2318
      %v3611 = vpop.f32.mrf.mxu0
      %v3612 = vadd.f32 %v3443, %v3611
      %v3613 = vpop.f32.mrf.mxu0
      %v3614 = vadd.f32 %v3445, %v3613
      %3615 = vmatmul.bf16.gmra.mxu0 %v2321
      %v3616 = vpop.f32.mrf.mxu0
      %v3617 = vadd.f32 %v3448, %v3616
      %v3618 = vpop.f32.mrf.mxu0
      %v3619 = vadd.f32 %v3450, %v3618
      %3620 = vmatmul.bf16.gmra.mxu0 %v2324
      %v3621 = vpop.f32.mrf.mxu0
      %v3622 = vadd.f32 %v3453, %v3621
      %v3623 = vpop.f32.mrf.mxu0
      %v3624 = vadd.f32 %v3455, %v3623
      %3625 = vmatmul.bf16.gmra.mxu0 %v2327
      %v3626 = vpop.f32.mrf.mxu0
      %v3627 = vadd.f32 %v3458, %v3626
      %v3628 = vpop.f32.mrf.mxu0
      %v3629 = vadd.f32 %v3460, %v3628
      %3630 = vmatmul.bf16.gmra.mxu0 %v2330
      %v3631 = vpop.f32.mrf.mxu0
      %v3632 = vadd.f32 %v3463, %v3631
      %v3633 = vpop.f32.mrf.mxu0
      %v3634 = vadd.f32 %v3465, %v3633
      %3635 = vmatmul.bf16.gmra.mxu0 %v2333
      %v3636 = vpop.f32.mrf.mxu0
      %v3637 = vadd.f32 %v3468, %v3636
      %v3638 = vpop.f32.mrf.mxu0
      %v3639 = vadd.f32 %v3470, %v3638
      %3640 = vmatmul.bf16.gmra.mxu0 %v2336
      %v3641 = vpop.f32.mrf.mxu0
      %v3642 = vadd.f32 %v3473, %v3641
      %v3643 = vpop.f32.mrf.mxu0
      %v3644 = vadd.f32 %v3475, %v3643
      %3645 = vmatmul.bf16.gmra.mxu0 %v2339
      %v3646 = vpop.f32.mrf.mxu0
      %v3647 = vadd.f32 %v3478, %v3646
      %v3648 = vpop.f32.mrf.mxu0
      %v3649 = vadd.f32 %v3480, %v3648
      %3650 = vmatmul.bf16.gmra.mxu0 %v2342
      %v3651 = vpop.f32.mrf.mxu0
      %v3652 = vadd.f32 %v3483, %v3651
      %v3653 = vpop.f32.mrf.mxu0
      %v3654 = vadd.f32 %v3485, %v3653
      %3655 = vmatmul.bf16.gmra.mxu0 %v2345
      %v3656 = vpop.f32.mrf.mxu0
      %v3657 = vadd.f32 %v3488, %v3656
      %v3658 = vpop.f32.mrf.mxu0
      %v3659 = vadd.f32 %v3490, %v3658
      %3660 = vmatmul.bf16.gmra.mxu0 %v2348
      %v3661 = vpop.f32.mrf.mxu0
      %v3662 = vadd.f32 %v3493, %v3661
      %v3663 = vpop.f32.mrf.mxu0
      %v3664 = vadd.f32 %v3495, %v3663
      %3665 = vmatmul.bf16.gmra.mxu0 %v2351
      %v3666 = vpop.f32.mrf.mxu0
      %v3667 = vadd.f32 %v3498, %v3666
      %v3668 = vpop.f32.mrf.mxu0
      %v3669 = vadd.f32 %v3500, %v3668
      %3670 = vmatmul.bf16.gmra.mxu0 %v2354
      %v3671 = vpop.f32.mrf.mxu0
      %v3672 = vadd.f32 %v3503, %v3671
      %v3673 = vpop.f32.mrf.mxu0
      %v3674 = vadd.f32 %v3505, %v3673
      %3675 = vmatmul.bf16.gmra.mxu0 %v2357
      %v3676 = vpop.f32.mrf.mxu0
      %v3677 = vadd.f32 %v3508, %v3676
      %v3678 = vpop.f32.mrf.mxu0
      %v3679 = vadd.f32 %v3510, %v3678
      %3680 = vmatmul.bf16.gmra.mxu0 %v2360
      %v3681 = vpop.f32.mrf.mxu0
      %v3682 = vadd.f32 %v3513, %v3681
      %v3683 = vpop.f32.mrf.mxu0
      %v3684 = vadd.f32 %v3515, %v3683
      %3685 = vmatmul.bf16.gmra.mxu0 %v2363
      %v3686 = vpop.f32.mrf.mxu0
      %v3687 = vadd.f32 %v3518, %v3686
      %v3688 = vpop.f32.mrf.mxu0
      %v3689 = vadd.f32 %v3520, %v3688
      %3690 = vmatmul.bf16.gmra.mxu0 %v2366
      %v3691 = vpop.f32.mrf.mxu0
      %v3692 = vadd.f32 %v3523, %v3691
      %v3693 = vpop.f32.mrf.mxu0
      %v3694 = vadd.f32 %v3525, %v3693
      %3695 = vmatmul.bf16.gmra.mxu0 %v2369
      %v3696 = vpop.f32.mrf.mxu0
      %v3697 = vadd.f32 %v3528, %v3696
      %v3698 = vpop.f32.mrf.mxu0
      %v3699 = vadd.f32 %v3530, %v3698
      %3700 = vmatmul.bf16.gmra.mxu0 %v2372
      %v3701 = vpop.f32.mrf.mxu0
      %v3702 = vadd.f32 %v3533, %v3701
      %v3703 = vpop.f32.mrf.mxu0
      %v3704 = vadd.f32 %v3535, %v3703
      %3705 = vmatmul.bf16.gmra.mxu0 %v2375
      %v3706 = vpop.f32.mrf.mxu0
      %v3707 = vadd.f32 %v3538, %v3706
      %v3708 = vpop.f32.mrf.mxu0
      %v3709 = vadd.f32 %v3540, %v3708
      %3710 = vmatmul.bf16.gmra.mxu0 %v2378
      %v3711 = vpop.f32.mrf.mxu0
      %v3712 = vadd.f32 %v3543, %v3711
      %v3713 = vpop.f32.mrf.mxu0
      %v3714 = vadd.f32 %v3545, %v3713
      %3715 = vmatmul.bf16.gmra.mxu0 %v2381
      %v3716 = vpop.f32.mrf.mxu0
      %v3717 = vadd.f32 %v3548, %v3716
      %v3718 = vpop.f32.mrf.mxu0
      %v3719 = vadd.f32 %v3550, %v3718
      %3720 = vmatmul.bf16.gmra.mxu0 %v2384
      %v3721 = vpop.f32.mrf.mxu0
      %v3722 = vadd.f32 %v3553, %v3721
      %v3723 = vpop.f32.mrf.mxu0
      %v3724 = vadd.f32 %v3555, %v3723
      %3725 = vmatmul.bf16.gmra.mxu0 %v2387
      %v3726 = vpop.f32.mrf.mxu0
      %v3727 = vadd.f32 %v3558, %v3726
      %v3728 = vpop.f32.mrf.mxu0
      %v3729 = vadd.f32 %v3560, %v3728
      %3730 = vmatmul.bf16.gmra.mxu0 %v2390
      %v3731 = vpop.f32.mrf.mxu0
      %v3732 = vadd.f32 %v3563, %v3731
      %v3733 = vpop.f32.mrf.mxu0
      %v3734 = vadd.f32 %v3565, %v3733
      %3735 = vmatmul.bf16.gmra.mxu0 %v2393
      %v3736 = vpop.f32.mrf.mxu0
      %v3737 = vadd.f32 %v3568, %v3736
      %v3738 = vpop.f32.mrf.mxu0
      %v3739 = vadd.f32 %v3570, %v3738
      %3740 = vmatmul.bf16.gmra.mxu0 %v2396
      %v3741 = vpop.f32.mrf.mxu0
      %v3742 = vadd.f32 %v3573, %v3741
      %v3743 = vpop.f32.mrf.mxu0
      %v3744 = vadd.f32 %v3575, %v3743
      %3745 = vmatmul.bf16.gmra.mxu0 %v2399
      %v3746 = vpop.f32.mrf.mxu0
      %v3747 = vadd.f32 %v3578, %v3746
      %v3748 = vpop.f32.mrf.mxu0
      %v3749 = vadd.f32 %v3580, %v3748
      %3750 = vmatmul.bf16.gmra.mxu0 %v2402
      %v3751 = vpop.f32.mrf.mxu0
      %v3752 = vadd.f32 %v3583, %v3751
      %v3753 = vpop.f32.mrf.mxu0
      %v3754 = vadd.f32 %v3585, %v3753
      %3755 = vdwg.mxu0
      %v3756 = vld [vmem:[%s308] sm:$0x1]
      %v3758 = vperm.slane %v3756, 0
      %v3760 = vmul.f32 %v3597, %v3758
      %v3761 = vmul.f32 %v3599, %v3758
      %v3762 = vmul.f32 %v3602, %v3758
      %v3763 = vmul.f32 %v3604, %v3758
      %v3764 = vmul.f32 %v3607, %v3758
      %v3765 = vmul.f32 %v3609, %v3758
      %v3766 = vmul.f32 %v3612, %v3758
      %v3767 = vmul.f32 %v3614, %v3758
      %v3768 = vmul.f32 %v3617, %v3758
      %v3769 = vmul.f32 %v3619, %v3758
      %v3770 = vmul.f32 %v3622, %v3758
      %v3771 = vmul.f32 %v3624, %v3758
      %v3772 = vmul.f32 %v3627, %v3758
      %v3773 = vmul.f32 %v3629, %v3758
      %v3774 = vmul.f32 %v3632, %v3758
      %v3775 = vmul.f32 %v3634, %v3758
      %v3776 = vmul.f32 %v3637, %v3758
      %v3777 = vmul.f32 %v3639, %v3758
      %v3778 = vmul.f32 %v3642, %v3758
      %v3779 = vmul.f32 %v3644, %v3758
      %v3780 = vmul.f32 %v3647, %v3758
      %v3781 = vmul.f32 %v3649, %v3758
      %v3782 = vmul.f32 %v3652, %v3758
      %v3783 = vmul.f32 %v3654, %v3758
      %v3784 = vmul.f32 %v3657, %v3758
      %v3785 = vmul.f32 %v3659, %v3758
      %v3786 = vmul.f32 %v3662, %v3758
      %v3787 = vmul.f32 %v3664, %v3758
      %v3788 = vmul.f32 %v3667, %v3758
      %v3789 = vmul.f32 %v3669, %v3758
      %v3790 = vmul.f32 %v3672, %v3758
      %v3791 = vmul.f32 %v3674, %v3758
      %v3792 = vmul.f32 %v3677, %v3758
      %v3793 = vmul.f32 %v3679, %v3758
      %v3794 = vmul.f32 %v3682, %v3758
      %v3795 = vmul.f32 %v3684, %v3758
      %v3796 = vmul.f32 %v3687, %v3758
      %v3797 = vmul.f32 %v3689, %v3758
      %v3798 = vmul.f32 %v3692, %v3758
      %v3799 = vmul.f32 %v3694, %v3758
      %v3800 = vmul.f32 %v3697, %v3758
      %v3801 = vmul.f32 %v3699, %v3758
      %v3802 = vmul.f32 %v3702, %v3758
      %v3803 = vmul.f32 %v3704, %v3758
      %v3804 = vmul.f32 %v3707, %v3758
      %v3805 = vmul.f32 %v3709, %v3758
      %v3806 = vmul.f32 %v3712, %v3758
      %v3807 = vmul.f32 %v3714, %v3758
      %v3808 = vmul.f32 %v3717, %v3758
      %v3809 = vmul.f32 %v3719, %v3758
      %v3810 = vmul.f32 %v3722, %v3758
      %v3811 = vmul.f32 %v3724, %v3758
      %v3812 = vmul.f32 %v3727, %v3758
      %v3813 = vmul.f32 %v3729, %v3758
      %v3814 = vmul.f32 %v3732, %v3758
      %v3815 = vmul.f32 %v3734, %v3758
      %v3816 = vmul.f32 %v3737, %v3758
      %v3817 = vmul.f32 %v3739, %v3758
      %v3818 = vmul.f32 %v3742, %v3758
      %v3819 = vmul.f32 %v3744, %v3758
      %v3820 = vmul.f32 %v3747, %v3758
      %v3821 = vmul.f32 %v3749, %v3758
      %v3822 = vmul.f32 %v3752, %v3758
      %v3823 = vmul.f32 %v3754, %v3758
      %v3824 = vld [vmem:[%s311] sm:$0x1]
      %v3826 = vperm.slane %v3824, 0
      %v3828 = vadd.f32 %v3760, %v3826
      %v3829 = vadd.f32 %v3761, %v3826
      %v3830 = vadd.f32 %v3762, %v3826
      %v3831 = vadd.f32 %v3763, %v3826
      %v3832 = vadd.f32 %v3764, %v3826
      %v3833 = vadd.f32 %v3765, %v3826
      %v3834 = vadd.f32 %v3766, %v3826
      %v3835 = vadd.f32 %v3767, %v3826
      %v3836 = vadd.f32 %v3768, %v3826
      %v3837 = vadd.f32 %v3769, %v3826
      %v3838 = vadd.f32 %v3770, %v3826
      %v3839 = vadd.f32 %v3771, %v3826
      %v3840 = vadd.f32 %v3772, %v3826
      %v3841 = vadd.f32 %v3773, %v3826
      %v3842 = vadd.f32 %v3774, %v3826
      %v3843 = vadd.f32 %v3775, %v3826
      %v3844 = vadd.f32 %v3776, %v3826
      %v3845 = vadd.f32 %v3777, %v3826
      %v3846 = vadd.f32 %v3778, %v3826
      %v3847 = vadd.f32 %v3779, %v3826
      %v3848 = vadd.f32 %v3780, %v3826
      %v3849 = vadd.f32 %v3781, %v3826
      %v3850 = vadd.f32 %v3782, %v3826
      %v3851 = vadd.f32 %v3783, %v3826
      %v3852 = vadd.f32 %v3784, %v3826
      %v3853 = vadd.f32 %v3785, %v3826
      %v3854 = vadd.f32 %v3786, %v3826
      %v3855 = vadd.f32 %v3787, %v3826
      %v3856 = vadd.f32 %v3788, %v3826
      %v3857 = vadd.f32 %v3789, %v3826
      %v3858 = vadd.f32 %v3790, %v3826
      %v3859 = vadd.f32 %v3791, %v3826
      %v3860 = vadd.f32 %v3792, %v3826
      %v3861 = vadd.f32 %v3793, %v3826
      %v3862 = vadd.f32 %v3794, %v3826
      %v3863 = vadd.f32 %v3795, %v3826
      %v3864 = vadd.f32 %v3796, %v3826
      %v3865 = vadd.f32 %v3797, %v3826
      %v3866 = vadd.f32 %v3798, %v3826
      %v3867 = vadd.f32 %v3799, %v3826
      %v3868 = vadd.f32 %v3800, %v3826
      %v3869 = vadd.f32 %v3801, %v3826
      %v3870 = vadd.f32 %v3802, %v3826
      %v3871 = vadd.f32 %v3803, %v3826
      %v3872 = vadd.f32 %v3804, %v3826
      %v3873 = vadd.f32 %v3805, %v3826
      %v3874 = vadd.f32 %v3806, %v3826
      %v3875 = vadd.f32 %v3807, %v3826
      %v3876 = vadd.f32 %v3808, %v3826
      %v3877 = vadd.f32 %v3809, %v3826
      %v3878 = vadd.f32 %v3810, %v3826
      %v3879 = vadd.f32 %v3811, %v3826
      %v3880 = vadd.f32 %v3812, %v3826
      %v3881 = vadd.f32 %v3813, %v3826
      %v3882 = vadd.f32 %v3814, %v3826
      %v3883 = vadd.f32 %v3815, %v3826
      %v3884 = vadd.f32 %v3816, %v3826
      %v3885 = vadd.f32 %v3817, %v3826
      %v3886 = vadd.f32 %v3818, %v3826
      %v3887 = vadd.f32 %v3819, %v3826
      %v3888 = vadd.f32 %v3820, %v3826
      %v3889 = vadd.f32 %v3821, %v3826
      %v3890 = vadd.f32 %v3822, %v3826
      %v3891 = vadd.f32 %v3823, %v3826
      %v3892 = vmax.f32 %v3828, 0.0
      %v3893 = vmax.f32 %v3829, 0.0
      %v3894 = vmax.f32 %v3830, 0.0
      %v3895 = vmax.f32 %v3831, 0.0
      %v3896 = vmax.f32 %v3832, 0.0
      %v3897 = vmax.f32 %v3833, 0.0
      %v3898 = vmax.f32 %v3834, 0.0
      %v3899 = vmax.f32 %v3835, 0.0
      %v3900 = vmax.f32 %v3836, 0.0
      %v3901 = vmax.f32 %v3837, 0.0
      %v3902 = vmax.f32 %v3838, 0.0
      %v3903 = vmax.f32 %v3839, 0.0
      %v3904 = vmax.f32 %v3840, 0.0
      %v3905 = vmax.f32 %v3841, 0.0
      %v3906 = vmax.f32 %v3842, 0.0
      %v3907 = vmax.f32 %v3843, 0.0
      %v3908 = vmax.f32 %v3844, 0.0
      %v3909 = vmax.f32 %v3845, 0.0
      %v3910 = vmax.f32 %v3846, 0.0
      %v3911 = vmax.f32 %v3847, 0.0
      %v3912 = vmax.f32 %v3848, 0.0
      %v3913 = vmax.f32 %v3849, 0.0
      %v3914 = vmax.f32 %v3850, 0.0
      %v3915 = vmax.f32 %v3851, 0.0
      %v3916 = vmax.f32 %v3852, 0.0
      %v3917 = vmax.f32 %v3853, 0.0
      %v3918 = vmax.f32 %v3854, 0.0
      %v3919 = vmax.f32 %v3855, 0.0
      %v3920 = vmax.f32 %v3856, 0.0
      %v3921 = vmax.f32 %v3857, 0.0
      %v3922 = vmax.f32 %v3858, 0.0
      %v3923 = vmax.f32 %v3859, 0.0
      %v3924 = vmax.f32 %v3860, 0.0
      %v3925 = vmax.f32 %v3861, 0.0
      %v3926 = vmax.f32 %v3862, 0.0
      %v3927 = vmax.f32 %v3863, 0.0
      %v3928 = vmax.f32 %v3864, 0.0
      %v3929 = vmax.f32 %v3865, 0.0
      %v3930 = vmax.f32 %v3866, 0.0
      %v3931 = vmax.f32 %v3867, 0.0
      %v3932 = vmax.f32 %v3868, 0.0
      %v3933 = vmax.f32 %v3869, 0.0
      %v3934 = vmax.f32 %v3870, 0.0
      %v3935 = vmax.f32 %v3871, 0.0
      %v3936 = vmax.f32 %v3872, 0.0
      %v3937 = vmax.f32 %v3873, 0.0
      %v3938 = vmax.f32 %v3874, 0.0
      %v3939 = vmax.f32 %v3875, 0.0
      %v3940 = vmax.f32 %v3876, 0.0
      %v3941 = vmax.f32 %v3877, 0.0
      %v3942 = vmax.f32 %v3878, 0.0
      %v3943 = vmax.f32 %v3879, 0.0
      %v3944 = vmax.f32 %v3880, 0.0
      %v3945 = vmax.f32 %v3881, 0.0
      %v3946 = vmax.f32 %v3882, 0.0
      %v3947 = vmax.f32 %v3883, 0.0
      %v3948 = vmax.f32 %v3884, 0.0
      %v3949 = vmax.f32 %v3885, 0.0
      %v3950 = vmax.f32 %v3886, 0.0
      %v3951 = vmax.f32 %v3887, 0.0
      %v3952 = vmax.f32 %v3888, 0.0
      %v3953 = vmax.f32 %v3889, 0.0
      %v3954 = vmax.f32 %v3890, 0.0
      %v3955 = vmax.f32 %v3891, 0.0
      %v3956 = vpack.c.bf16 %v3893, %v3892
      %v3957 = vpack.c.bf16 %v3895, %v3894
      %v3958 = vpack.c.bf16 %v3897, %v3896
      %v3959 = vpack.c.bf16 %v3899, %v3898
      %v3960 = vpack.c.bf16 %v3901, %v3900
      %v3961 = vpack.c.bf16 %v3903, %v3902
      %v3962 = vpack.c.bf16 %v3905, %v3904
      %v3963 = vpack.c.bf16 %v3907, %v3906
      %v3964 = vpack.c.bf16 %v3909, %v3908
      %v3965 = vpack.c.bf16 %v3911, %v3910
      %v3966 = vpack.c.bf16 %v3913, %v3912
      %v3967 = vpack.c.bf16 %v3915, %v3914
      %v3968 = vpack.c.bf16 %v3917, %v3916
      %v3969 = vpack.c.bf16 %v3919, %v3918
      %v3970 = vpack.c.bf16 %v3921, %v3920
      %v3971 = vpack.c.bf16 %v3923, %v3922
      %v3972 = vpack.c.bf16 %v3925, %v3924
      %v3973 = vpack.c.bf16 %v3927, %v3926
      %v3974 = vpack.c.bf16 %v3929, %v3928
      %v3975 = vpack.c.bf16 %v3931, %v3930
      %v3976 = vpack.c.bf16 %v3933, %v3932
      %v3977 = vpack.c.bf16 %v3935, %v3934
      %v3978 = vpack.c.bf16 %v3937, %v3936
      %v3979 = vpack.c.bf16 %v3939, %v3938
      %v3980 = vpack.c.bf16 %v3941, %v3940
      %v3981 = vpack.c.bf16 %v3943, %v3942
      %v3982 = vpack.c.bf16 %v3945, %v3944
      %v3983 = vpack.c.bf16 %v3947, %v3946
      %v3984 = vpack.c.bf16 %v3949, %v3948
      %v3985 = vpack.c.bf16 %v3951, %v3950
      %v3986 = vpack.c.bf16 %v3953, %v3952
      %v3987 = vpack.c.bf16 %v3955, %v3954
      %v3988 = vld [vmem:[%s4] sm:$0xf]
      %v3989 = vld [vmem:[%s4 + $0x4] sm:$0xf]
      %v3990 = vld [vmem:[%s4 + $0x8] sm:$0xf]
      %v3991 = vld [vmem:[%s4 + $0xc] sm:$0xf]
      %v3992 = vld [vmem:[%s4 + $0x10] sm:$0xf]
      %v3993 = vld [vmem:[%s4 + $0x14] sm:$0xf]
      %v3994 = vld [vmem:[%s4 + $0x18] sm:$0xf]
      %v3995 = vld [vmem:[%s4 + $0x1c] sm:$0xf]
      %v3996 = vld [vmem:[%s4 + $0x20] sm:$0xf]
      %v3997 = vld [vmem:[%s4 + $0x24] sm:$0xf]
      %v3998 = vld [vmem:[%s4 + $0x28] sm:$0xf]
      %v3999 = vld [vmem:[%s4 + $0x2c] sm:$0xf]
      %v4000 = vld [vmem:[%s4 + $0x30] sm:$0xf]
      %v4001 = vld [vmem:[%s4 + $0x34] sm:$0xf]
      %v4002 = vld [vmem:[%s4 + $0x38] sm:$0xf]
      %v4003 = vld [vmem:[%s4 + $0x3c] sm:$0xf]
      %v4004 = vld [vmem:[%s5] sm:$0x1]
      %v4006 = vperm.slane %v4004, 0
      %v4024 = vunpack.c.l.b16 %v3988
      %v4025 = vunpack.c.l.b16 %v3989
      %v4026 = vunpack.c.l.b16 %v3990
      %v4027 = vunpack.c.l.b16 %v3991
      %v4028 = vunpack.c.l.b16 %v3992
      %v4029 = vunpack.c.l.b16 %v3993
      %v4030 = vunpack.c.l.b16 %v3994
      %v4031 = vunpack.c.l.b16 %v3995
      %v4032 = vunpack.c.l.b16 %v3996
      %v4033 = vunpack.c.l.b16 %v3997
      %v4034 = vunpack.c.l.b16 %v3998
      %v4035 = vunpack.c.l.b16 %v3999
      %v4036 = vunpack.c.l.b16 %v4000
      %v4037 = vunpack.c.l.b16 %v4001
      %v4038 = vunpack.c.l.b16 %v4002
      %v4039 = vunpack.c.l.b16 %v4003
      %v4040 = vpack.c.b16 %v4025, %v4024
      %v4041 = vpack.c.b16 %v4027, %v4026
      %v4042 = vpack.c.b16 %v4029, %v4028
      %v4043 = vpack.c.b16 %v4031, %v4030
      %v4044 = vpack.c.b16 %v4033, %v4032
      %v4045 = vpack.c.b16 %v4035, %v4034
      %v4046 = vpack.c.b16 %v4037, %v4036
      %v4047 = vpack.c.b16 %v4039, %v4038
      %4056 = vmatpush.bf16.msra.mxu0 %v4047
      %4057 = vmatpush.bf16.msra.mxu0 %v4046
      %4058 = vmatpush.bf16.msra.mxu0 %v4045
      %4059 = vmatpush.bf16.msra.mxu0 %v4044
      %4060 = vmatpush.bf16.msra.mxu0 %v4043
      %4061 = vmatpush.bf16.msra.mxu0 %v4042
      %4062 = vmatpush.bf16.msra.mxu0 %v4041
      %4063 = vmatpush.bf16.msra.mxu0 %v4040
      %4064 = vmatmul.bf16.gmra.mxu0 %v3956
      %v4065 = vpop.f32.mrf.mxu0
      %v4066 = vadd.f32 %v4006, %v4065
      %v4067 = vpop.f32.mrf.mxu0
      %v4068 = vadd.f32 %v4006, %v4067
      %4069 = vmatmul.bf16.gmra.mxu0 %v3957
      %v4070 = vpop.f32.mrf.mxu0
      %v4071 = vadd.f32 %v4006, %v4070
      %v4072 = vpop.f32.mrf.mxu0
      %v4073 = vadd.f32 %v4006, %v4072
      %4074 = vmatmul.bf16.gmra.mxu0 %v3958
      %v4075 = vpop.f32.mrf.mxu0
      %v4076 = vadd.f32 %v4006, %v4075
      %v4077 = vpop.f32.mrf.mxu0
      %v4078 = vadd.f32 %v4006, %v4077
      %4079 = vmatmul.bf16.gmra.mxu0 %v3959
      %v4080 = vpop.f32.mrf.mxu0
      %v4081 = vadd.f32 %v4006, %v4080
      %v4082 = vpop.f32.mrf.mxu0
      %v4083 = vadd.f32 %v4006, %v4082
      %4084 = vmatmul.bf16.gmra.mxu0 %v3960
      %v4085 = vpop.f32.mrf.mxu0
      %v4086 = vadd.f32 %v4006, %v4085
      %v4087 = vpop.f32.mrf.mxu0
      %v4088 = vadd.f32 %v4006, %v4087
      %4089 = vmatmul.bf16.gmra.mxu0 %v3961
      %v4090 = vpop.f32.mrf.mxu0
      %v4091 = vadd.f32 %v4006, %v4090
      %v4092 = vpop.f32.mrf.mxu0
      %v4093 = vadd.f32 %v4006, %v4092
      %4094 = vmatmul.bf16.gmra.mxu0 %v3962
      %v4095 = vpop.f32.mrf.mxu0
      %v4096 = vadd.f32 %v4006, %v4095
      %v4097 = vpop.f32.mrf.mxu0
      %v4098 = vadd.f32 %v4006, %v4097
      %4099 = vmatmul.bf16.gmra.mxu0 %v3963
      %v4100 = vpop.f32.mrf.mxu0
      %v4101 = vadd.f32 %v4006, %v4100
      %v4102 = vpop.f32.mrf.mxu0
      %v4103 = vadd.f32 %v4006, %v4102
      %4104 = vmatmul.bf16.gmra.mxu0 %v3964
      %v4105 = vpop.f32.mrf.mxu0
      %v4106 = vadd.f32 %v4006, %v4105
      %v4107 = vpop.f32.mrf.mxu0
      %v4108 = vadd.f32 %v4006, %v4107
      %4109 = vmatmul.bf16.gmra.mxu0 %v3965
      %v4110 = vpop.f32.mrf.mxu0
      %v4111 = vadd.f32 %v4006, %v4110
      %v4112 = vpop.f32.mrf.mxu0
      %v4113 = vadd.f32 %v4006, %v4112
      %4114 = vmatmul.bf16.gmra.mxu0 %v3966
      %v4115 = vpop.f32.mrf.mxu0
      %v4116 = vadd.f32 %v4006, %v4115
      %v4117 = vpop.f32.mrf.mxu0
      %v4118 = vadd.f32 %v4006, %v4117
      %4119 = vmatmul.bf16.gmra.mxu0 %v3967
      %v4120 = vpop.f32.mrf.mxu0
      %v4121 = vadd.f32 %v4006, %v4120
      %v4122 = vpop.f32.mrf.mxu0
      %v4123 = vadd.f32 %v4006, %v4122
      %4124 = vmatmul.bf16.gmra.mxu0 %v3968
      %v4125 = vpop.f32.mrf.mxu0
      %v4126 = vadd.f32 %v4006, %v4125
      %v4127 = vpop.f32.mrf.mxu0
      %v4128 = vadd.f32 %v4006, %v4127
      %4129 = vmatmul.bf16.gmra.mxu0 %v3969
      %v4130 = vpop.f32.mrf.mxu0
      %v4131 = vadd.f32 %v4006, %v4130
      %v4132 = vpop.f32.mrf.mxu0
      %v4133 = vadd.f32 %v4006, %v4132
      %4134 = vmatmul.bf16.gmra.mxu0 %v3970
      %v4135 = vpop.f32.mrf.mxu0
      %v4136 = vadd.f32 %v4006, %v4135
      %v4137 = vpop.f32.mrf.mxu0
      %v4138 = vadd.f32 %v4006, %v4137
      %4139 = vmatmul.bf16.gmra.mxu0 %v3971
      %v4140 = vpop.f32.mrf.mxu0
      %v4141 = vadd.f32 %v4006, %v4140
      %v4142 = vpop.f32.mrf.mxu0
      %v4143 = vadd.f32 %v4006, %v4142
      %4144 = vmatmul.bf16.gmra.mxu0 %v3972
      %v4145 = vpop.f32.mrf.mxu0
      %v4146 = vadd.f32 %v4006, %v4145
      %v4147 = vpop.f32.mrf.mxu0
      %v4148 = vadd.f32 %v4006, %v4147
      %4149 = vmatmul.bf16.gmra.mxu0 %v3973
      %v4150 = vpop.f32.mrf.mxu0
      %v4151 = vadd.f32 %v4006, %v4150
      %v4152 = vpop.f32.mrf.mxu0
      %v4153 = vadd.f32 %v4006, %v4152
      %4154 = vmatmul.bf16.gmra.mxu0 %v3974
      %v4155 = vpop.f32.mrf.mxu0
      %v4156 = vadd.f32 %v4006, %v4155
      %v4157 = vpop.f32.mrf.mxu0
      %v4158 = vadd.f32 %v4006, %v4157
      %4159 = vmatmul.bf16.gmra.mxu0 %v3975
      %v4160 = vpop.f32.mrf.mxu0
      %v4161 = vadd.f32 %v4006, %v4160
      %v4162 = vpop.f32.mrf.mxu0
      %v4163 = vadd.f32 %v4006, %v4162
      %4164 = vmatmul.bf16.gmra.mxu0 %v3976
      %v4165 = vpop.f32.mrf.mxu0
      %v4166 = vadd.f32 %v4006, %v4165
      %v4167 = vpop.f32.mrf.mxu0
      %v4168 = vadd.f32 %v4006, %v4167
      %4169 = vmatmul.bf16.gmra.mxu0 %v3977
      %v4170 = vpop.f32.mrf.mxu0
      %v4171 = vadd.f32 %v4006, %v4170
      %v4172 = vpop.f32.mrf.mxu0
      %v4173 = vadd.f32 %v4006, %v4172
      %4174 = vmatmul.bf16.gmra.mxu0 %v3978
      %v4175 = vpop.f32.mrf.mxu0
      %v4176 = vadd.f32 %v4006, %v4175
      %v4177 = vpop.f32.mrf.mxu0
      %v4178 = vadd.f32 %v4006, %v4177
      %4179 = vmatmul.bf16.gmra.mxu0 %v3979
      %v4180 = vpop.f32.mrf.mxu0
      %v4181 = vadd.f32 %v4006, %v4180
      %v4182 = vpop.f32.mrf.mxu0
      %v4183 = vadd.f32 %v4006, %v4182
      %4184 = vmatmul.bf16.gmra.mxu0 %v3980
      %v4185 = vpop.f32.mrf.mxu0
      %v4186 = vadd.f32 %v4006, %v4185
      %v4187 = vpop.f32.mrf.mxu0
      %v4188 = vadd.f32 %v4006, %v4187
      %4189 = vmatmul.bf16.gmra.mxu0 %v3981
      %v4190 = vpop.f32.mrf.mxu0
      %v4191 = vadd.f32 %v4006, %v4190
      %v4192 = vpop.f32.mrf.mxu0
      %v4193 = vadd.f32 %v4006, %v4192
      %4194 = vmatmul.bf16.gmra.mxu0 %v3982
      %v4195 = vpop.f32.mrf.mxu0
      %v4196 = vadd.f32 %v4006, %v4195
      %v4197 = vpop.f32.mrf.mxu0
      %v4198 = vadd.f32 %v4006, %v4197
      %4199 = vmatmul.bf16.gmra.mxu0 %v3983
      %v4200 = vpop.f32.mrf.mxu0
      %v4201 = vadd.f32 %v4006, %v4200
      %v4202 = vpop.f32.mrf.mxu0
      %v4203 = vadd.f32 %v4006, %v4202
      %4204 = vmatmul.bf16.gmra.mxu0 %v3984
      %v4205 = vpop.f32.mrf.mxu0
      %v4206 = vadd.f32 %v4006, %v4205
      %v4207 = vpop.f32.mrf.mxu0
      %v4208 = vadd.f32 %v4006, %v4207
      %4209 = vmatmul.bf16.gmra.mxu0 %v3985
      %v4210 = vpop.f32.mrf.mxu0
      %v4211 = vadd.f32 %v4006, %v4210
      %v4212 = vpop.f32.mrf.mxu0
      %v4213 = vadd.f32 %v4006, %v4212
      %4214 = vmatmul.bf16.gmra.mxu0 %v3986
      %v4215 = vpop.f32.mrf.mxu0
      %v4216 = vadd.f32 %v4006, %v4215
      %v4217 = vpop.f32.mrf.mxu0
      %v4218 = vadd.f32 %v4006, %v4217
      %4219 = vmatmul.bf16.gmra.mxu0 %v3987
      %v4220 = vpop.f32.mrf.mxu0
      %v4221 = vadd.f32 %v4006, %v4220
      %v4222 = vpop.f32.mrf.mxu0
      %v4223 = vadd.f32 %v4006, %v4222
      %4224 = vdwg.mxu0
      %4225 = vst [vmem:[%s320] sm:$0xff] %v4066
      %4226 = vst [vmem:[%s320 + $0x8] sm:$0xff] %v4068
      %4227 = vst [vmem:[%s320 + $0x10] sm:$0xff] %v4071
      %4228 = vst [vmem:[%s320 + $0x18] sm:$0xff] %v4073
      %4229 = vst [vmem:[%s320 + $0x20] sm:$0xff] %v4076
      %4230 = vst [vmem:[%s320 + $0x28] sm:$0xff] %v4078
      %4231 = vst [vmem:[%s320 + $0x30] sm:$0xff] %v4081
      %4232 = vst [vmem:[%s320 + $0x38] sm:$0xff] %v4083
      %4233 = vst [vmem:[%s320 + $0x40] sm:$0xff] %v4086
      %4234 = vst [vmem:[%s320 + $0x48] sm:$0xff] %v4088
      %4235 = vst [vmem:[%s320 + $0x50] sm:$0xff] %v4091
      %4236 = vst [vmem:[%s320 + $0x58] sm:$0xff] %v4093
      %4237 = vst [vmem:[%s320 + $0x60] sm:$0xff] %v4096
      %4238 = vst [vmem:[%s320 + $0x68] sm:$0xff] %v4098
      %4239 = vst [vmem:[%s320 + $0x70] sm:$0xff] %v4101
      %4240 = vst [vmem:[%s320 + $0x78] sm:$0xff] %v4103
      %4241 = vst [vmem:[%s320 + $0x80] sm:$0xff] %v4106
      %4242 = vst [vmem:[%s320 + $0x88] sm:$0xff] %v4108
      %4243 = vst [vmem:[%s320 + $0x90] sm:$0xff] %v4111
      %4244 = vst [vmem:[%s320 + $0x98] sm:$0xff] %v4113
      %4245 = vst [vmem:[%s320 + $0xa0] sm:$0xff] %v4116
      %4246 = vst [vmem:[%s320 + $0xa8] sm:$0xff] %v4118
      %4247 = vst [vmem:[%s320 + $0xb0] sm:$0xff] %v4121
      %4248 = vst [vmem:[%s320 + $0xb8] sm:$0xff] %v4123
      %4249 = vst [vmem:[%s320 + $0xc0] sm:$0xff] %v4126
      %4250 = vst [vmem:[%s320 + $0xc8] sm:$0xff] %v4128
      %4251 = vst [vmem:[%s320 + $0xd0] sm:$0xff] %v4131
      %4252 = vst [vmem:[%s320 + $0xd8] sm:$0xff] %v4133
      %4253 = vst [vmem:[%s320 + $0xe0] sm:$0xff] %v4136
      %4254 = vst [vmem:[%s320 + $0xe8] sm:$0xff] %v4138
      %4255 = vst [vmem:[%s320 + $0xf0] sm:$0xff] %v4141
      %4256 = vst [vmem:[%s320 + $0xf8] sm:$0xff] %v4143
      %4257 = vst [vmem:[%s320 + $0x100] sm:$0xff] %v4146
      %4258 = vst [vmem:[%s320 + $0x108] sm:$0xff] %v4148
      %4259 = vst [vmem:[%s320 + $0x110] sm:$0xff] %v4151
      %4260 = vst [vmem:[%s320 + $0x118] sm:$0xff] %v4153
      %4261 = vst [vmem:[%s320 + $0x120] sm:$0xff] %v4156
      %4262 = vst [vmem:[%s320 + $0x128] sm:$0xff] %v4158
      %4263 = vst [vmem:[%s320 + $0x130] sm:$0xff] %v4161
      %4264 = vst [vmem:[%s320 + $0x138] sm:$0xff] %v4163
      %4265 = vst [vmem:[%s320 + $0x140] sm:$0xff] %v4166
      %4266 = vst [vmem:[%s320 + $0x148] sm:$0xff] %v4168
      %4267 = vst [vmem:[%s320 + $0x150] sm:$0xff] %v4171
      %4268 = vst [vmem:[%s320 + $0x158] sm:$0xff] %v4173
      %4269 = vst [vmem:[%s320 + $0x160] sm:$0xff] %v4176
      %4270 = vst [vmem:[%s320 + $0x168] sm:$0xff] %v4178
      %4271 = vst [vmem:[%s320 + $0x170] sm:$0xff] %v4181
      %4272 = vst [vmem:[%s320 + $0x178] sm:$0xff] %v4183
      %4273 = vst [vmem:[%s320 + $0x180] sm:$0xff] %v4186
      %4274 = vst [vmem:[%s320 + $0x188] sm:$0xff] %v4188
      %4275 = vst [vmem:[%s320 + $0x190] sm:$0xff] %v4191
      %4276 = vst [vmem:[%s320 + $0x198] sm:$0xff] %v4193
      %4277 = vst [vmem:[%s320 + $0x1a0] sm:$0xff] %v4196
      %4278 = vst [vmem:[%s320 + $0x1a8] sm:$0xff] %v4198
      %4279 = vst [vmem:[%s320 + $0x1b0] sm:$0xff] %v4201
      %4280 = vst [vmem:[%s320 + $0x1b8] sm:$0xff] %v4203
      %4281 = vst [vmem:[%s320 + $0x1c0] sm:$0xff] %v4206
      %4282 = vst [vmem:[%s320 + $0x1c8] sm:$0xff] %v4208
      %4283 = vst [vmem:[%s320 + $0x1d0] sm:$0xff] %v4211
      %4284 = vst [vmem:[%s320 + $0x1d8] sm:$0xff] %v4213
      %4285 = vst [vmem:[%s320 + $0x1e0] sm:$0xff] %v4216
      %4286 = vst [vmem:[%s320 + $0x1e8] sm:$0xff] %v4218
      %4287 = vst [vmem:[%s320 + $0x1f0] sm:$0xff] %v4221
      %4288 = vst [vmem:[%s320 + $0x1f8] sm:$0xff] %v4223
      %s4289 = smul.u32 64, %s22
      %p4290 = scmp.lt.s32.totalorder %s21, 1
      %s4291 = scalar_select %p4290, %s21, 1
      %p4292 = scmp.lt.s32.totalorder %s4289, 319
      %s4293 = scalar_select %p4292, %s4289, 319
      %s4294 = smul.addr %s4291, 320
      %s4295 = sadd.s32 %s4293, %s4294
      %s4296 = smul.addr %s4295, 8
      %s4297 = scalar_lea.vmem %s6, %s4296
      // Predicated region
      $region45: #{_lraspp_forward.3} parent=43 // pred_check
        %p4298 = pneg %p192
      $region46: #{_lraspp_forward.3} parent=43 // pred_check_branch
        %4300 = sbr.rel (%p4298) target = $region48
      $region47: #{_lraspp_forward.3} parent=43 // pred_region
        %s4301 = smul.u32 64, %s22
      $region48: #{_lraspp_forward.3} parent=43 // pred_fallthru
        _
    $region44: #{_lraspp_forward.3} parent=5 // pred_fallthru
      _
    %p4302 = scmp.le.s32.totalorder 2, %s12
    // Predicated region
    $region49: #{_lraspp_forward.3} parent=5 // pred_check
      %p4303 = pneg %p4302
    $region50: #{_lraspp_forward.3} parent=5 // pred_check_branch
      %4305 = sbr.rel (%p4303) target = $region52
    $region51: #{_lraspp_forward.3} parent=5 // pred_region
      %s4306 = ssub.s32 %s12, 2
      // Predicated region
      $region53: #{_lraspp_forward.3} parent=51 // pred_check
        %p4307 = pneg %p198
      $region54: #{_lraspp_forward.3} parent=51 // pred_check_branch
        %4309 = sbr.rel (%p4307) target = $region56
      $region55: #{_lraspp_forward.3} parent=51 // pred_region
        %s4310 = smul.u32 64, %s24
        %p4311 = scmp.lt.s32.totalorder %s23, 1
        %s4312 = scalar_select %p4311, %s23, 1
        %p4313 = scmp.lt.s32.totalorder %s4310, 319
        %s4314 = scalar_select %p4313, %s4310, 319
        %s4315 = smul.addr %s4312, 320
        %s4316 = sadd.s32 %s4314, %s4315
        %s4317 = smul.addr %s4316, 8
        %s4318 = scalar_lea.vmem %s6, %s4317
      $region56: #{_lraspp_forward.3} parent=51 // pred_fallthru
        _
    $region52: #{_lraspp_forward.3} parent=5 // pred_fallthru
      _
  $region6: #{_lraspp_forward.3} parent=0 // loop_footer
    %s16 = sadd.s32 1, %s12
  $region7: #{_lraspp_forward.3} parent=0 // loop_footer_branch
    %11 = sbr.rel target = $region3
  $region8: #{_lraspp_forward.3} parent=0 // loop_exit
    _

// kernel: _lraspp_forward.4
$region0: #{_lraspp_forward.4}
  #allocation0 [shape = 'u32[]', space=smem, size = 0x4, offset = 0x4, fixed_abs, tag = 'smem constant byte address 0x4 - core index']
  #allocation1 [shape = 'u32[72,128]{1,0:T(1,128)}', space=vmem, size = 0x9000, scoped, tag = 'internal scratch']
  %s0 = inlined_call_operand.vmem [shape: bf16[512,128], index: 0, kind: input, shape index: {}]
  %s1 = inlined_call_operand.vmem [shape: f32[512,24], index: 1, kind: input, shape index: {}]
  %s2 = inlined_call_operand.vmem [shape: bf16[128,128], index: 2, kind: input, shape index: {}]
  %s3 = inlined_call_operand.vmem [shape: f32[24,128], index: 3, kind: input, shape index: {}]
  %s4 = inlined_call_operand.vmem [shape: f32[1,128], index: 4, kind: input, shape index: {}]
  %s5 = inlined_call_operand.vmem [shape: f32[1,128], index: 5, kind: input, shape index: {}]
  %s6 = inlined_call_operand.vmem [shape: f32[512,128], index: 6, kind: output, shape index: {}]
  %s7 = sld [smem:[#allocation0]]
  $region34: #{_lraspp_forward.4} parent=0
    _
  %s9 = ssub.s32 1, %s7
  %s10 = scalar_select 0, %s9, %s7
  // Predicated region
  $region2: #{_lraspp_forward.4} parent=0 // pred_check
    _
  $region3: #{_lraspp_forward.4} parent=0 // pred_check_branch
    %12 = sbr.rel (0) target = $region5
  $region4: #{_lraspp_forward.4} parent=0 // pred_region
    _
  $region5: #{_lraspp_forward.4} parent=0 // pred_fallthru
    _
  // Predicated region
  $region6: #{_lraspp_forward.4} parent=0 // pred_check
    _
  $region7: #{_lraspp_forward.4} parent=0 // pred_check_branch
    %14 = sbr.rel (0) target = $region9
  $region8: #{_lraspp_forward.4} parent=0 // pred_region
    _
  $region9: #{_lraspp_forward.4} parent=0 // pred_fallthru
    _
  // Predicated region
  $region10: #{_lraspp_forward.4} parent=0 // pred_check
    _
  $region11: #{_lraspp_forward.4} parent=0 // pred_check_branch
    %16 = sbr.rel (0) target = $region13
  $region12: #{_lraspp_forward.4} parent=0 // pred_region
    _
  $region13: #{_lraspp_forward.4} parent=0 // pred_fallthru
    _
  // Predicated region
  $region14: #{_lraspp_forward.4} parent=0 // pred_check
    _
  $region15: #{_lraspp_forward.4} parent=0 // pred_check_branch
    %18 = sbr.rel (0) target = $region17
  $region16: #{_lraspp_forward.4} parent=0 // pred_region
    _
  $region17: #{_lraspp_forward.4} parent=0 // pred_fallthru
    _
  // Predicated region
  $region18: #{_lraspp_forward.4} parent=0 // pred_check
    _
  $region19: #{_lraspp_forward.4} parent=0 // pred_check_branch
    %20 = sbr.rel (0) target = $region21
  $region20: #{_lraspp_forward.4} parent=0 // pred_region
    _
  $region21: #{_lraspp_forward.4} parent=0 // pred_fallthru
    _
  // Predicated region
  $region22: #{_lraspp_forward.4} parent=0 // pred_check
    _
  $region23: #{_lraspp_forward.4} parent=0 // pred_check_branch
    %22 = sbr.rel (0) target = $region25
  $region24: #{_lraspp_forward.4} parent=0 // pred_region
    _
  $region25: #{_lraspp_forward.4} parent=0 // pred_fallthru
    _
  %v23 = vld [vmem:[%s0] sm:$0xf]
  %v24 = vld [vmem:[%s0 + $0x4] sm:$0xf]
  %v25 = vld [vmem:[%s0 + $0x8] sm:$0xf]
  %v26 = vld [vmem:[%s0 + $0xc] sm:$0xf]
  %v27 = vld [vmem:[%s0 + $0x10] sm:$0xf]
  %v28 = vld [vmem:[%s0 + $0x14] sm:$0xf]
  %v29 = vld [vmem:[%s0 + $0x18] sm:$0xf]
  %v30 = vld [vmem:[%s0 + $0x1c] sm:$0xf]
  %v31 = vld [vmem:[%s0 + $0x20] sm:$0xf]
  %v32 = vld [vmem:[%s0 + $0x24] sm:$0xf]
  %v33 = vld [vmem:[%s0 + $0x28] sm:$0xf]
  %v34 = vld [vmem:[%s0 + $0x2c] sm:$0xf]
  %v35 = vld [vmem:[%s0 + $0x30] sm:$0xf]
  %v36 = vld [vmem:[%s0 + $0x34] sm:$0xf]
  %v37 = vld [vmem:[%s0 + $0x38] sm:$0xf]
  %v38 = vld [vmem:[%s0 + $0x3c] sm:$0xf]
  %v39 = vld [vmem:[%s0 + $0x40] sm:$0xf]
  %v40 = vld [vmem:[%s0 + $0x44] sm:$0xf]
  %v41 = vld [vmem:[%s0 + $0x48] sm:$0xf]
  %v42 = vld [vmem:[%s0 + $0x4c] sm:$0xf]
  %v43 = vld [vmem:[%s0 + $0x50] sm:$0xf]
  %v44 = vld [vmem:[%s0 + $0x54] sm:$0xf]
  %v45 = vld [vmem:[%s0 + $0x58] sm:$0xf]
  %v46 = vld [vmem:[%s0 + $0x5c] sm:$0xf]
  %v47 = vld [vmem:[%s0 + $0x60] sm:$0xf]
  %v48 = vld [vmem:[%s0 + $0x64] sm:$0xf]
  %v49 = vld [vmem:[%s0 + $0x68] sm:$0xf]
  %v50 = vld [vmem:[%s0 + $0x6c] sm:$0xf]
  %v51 = vld [vmem:[%s0 + $0x70] sm:$0xf]
  %v52 = vld [vmem:[%s0 + $0x74] sm:$0xf]
  %v53 = vld [vmem:[%s0 + $0x78] sm:$0xf]
  %v54 = vld [vmem:[%s0 + $0x7c] sm:$0xf]
  %v55 = vld [vmem:[%s0 + $0x80] sm:$0xf]
  %v56 = vld [vmem:[%s0 + $0x84] sm:$0xf]
  %v57 = vld [vmem:[%s0 + $0x88] sm:$0xf]
  %v58 = vld [vmem:[%s0 + $0x8c] sm:$0xf]
  %v59 = vld [vmem:[%s0 + $0x90] sm:$0xf]
  %v60 = vld [vmem:[%s0 + $0x94] sm:$0xf]
  %v61 = vld [vmem:[%s0 + $0x98] sm:$0xf]
  %v62 = vld [vmem:[%s0 + $0x9c] sm:$0xf]
  %v63 = vld [vmem:[%s0 + $0xa0] sm:$0xf]
  %v64 = vld [vmem:[%s0 + $0xa4] sm:$0xf]
  %v65 = vld [vmem:[%s0 + $0xa8] sm:$0xf]
  %v66 = vld [vmem:[%s0 + $0xac] sm:$0xf]
  %v67 = vld [vmem:[%s0 + $0xb0] sm:$0xf]
  %v68 = vld [vmem:[%s0 + $0xb4] sm:$0xf]
  %v69 = vld [vmem:[%s0 + $0xb8] sm:$0xf]
  %v70 = vld [vmem:[%s0 + $0xbc] sm:$0xf]
  %v71 = vld [vmem:[%s0 + $0xc0] sm:$0xf]
  %v72 = vld [vmem:[%s0 + $0xc4] sm:$0xf]
  %v73 = vld [vmem:[%s0 + $0xc8] sm:$0xf]
  %v74 = vld [vmem:[%s0 + $0xcc] sm:$0xf]
  %v75 = vld [vmem:[%s0 + $0xd0] sm:$0xf]
  %v76 = vld [vmem:[%s0 + $0xd4] sm:$0xf]
  %v77 = vld [vmem:[%s0 + $0xd8] sm:$0xf]
  %v78 = vld [vmem:[%s0 + $0xdc] sm:$0xf]
  %v79 = vld [vmem:[%s0 + $0xe0] sm:$0xf]
  %v80 = vld [vmem:[%s0 + $0xe4] sm:$0xf]
  %v81 = vld [vmem:[%s0 + $0xe8] sm:$0xf]
  %v82 = vld [vmem:[%s0 + $0xec] sm:$0xf]
  %v83 = vld [vmem:[%s0 + $0xf0] sm:$0xf]
  %v84 = vld [vmem:[%s0 + $0xf4] sm:$0xf]
  %v85 = vld [vmem:[%s0 + $0xf8] sm:$0xf]
  %v86 = vld [vmem:[%s0 + $0xfc] sm:$0xf]
  %v87 = vld [vmem:[%s2] sm:$0xf]
  %v88 = vld [vmem:[%s2 + $0x4] sm:$0xf]
  %v89 = vld [vmem:[%s2 + $0x8] sm:$0xf]
  %v90 = vld [vmem:[%s2 + $0xc] sm:$0xf]
  %v91 = vld [vmem:[%s2 + $0x10] sm:$0xf]
  %v92 = vld [vmem:[%s2 + $0x14] sm:$0xf]
  %v93 = vld [vmem:[%s2 + $0x18] sm:$0xf]
  %v94 = vld [vmem:[%s2 + $0x1c] sm:$0xf]
  %v95 = vld [vmem:[%s2 + $0x20] sm:$0xf]
  %v96 = vld [vmem:[%s2 + $0x24] sm:$0xf]
  %v97 = vld [vmem:[%s2 + $0x28] sm:$0xf]
  %v98 = vld [vmem:[%s2 + $0x2c] sm:$0xf]
  %v99 = vld [vmem:[%s2 + $0x30] sm:$0xf]
  %v100 = vld [vmem:[%s2 + $0x34] sm:$0xf]
  %v101 = vld [vmem:[%s2 + $0x38] sm:$0xf]
  %v102 = vld [vmem:[%s2 + $0x3c] sm:$0xf]
  %v103 = vld [vmem:[%s1] sm:$0xff]
  %v104 = vld [vmem:[%s1 + $0x8] sm:$0xff]
  %v105 = vld [vmem:[%s1 + $0x10] sm:$0xff]
  %v106 = vld [vmem:[%s1 + $0x18] sm:$0xff]
  %v107 = vld [vmem:[%s1 + $0x20] sm:$0xff]
  %v108 = vld [vmem:[%s1 + $0x28] sm:$0xff]
  %v109 = vld [vmem:[%s1 + $0x30] sm:$0xff]
  %v110 = vld [vmem:[%s1 + $0x38] sm:$0xff]
  %v111 = vld [vmem:[%s1 + $0x40] sm:$0xff]
  %v112 = vld [vmem:[%s1 + $0x48] sm:$0xff]
  %v113 = vld [vmem:[%s1 + $0x50] sm:$0xff]
  %v114 = vld [vmem:[%s1 + $0x58] sm:$0xff]
  %v115 = vld [vmem:[%s1 + $0x60] sm:$0xff]
  %v116 = vld [vmem:[%s1 + $0x68] sm:$0xff]
  %v117 = vld [vmem:[%s1 + $0x70] sm:$0xff]
  %v118 = vld [vmem:[%s1 + $0x78] sm:$0xff]
  %v119 = vld [vmem:[%s1 + $0x80] sm:$0xff]
  %v120 = vld [vmem:[%s1 + $0x88] sm:$0xff]
  %v121 = vld [vmem:[%s1 + $0x90] sm:$0xff]
  %v122 = vld [vmem:[%s1 + $0x98] sm:$0xff]
  %v123 = vld [vmem:[%s1 + $0xa0] sm:$0xff]
  %v124 = vld [vmem:[%s1 + $0xa8] sm:$0xff]
  %v125 = vld [vmem:[%s1 + $0xb0] sm:$0xff]
  %v126 = vld [vmem:[%s1 + $0xb8] sm:$0xff]
  %v127 = vld [vmem:[%s1 + $0xc0] sm:$0xff]
  %v128 = vld [vmem:[%s1 + $0xc8] sm:$0xff]
  %v129 = vld [vmem:[%s1 + $0xd0] sm:$0xff]
  %v130 = vld [vmem:[%s1 + $0xd8] sm:$0xff]
  %v131 = vld [vmem:[%s1 + $0xe0] sm:$0xff]
  %v132 = vld [vmem:[%s1 + $0xe8] sm:$0xff]
  %v133 = vld [vmem:[%s1 + $0xf0] sm:$0xff]
  %v134 = vld [vmem:[%s1 + $0xf8] sm:$0xff]
  %v135 = vld [vmem:[%s1 + $0x100] sm:$0xff]
  %v136 = vld [vmem:[%s1 + $0x108] sm:$0xff]
  %v137 = vld [vmem:[%s1 + $0x110] sm:$0xff]
  %v138 = vld [vmem:[%s1 + $0x118] sm:$0xff]
  %v139 = vld [vmem:[%s1 + $0x120] sm:$0xff]
  %v140 = vld [vmem:[%s1 + $0x128] sm:$0xff]
  %v141 = vld [vmem:[%s1 + $0x130] sm:$0xff]
  %v142 = vld [vmem:[%s1 + $0x138] sm:$0xff]
  %v143 = vld [vmem:[%s1 + $0x140] sm:$0xff]
  %v144 = vld [vmem:[%s1 + $0x148] sm:$0xff]
  %v145 = vld [vmem:[%s1 + $0x150] sm:$0xff]
  %v146 = vld [vmem:[%s1 + $0x158] sm:$0xff]
  %v147 = vld [vmem:[%s1 + $0x160] sm:$0xff]
  %v148 = vld [vmem:[%s1 + $0x168] sm:$0xff]
  %v149 = vld [vmem:[%s1 + $0x170] sm:$0xff]
  %v150 = vld [vmem:[%s1 + $0x178] sm:$0xff]
  %v151 = vld [vmem:[%s1 + $0x180] sm:$0xff]
  %v152 = vld [vmem:[%s1 + $0x188] sm:$0xff]
  %v153 = vld [vmem:[%s1 + $0x190] sm:$0xff]
  %v154 = vld [vmem:[%s1 + $0x198] sm:$0xff]
  %v155 = vld [vmem:[%s1 + $0x1a0] sm:$0xff]
  %v156 = vld [vmem:[%s1 + $0x1a8] sm:$0xff]
  %v157 = vld [vmem:[%s1 + $0x1b0] sm:$0xff]
  %v158 = vld [vmem:[%s1 + $0x1b8] sm:$0xff]
  %v159 = vld [vmem:[%s1 + $0x1c0] sm:$0xff]
  %v160 = vld [vmem:[%s1 + $0x1c8] sm:$0xff]
  %v161 = vld [vmem:[%s1 + $0x1d0] sm:$0xff]
  %v162 = vld [vmem:[%s1 + $0x1d8] sm:$0xff]
  %v163 = vld [vmem:[%s1 + $0x1e0] sm:$0xff]
  %v164 = vld [vmem:[%s1 + $0x1e8] sm:$0xff]
  %v165 = vld [vmem:[%s1 + $0x1f0] sm:$0xff]
  %v166 = vld [vmem:[%s1 + $0x1f8] sm:$0xff]
  %v167 = vld [vmem:[%s3] sm:$0xff]
  %v168 = vld [vmem:[%s3 + $0x8] sm:$0xff]
  %v169 = vld [vmem:[%s3 + $0x10] sm:$0xff]
  %vm170 = vcmask 195584
  %v172 = vsel %vm170, %v103, 0
  %v175 = vsel %vm170, %v104, 0
  %v178 = vsel %vm170, %v105, 0
  %v181 = vsel %vm170, %v106, 0
  %v184 = vsel %vm170, %v107, 0
  %v187 = vsel %vm170, %v108, 0
  %v190 = vsel %vm170, %v109, 0
  %v193 = vsel %vm170, %v110, 0
  %v196 = vsel %vm170, %v111, 0
  %v199 = vsel %vm170, %v112, 0
  %v202 = vsel %vm170, %v113, 0
  %v205 = vsel %vm170, %v114, 0
  %v208 = vsel %vm170, %v115, 0
  %v211 = vsel %vm170, %v116, 0
  %v214 = vsel %vm170, %v117, 0
  %v217 = vsel %vm170, %v118, 0
  %v220 = vsel %vm170, %v119, 0
  %v223 = vsel %vm170, %v120, 0
  %v226 = vsel %vm170, %v121, 0
  %v229 = vsel %vm170, %v122, 0
  %v232 = vsel %vm170, %v123, 0
  %v235 = vsel %vm170, %v124, 0
  %v238 = vsel %vm170, %v125, 0
  %v241 = vsel %vm170, %v126, 0
  %v244 = vsel %vm170, %v127, 0
  %v247 = vsel %vm170, %v128, 0
  %v250 = vsel %vm170, %v129, 0
  %v253 = vsel %vm170, %v130, 0
  %v256 = vsel %vm170, %v131, 0
  %v259 = vsel %vm170, %v132, 0
  %v262 = vsel %vm170, %v133, 0
  %v265 = vsel %vm170, %v134, 0
  %v268 = vsel %vm170, %v135, 0
  %v271 = vsel %vm170, %v136, 0
  %v274 = vsel %vm170, %v137, 0
  %v277 = vsel %vm170, %v138, 0
  %v280 = vsel %vm170, %v139, 0
  %v283 = vsel %vm170, %v140, 0
  %v286 = vsel %vm170, %v141, 0
  %v289 = vsel %vm170, %v142, 0
  %v292 = vsel %vm170, %v143, 0
  %v295 = vsel %vm170, %v144, 0
  %v298 = vsel %vm170, %v145, 0
  %v301 = vsel %vm170, %v146, 0
  %v304 = vsel %vm170, %v147, 0
  %v307 = vsel %vm170, %v148, 0
  %v310 = vsel %vm170, %v149, 0
  %v313 = vsel %vm170, %v150, 0
  %v316 = vsel %vm170, %v151, 0
  %v319 = vsel %vm170, %v152, 0
  %v322 = vsel %vm170, %v153, 0
  %v325 = vsel %vm170, %v154, 0
  %v328 = vsel %vm170, %v155, 0
  %v331 = vsel %vm170, %v156, 0
  %v334 = vsel %vm170, %v157, 0
  %v337 = vsel %vm170, %v158, 0
  %v340 = vsel %vm170, %v159, 0
  %v343 = vsel %vm170, %v160, 0
  %v346 = vsel %vm170, %v161, 0
  %v349 = vsel %vm170, %v162, 0
  %v352 = vsel %vm170, %v163, 0
  %v355 = vsel %vm170, %v164, 0
  %v358 = vsel %vm170, %v165, 0
  %v361 = vsel %vm170, %v166, 0
  %363 = vmatpush.msra.mxu0 0.0
  %364 = vmatpush.msra.mxu0 0.0
  %365 = vmatpush.msra.mxu0 0.0
  %366 = vmatpush.msra.mxu0 0.0
  %367 = vmatpush.msra.mxu0 0.0
  %368 = vmatpush.msra.mxu0 0.0
  %369 = vmatpush.msra.mxu0 0.0
  %370 = vmatpush.msra.mxu0 0.0
  %371 = vmatpush.msra.mxu0 0.0
  %372 = vmatpush.msra.mxu0 0.0
  %373 = vmatpush.msra.mxu0 0.0
  %374 = vmatpush.msra.mxu0 0.0
  %375 = vmatpush.msra.mxu0 0.0
  %376 = vmatpush.msra.mxu0 %v169
  %377 = vmatpush.msra.mxu0 %v168
  %378 = vmatpush.msra.mxu0 %v167
  %379 = vmatmul.f32.gmra.mxu0 %v172
  %v380 = vpop.f32.mrf.mxu0
  %v381 = vadd.f32 0.0, %v380
  %382 = vmatmul.f32.gmra.mxu0 %v175
  %v383 = vpop.f32.mrf.mxu0
  %v384 = vadd.f32 0.0, %v383
  %385 = vmatmul.f32.gmra.mxu0 %v178
  %v386 = vpop.f32.mrf.mxu0
  %v387 = vadd.f32 0.0, %v386
  %388 = vmatmul.f32.gmra.mxu0 %v181
  %v389 = vpop.f32.mrf.mxu0
  %v390 = vadd.f32 0.0, %v389
  %391 = vmatmul.f32.gmra.mxu0 %v184
  %v392 = vpop.f32.mrf.mxu0
  %v393 = vadd.f32 0.0, %v392
  %394 = vmatmul.f32.gmra.mxu0 %v187
  %v395 = vpop.f32.mrf.mxu0
  %v396 = vadd.f32 0.0, %v395
  %397 = vmatmul.f32.gmra.mxu0 %v190
  %v398 = vpop.f32.mrf.mxu0
  %v399 = vadd.f32 0.0, %v398
  %400 = vmatmul.f32.gmra.mxu0 %v193
  %v401 = vpop.f32.mrf.mxu0
  %v402 = vadd.f32 0.0, %v401
  %403 = vmatmul.f32.gmra.mxu0 %v196
  %v404 = vpop.f32.mrf.mxu0
  %v405 = vadd.f32 0.0, %v404
  %406 = vmatmul.f32.gmra.mxu0 %v199
  %v407 = vpop.f32.mrf.mxu0
  %v408 = vadd.f32 0.0, %v407
  %409 = vmatmul.f32.gmra.mxu0 %v202
  %v410 = vpop.f32.mrf.mxu0
  %v411 = vadd.f32 0.0, %v410
  %412 = vmatmul.f32.gmra.mxu0 %v205
  %v413 = vpop.f32.mrf.mxu0
  %v414 = vadd.f32 0.0, %v413
  %415 = vmatmul.f32.gmra.mxu0 %v208
  %v416 = vpop.f32.mrf.mxu0
  %v417 = vadd.f32 0.0, %v416
  %418 = vmatmul.f32.gmra.mxu0 %v211
  %v419 = vpop.f32.mrf.mxu0
  %v420 = vadd.f32 0.0, %v419
  %421 = vmatmul.f32.gmra.mxu0 %v214
  %v422 = vpop.f32.mrf.mxu0
  %v423 = vadd.f32 0.0, %v422
  %424 = vmatmul.f32.gmra.mxu0 %v217
  %v425 = vpop.f32.mrf.mxu0
  %v426 = vadd.f32 0.0, %v425
  %427 = vmatmul.f32.gmra.mxu0 %v220
  %v428 = vpop.f32.mrf.mxu0
  %v429 = vadd.f32 0.0, %v428
  %430 = vmatmul.f32.gmra.mxu0 %v223
  %v431 = vpop.f32.mrf.mxu0
  %v432 = vadd.f32 0.0, %v431
  %433 = vmatmul.f32.gmra.mxu0 %v226
  %v434 = vpop.f32.mrf.mxu0
  %v435 = vadd.f32 0.0, %v434
  %436 = vmatmul.f32.gmra.mxu0 %v229
  %v437 = vpop.f32.mrf.mxu0
  %v438 = vadd.f32 0.0, %v437
  %439 = vmatmul.f32.gmra.mxu0 %v232
  %v440 = vpop.f32.mrf.mxu0
  %v441 = vadd.f32 0.0, %v440
  %442 = vmatmul.f32.gmra.mxu0 %v235
  %v443 = vpop.f32.mrf.mxu0
  %v444 = vadd.f32 0.0, %v443
  %445 = vmatmul.f32.gmra.mxu0 %v238
  %v446 = vpop.f32.mrf.mxu0
  %v447 = vadd.f32 0.0, %v446
  %448 = vmatmul.f32.gmra.mxu0 %v241
  %v449 = vpop.f32.mrf.mxu0
  %v450 = vadd.f32 0.0, %v449
  %451 = vmatmul.f32.gmra.mxu0 %v244
  %v452 = vpop.f32.mrf.mxu0
  %v453 = vadd.f32 0.0, %v452
  %454 = vmatmul.f32.gmra.mxu0 %v247
  %v455 = vpop.f32.mrf.mxu0
  %v456 = vadd.f32 0.0, %v455
  %457 = vmatmul.f32.gmra.mxu0 %v250
  %v458 = vpop.f32.mrf.mxu0
  %v459 = vadd.f32 0.0, %v458
  %460 = vmatmul.f32.gmra.mxu0 %v253
  %v461 = vpop.f32.mrf.mxu0
  %v462 = vadd.f32 0.0, %v461
  %463 = vmatmul.f32.gmra.mxu0 %v256
  %v464 = vpop.f32.mrf.mxu0
  %v465 = vadd.f32 0.0, %v464
  %466 = vmatmul.f32.gmra.mxu0 %v259
  %v467 = vpop.f32.mrf.mxu0
  %v468 = vadd.f32 0.0, %v467
  %469 = vmatmul.f32.gmra.mxu0 %v262
  %v470 = vpop.f32.mrf.mxu0
  %v471 = vadd.f32 0.0, %v470
  %472 = vmatmul.f32.gmra.mxu0 %v265
  %v473 = vpop.f32.mrf.mxu0
  %v474 = vadd.f32 0.0, %v473
  %475 = vmatmul.f32.gmra.mxu0 %v268
  %v476 = vpop.f32.mrf.mxu0
  %v477 = vadd.f32 0.0, %v476
  %478 = vmatmul.f32.gmra.mxu0 %v271
  %v479 = vpop.f32.mrf.mxu0
  %v480 = vadd.f32 0.0, %v479
  %481 = vmatmul.f32.gmra.mxu0 %v274
  %v482 = vpop.f32.mrf.mxu0
  %v483 = vadd.f32 0.0, %v482
  %484 = vmatmul.f32.gmra.mxu0 %v277
  %v485 = vpop.f32.mrf.mxu0
  %v486 = vadd.f32 0.0, %v485
  %487 = vmatmul.f32.gmra.mxu0 %v280
  %v488 = vpop.f32.mrf.mxu0
  %v489 = vadd.f32 0.0, %v488
  %490 = vmatmul.f32.gmra.mxu0 %v283
  %v491 = vpop.f32.mrf.mxu0
  %v492 = vadd.f32 0.0, %v491
  %493 = vmatmul.f32.gmra.mxu0 %v286
  %v494 = vpop.f32.mrf.mxu0
  %v495 = vadd.f32 0.0, %v494
  %496 = vmatmul.f32.gmra.mxu0 %v289
  %v497 = vpop.f32.mrf.mxu0
  %v498 = vadd.f32 0.0, %v497
  %499 = vmatmul.f32.gmra.mxu0 %v292
  %v500 = vpop.f32.mrf.mxu0
  %v501 = vadd.f32 0.0, %v500
  %502 = vmatmul.f32.gmra.mxu0 %v295
  %v503 = vpop.f32.mrf.mxu0
  %v504 = vadd.f32 0.0, %v503
  %505 = vmatmul.f32.gmra.mxu0 %v298
  %v506 = vpop.f32.mrf.mxu0
  %v507 = vadd.f32 0.0, %v506
  %508 = vmatmul.f32.gmra.mxu0 %v301
  %v509 = vpop.f32.mrf.mxu0
  %v510 = vadd.f32 0.0, %v509
  %511 = vmatmul.f32.gmra.mxu0 %v304
  %v512 = vpop.f32.mrf.mxu0
  %v513 = vadd.f32 0.0, %v512
  %514 = vmatmul.f32.gmra.mxu0 %v307
  %v515 = vpop.f32.mrf.mxu0
  %v516 = vadd.f32 0.0, %v515
  %517 = vmatmul.f32.gmra.mxu0 %v310
  %v518 = vpop.f32.mrf.mxu0
  %v519 = vadd.f32 0.0, %v518
  %520 = vmatmul.f32.gmra.mxu0 %v313
  %v521 = vpop.f32.mrf.mxu0
  %v522 = vadd.f32 0.0, %v521
  %523 = vmatmul.f32.gmra.mxu0 %v316
  %v524 = vpop.f32.mrf.mxu0
  %v525 = vadd.f32 0.0, %v524
  %526 = vmatmul.f32.gmra.mxu0 %v319
  %v527 = vpop.f32.mrf.mxu0
  %v528 = vadd.f32 0.0, %v527
  %529 = vmatmul.f32.gmra.mxu0 %v322
  %v530 = vpop.f32.mrf.mxu0
  %v531 = vadd.f32 0.0, %v530
  %532 = vmatmul.f32.gmra.mxu0 %v325
  %v533 = vpop.f32.mrf.mxu0
  %v534 = vadd.f32 0.0, %v533
  %535 = vmatmul.f32.gmra.mxu0 %v328
  %v536 = vpop.f32.mrf.mxu0
  %v537 = vadd.f32 0.0, %v536
  %538 = vmatmul.f32.gmra.mxu0 %v331
  %v539 = vpop.f32.mrf.mxu0
  %v540 = vadd.f32 0.0, %v539
  %541 = vmatmul.f32.gmra.mxu0 %v334
  %v542 = vpop.f32.mrf.mxu0
  %v543 = vadd.f32 0.0, %v542
  %544 = vmatmul.f32.gmra.mxu0 %v337
  %v545 = vpop.f32.mrf.mxu0
  %v546 = vadd.f32 0.0, %v545
  %547 = vmatmul.f32.gmra.mxu0 %v340
  %v548 = vpop.f32.mrf.mxu0
  %v549 = vadd.f32 0.0, %v548
  %550 = vmatmul.f32.gmra.mxu0 %v343
  %v551 = vpop.f32.mrf.mxu0
  %v552 = vadd.f32 0.0, %v551
  %553 = vmatmul.f32.gmra.mxu0 %v346
  %v554 = vpop.f32.mrf.mxu0
  %v555 = vadd.f32 0.0, %v554
  %556 = vmatmul.f32.gmra.mxu0 %v349
  %v557 = vpop.f32.mrf.mxu0
  %v558 = vadd.f32 0.0, %v557
  %559 = vmatmul.f32.gmra.mxu0 %v352
  %v560 = vpop.f32.mrf.mxu0
  %v561 = vadd.f32 0.0, %v560
  %562 = vmatmul.f32.gmra.mxu0 %v355
  %v563 = vpop.f32.mrf.mxu0
  %v564 = vadd.f32 0.0, %v563
  %565 = vmatmul.f32.gmra.mxu0 %v358
  %v566 = vpop.f32.mrf.mxu0
  %v567 = vadd.f32 0.0, %v566
  %568 = vmatmul.f32.gmra.mxu0 %v361
  %v569 = vpop.f32.mrf.mxu0
  %v570 = vadd.f32 0.0, %v569
  %571 = vdwg.mxu0
  %v636 = vunpack.c.l.b16 %v23
  %v637 = vunpack.c.l.b16 %v24
  %v638 = vunpack.c.l.b16 %v25
  %v639 = vunpack.c.l.b16 %v26
  %v640 = vunpack.c.l.b16 %v27
  %v641 = vunpack.c.l.b16 %v28
  %v642 = vunpack.c.l.b16 %v29
  %v643 = vunpack.c.l.b16 %v30
  %v644 = vunpack.c.l.b16 %v31
  %v645 = vunpack.c.l.b16 %v32
  %v646 = vunpack.c.l.b16 %v33
  %v647 = vunpack.c.l.b16 %v34
  %v648 = vunpack.c.l.b16 %v35
  %v649 = vunpack.c.l.b16 %v36
  %v650 = vunpack.c.l.b16 %v37
  %v651 = vunpack.c.l.b16 %v38
  %v652 = vunpack.c.l.b16 %v39
  %v653 = vunpack.c.l.b16 %v40
  %v654 = vunpack.c.l.b16 %v41
  %v655 = vunpack.c.l.b16 %v42
  %v656 = vunpack.c.l.b16 %v43
  %v657 = vunpack.c.l.b16 %v44
  %v658 = vunpack.c.l.b16 %v45
  %v659 = vunpack.c.l.b16 %v46
  %v660 = vunpack.c.l.b16 %v47
  %v661 = vunpack.c.l.b16 %v48
  %v662 = vunpack.c.l.b16 %v49
  %v663 = vunpack.c.l.b16 %v50
  %v664 = vunpack.c.l.b16 %v51
  %v665 = vunpack.c.l.b16 %v52
  %v666 = vunpack.c.l.b16 %v53
  %v667 = vunpack.c.l.b16 %v54
  %v668 = vunpack.c.l.b16 %v55
  %v669 = vunpack.c.l.b16 %v56
  %v670 = vunpack.c.l.b16 %v57
  %v671 = vunpack.c.l.b16 %v58
  %v672 = vunpack.c.l.b16 %v59
  %v673 = vunpack.c.l.b16 %v60
  %v674 = vunpack.c.l.b16 %v61
  %v675 = vunpack.c.l.b16 %v62
  %v676 = vunpack.c.l.b16 %v63
  %v677 = vunpack.c.l.b16 %v64
  %v678 = vunpack.c.l.b16 %v65
  %v679 = vunpack.c.l.b16 %v66
  %v680 = vunpack.c.l.b16 %v67
  %v681 = vunpack.c.l.b16 %v68
  %v682 = vunpack.c.l.b16 %v69
  %v683 = vunpack.c.l.b16 %v70
  %v684 = vunpack.c.l.b16 %v71
  %v685 = vunpack.c.l.b16 %v72
  %v686 = vunpack.c.l.b16 %v73
  %v687 = vunpack.c.l.b16 %v74
  %v688 = vunpack.c.l.b16 %v75
  %v689 = vunpack.c.l.b16 %v76
  %v690 = vunpack.c.l.b16 %v77
  %v691 = vunpack.c.l.b16 %v78
  %v692 = vunpack.c.l.b16 %v79
  %v693 = vunpack.c.l.b16 %v80
  %v694 = vunpack.c.l.b16 %v81
  %v695 = vunpack.c.l.b16 %v82
  %v696 = vunpack.c.l.b16 %v83
  %v697 = vunpack.c.l.b16 %v84
  %v698 = vunpack.c.l.b16 %v85
  %v699 = vunpack.c.l.b16 %v86
  %v700 = vpack.c.b16 %v637, %v636
  %v701 = vpack.c.b16 %v639, %v638
  %v702 = vpack.c.b16 %v641, %v640
  %v703 = vpack.c.b16 %v643, %v642
  %v704 = vpack.c.b16 %v645, %v644
  %v705 = vpack.c.b16 %v647, %v646
  %v706 = vpack.c.b16 %v649, %v648
  %v707 = vpack.c.b16 %v651, %v650
  %v708 = vpack.c.b16 %v653, %v652
  %v709 = vpack.c.b16 %v655, %v654
  %v710 = vpack.c.b16 %v657, %v656
  %v711 = vpack.c.b16 %v659, %v658
  %v712 = vpack.c.b16 %v661, %v660
  %v713 = vpack.c.b16 %v663, %v662
  %v714 = vpack.c.b16 %v665, %v664
  %v715 = vpack.c.b16 %v667, %v666
  %v716 = vpack.c.b16 %v669, %v668
  %v717 = vpack.c.b16 %v671, %v670
  %v718 = vpack.c.b16 %v673, %v672
  %v719 = vpack.c.b16 %v675, %v674
  %v720 = vpack.c.b16 %v677, %v676
  %v721 = vpack.c.b16 %v679, %v678
  %v722 = vpack.c.b16 %v681, %v680
  %v723 = vpack.c.b16 %v683, %v682
  %v724 = vpack.c.b16 %v685, %v684
  %v725 = vpack.c.b16 %v687, %v686
  %v726 = vpack.c.b16 %v689, %v688
  %v727 = vpack.c.b16 %v691, %v690
  %v728 = vpack.c.b16 %v693, %v692
  %v729 = vpack.c.b16 %v695, %v694
  %v730 = vpack.c.b16 %v697, %v696
  %v731 = vpack.c.b16 %v699, %v698
  %v780 = vunpack.c.l.b16 %v87
  %v781 = vunpack.c.l.b16 %v88
  %v782 = vunpack.c.l.b16 %v89
  %v783 = vunpack.c.l.b16 %v90
  %v784 = vunpack.c.l.b16 %v91
  %v785 = vunpack.c.l.b16 %v92
  %v786 = vunpack.c.l.b16 %v93
  %v787 = vunpack.c.l.b16 %v94
  %v788 = vunpack.c.l.b16 %v95
  %v789 = vunpack.c.l.b16 %v96
  %v790 = vunpack.c.l.b16 %v97
  %v791 = vunpack.c.l.b16 %v98
  %v792 = vunpack.c.l.b16 %v99
  %v793 = vunpack.c.l.b16 %v100
  %v794 = vunpack.c.l.b16 %v101
  %v795 = vunpack.c.l.b16 %v102
  %v796 = vpack.c.b16 %v781, %v780
  %v797 = vpack.c.b16 %v783, %v782
  %v798 = vpack.c.b16 %v785, %v784
  %v799 = vpack.c.b16 %v787, %v786
  %v800 = vpack.c.b16 %v789, %v788
  %v801 = vpack.c.b16 %v791, %v790
  %v802 = vpack.c.b16 %v793, %v792
  %v803 = vpack.c.b16 %v795, %v794
  %812 = vmatpush.bf16.msra.mxu0 %v803
  %813 = vmatpush.bf16.msra.mxu0 %v802
  %814 = vmatpush.bf16.msra.mxu0 %v801
  %815 = vmatpush.bf16.msra.mxu0 %v800
  %816 = vmatpush.bf16.msra.mxu0 %v799
  %817 = vmatpush.bf16.msra.mxu0 %v798
  %818 = vmatpush.bf16.msra.mxu0 %v797
  %819 = vmatpush.bf16.msra.mxu0 %v796
  %820 = vmatmul.bf16.gmra.mxu0 %v700
  %v821 = vpop.f32.mrf.mxu0
  %v822 = vadd.f32 %v381, %v821
  %v823 = vpop.f32.mrf.mxu0
  %v824 = vadd.f32 %v384, %v823
  %825 = vmatmul.bf16.gmra.mxu0 %v701
  %v826 = vpop.f32.mrf.mxu0
  %v827 = vadd.f32 %v387, %v826
  %v828 = vpop.f32.mrf.mxu0
  %v829 = vadd.f32 %v390, %v828
  %830 = vmatmul.bf16.gmra.mxu0 %v702
  %v831 = vpop.f32.mrf.mxu0
  %v832 = vadd.f32 %v393, %v831
  %v833 = vpop.f32.mrf.mxu0
  %v834 = vadd.f32 %v396, %v833
  %835 = vmatmul.bf16.gmra.mxu0 %v703
  %v836 = vpop.f32.mrf.mxu0
  %v837 = vadd.f32 %v399, %v836
  %v838 = vpop.f32.mrf.mxu0
  %v839 = vadd.f32 %v402, %v838
  %840 = vmatmul.bf16.gmra.mxu0 %v704
  %v841 = vpop.f32.mrf.mxu0
  %v842 = vadd.f32 %v405, %v841
  %v843 = vpop.f32.mrf.mxu0
  %v844 = vadd.f32 %v408, %v843
  %845 = vmatmul.bf16.gmra.mxu0 %v705
  %v846 = vpop.f32.mrf.mxu0
  %v847 = vadd.f32 %v411, %v846
  %v848 = vpop.f32.mrf.mxu0
  %v849 = vadd.f32 %v414, %v848
  %850 = vmatmul.bf16.gmra.mxu0 %v706
  %v851 = vpop.f32.mrf.mxu0
  %v852 = vadd.f32 %v417, %v851
  %v853 = vpop.f32.mrf.mxu0
  %v854 = vadd.f32 %v420, %v853
  %855 = vmatmul.bf16.gmra.mxu0 %v707
  %v856 = vpop.f32.mrf.mxu0
  %v857 = vadd.f32 %v423, %v856
  %v858 = vpop.f32.mrf.mxu0
  %v859 = vadd.f32 %v426, %v858
  %860 = vmatmul.bf16.gmra.mxu0 %v708
  %v861 = vpop.f32.mrf.mxu0
  %v862 = vadd.f32 %v429, %v861
  %v863 = vpop.f32.mrf.mxu0
  %v864 = vadd.f32 %v432, %v863
  %865 = vmatmul.bf16.gmra.mxu0 %v709
  %v866 = vpop.f32.mrf.mxu0
  %v867 = vadd.f32 %v435, %v866
  %v868 = vpop.f32.mrf.mxu0
  %v869 = vadd.f32 %v438, %v868
  %870 = vmatmul.bf16.gmra.mxu0 %v710
  %v871 = vpop.f32.mrf.mxu0
  %v872 = vadd.f32 %v441, %v871
  %v873 = vpop.f32.mrf.mxu0
  %v874 = vadd.f32 %v444, %v873
  %875 = vmatmul.bf16.gmra.mxu0 %v711
  %v876 = vpop.f32.mrf.mxu0
  %v877 = vadd.f32 %v447, %v876
  %v878 = vpop.f32.mrf.mxu0
  %v879 = vadd.f32 %v450, %v878
  %880 = vmatmul.bf16.gmra.mxu0 %v712
  %v881 = vpop.f32.mrf.mxu0
  %v882 = vadd.f32 %v453, %v881
  %v883 = vpop.f32.mrf.mxu0
  %v884 = vadd.f32 %v456, %v883
  %885 = vmatmul.bf16.gmra.mxu0 %v713
  %v886 = vpop.f32.mrf.mxu0
  %v887 = vadd.f32 %v459, %v886
  %v888 = vpop.f32.mrf.mxu0
  %v889 = vadd.f32 %v462, %v888
  %890 = vmatmul.bf16.gmra.mxu0 %v714
  %v891 = vpop.f32.mrf.mxu0
  %v892 = vadd.f32 %v465, %v891
  %v893 = vpop.f32.mrf.mxu0
  %v894 = vadd.f32 %v468, %v893
  %895 = vmatmul.bf16.gmra.mxu0 %v715
  %v896 = vpop.f32.mrf.mxu0
  %v897 = vadd.f32 %v471, %v896
  %v898 = vpop.f32.mrf.mxu0
  %v899 = vadd.f32 %v474, %v898
  %900 = vmatmul.bf16.gmra.mxu0 %v716
  %v901 = vpop.f32.mrf.mxu0
  %v902 = vadd.f32 %v477, %v901
  %v903 = vpop.f32.mrf.mxu0
  %v904 = vadd.f32 %v480, %v903
  %905 = vmatmul.bf16.gmra.mxu0 %v717
  %v906 = vpop.f32.mrf.mxu0
  %v907 = vadd.f32 %v483, %v906
  %v908 = vpop.f32.mrf.mxu0
  %v909 = vadd.f32 %v486, %v908
  %910 = vmatmul.bf16.gmra.mxu0 %v718
  %v911 = vpop.f32.mrf.mxu0
  %v912 = vadd.f32 %v489, %v911
  %v913 = vpop.f32.mrf.mxu0
  %v914 = vadd.f32 %v492, %v913
  %915 = vmatmul.bf16.gmra.mxu0 %v719
  %v916 = vpop.f32.mrf.mxu0
  %v917 = vadd.f32 %v495, %v916
  %v918 = vpop.f32.mrf.mxu0
  %v919 = vadd.f32 %v498, %v918
  %920 = vmatmul.bf16.gmra.mxu0 %v720
  %v921 = vpop.f32.mrf.mxu0
  %v922 = vadd.f32 %v501, %v921
  %v923 = vpop.f32.mrf.mxu0
  %v924 = vadd.f32 %v504, %v923
  %925 = vmatmul.bf16.gmra.mxu0 %v721
  %v926 = vpop.f32.mrf.mxu0
  %v927 = vadd.f32 %v507, %v926
  %v928 = vpop.f32.mrf.mxu0
  %v929 = vadd.f32 %v510, %v928
  %930 = vmatmul.bf16.gmra.mxu0 %v722
  %v931 = vpop.f32.mrf.mxu0
  %v932 = vadd.f32 %v513, %v931
  %v933 = vpop.f32.mrf.mxu0
  %v934 = vadd.f32 %v516, %v933
  %935 = vmatmul.bf16.gmra.mxu0 %v723
  %v936 = vpop.f32.mrf.mxu0
  %v937 = vadd.f32 %v519, %v936
  %v938 = vpop.f32.mrf.mxu0
  %v939 = vadd.f32 %v522, %v938
  %940 = vmatmul.bf16.gmra.mxu0 %v724
  %v941 = vpop.f32.mrf.mxu0
  %v942 = vadd.f32 %v525, %v941
  %v943 = vpop.f32.mrf.mxu0
  %v944 = vadd.f32 %v528, %v943
  %945 = vmatmul.bf16.gmra.mxu0 %v725
  %v946 = vpop.f32.mrf.mxu0
  %v947 = vadd.f32 %v531, %v946
  %v948 = vpop.f32.mrf.mxu0
  %v949 = vadd.f32 %v534, %v948
  %950 = vmatmul.bf16.gmra.mxu0 %v726
  %v951 = vpop.f32.mrf.mxu0
  %v952 = vadd.f32 %v537, %v951
  %v953 = vpop.f32.mrf.mxu0
  %v954 = vadd.f32 %v540, %v953
  %955 = vmatmul.bf16.gmra.mxu0 %v727
  %v956 = vpop.f32.mrf.mxu0
  %v957 = vadd.f32 %v543, %v956
  %v958 = vpop.f32.mrf.mxu0
  %v959 = vadd.f32 %v546, %v958
  %960 = vmatmul.bf16.gmra.mxu0 %v728
  %v961 = vpop.f32.mrf.mxu0
  %v962 = vadd.f32 %v549, %v961
  %v963 = vpop.f32.mrf.mxu0
  %v964 = vadd.f32 %v552, %v963
  %965 = vmatmul.bf16.gmra.mxu0 %v729
  %v966 = vpop.f32.mrf.mxu0
  %v967 = vadd.f32 %v555, %v966
  %v968 = vpop.f32.mrf.mxu0
  %v969 = vadd.f32 %v558, %v968
  %970 = vmatmul.bf16.gmra.mxu0 %v730
  %v971 = vpop.f32.mrf.mxu0
  %v972 = vadd.f32 %v561, %v971
  %v973 = vpop.f32.mrf.mxu0
  %v974 = vadd.f32 %v564, %v973
  %975 = vmatmul.bf16.gmra.mxu0 %v731
  %v976 = vpop.f32.mrf.mxu0
  %v977 = vadd.f32 %v567, %v976
  %v978 = vpop.f32.mrf.mxu0
  %v979 = vadd.f32 %v570, %v978
  %980 = vdwg.mxu0
  %v981 = vld [vmem:[%s4] sm:$0x1]
  %v983 = vperm.slane %v981, 0
  %v985 = vmul.f32 %v822, %v983
  %v986 = vmul.f32 %v824, %v983
  %v987 = vmul.f32 %v827, %v983
  %v988 = vmul.f32 %v829, %v983
  %v989 = vmul.f32 %v832, %v983
  %v990 = vmul.f32 %v834, %v983
  %v991 = vmul.f32 %v837, %v983
  %v992 = vmul.f32 %v839, %v983
  %v993 = vmul.f32 %v842, %v983
  %v994 = vmul.f32 %v844, %v983
  %v995 = vmul.f32 %v847, %v983
  %v996 = vmul.f32 %v849, %v983
  %v997 = vmul.f32 %v852, %v983
  %v998 = vmul.f32 %v854, %v983
  %v999 = vmul.f32 %v857, %v983
  %v1000 = vmul.f32 %v859, %v983
  %v1001 = vmul.f32 %v862, %v983
  %v1002 = vmul.f32 %v864, %v983
  %v1003 = vmul.f32 %v867, %v983
  %v1004 = vmul.f32 %v869, %v983
  %v1005 = vmul.f32 %v872, %v983
  %v1006 = vmul.f32 %v874, %v983
  %v1007 = vmul.f32 %v877, %v983
  %v1008 = vmul.f32 %v879, %v983
  %v1009 = vmul.f32 %v882, %v983
  %v1010 = vmul.f32 %v884, %v983
  %v1011 = vmul.f32 %v887, %v983
  %v1012 = vmul.f32 %v889, %v983
  %v1013 = vmul.f32 %v892, %v983
  %v1014 = vmul.f32 %v894, %v983
  %v1015 = vmul.f32 %v897, %v983
  %v1016 = vmul.f32 %v899, %v983
  %v1017 = vmul.f32 %v902, %v983
  %v1018 = vmul.f32 %v904, %v983
  %v1019 = vmul.f32 %v907, %v983
  %v1020 = vmul.f32 %v909, %v983
  %v1021 = vmul.f32 %v912, %v983
  %v1022 = vmul.f32 %v914, %v983
  %v1023 = vmul.f32 %v917, %v983
  %v1024 = vmul.f32 %v919, %v983
  %v1025 = vmul.f32 %v922, %v983
  %v1026 = vmul.f32 %v924, %v983
  %v1027 = vmul.f32 %v927, %v983
  %v1028 = vmul.f32 %v929, %v983
  %v1029 = vmul.f32 %v932, %v983
  %v1030 = vmul.f32 %v934, %v983
  %v1031 = vmul.f32 %v937, %v983
  %v1032 = vmul.f32 %v939, %v983
  %v1033 = vmul.f32 %v942, %v983
  %v1034 = vmul.f32 %v944, %v983
  %v1035 = vmul.f32 %v947, %v983
  %v1036 = vmul.f32 %v949, %v983
  %v1037 = vmul.f32 %v952, %v983
  %v1038 = vmul.f32 %v954, %v983
  %v1039 = vmul.f32 %v957, %v983
  %v1040 = vmul.f32 %v959, %v983
  %v1041 = vmul.f32 %v962, %v983
  %v1042 = vmul.f32 %v964, %v983
  %v1043 = vmul.f32 %v967, %v983
  %v1044 = vmul.f32 %v969, %v983
  %v1045 = vmul.f32 %v972, %v983
  %v1046 = vmul.f32 %v974, %v983
  %v1047 = vmul.f32 %v977, %v983
  %v1048 = vmul.f32 %v979, %v983
  %v1049 = vld [vmem:[%s5] sm:$0x1]
  %v1051 = vperm.slane %v1049, 0
  %v1053 = vadd.f32 %v985, %v1051
  %v1054 = vadd.f32 %v986, %v1051
  %v1055 = vadd.f32 %v987, %v1051
  %v1056 = vadd.f32 %v988, %v1051
  %v1057 = vadd.f32 %v989, %v1051
  %v1058 = vadd.f32 %v990, %v1051
  %v1059 = vadd.f32 %v991, %v1051
  %v1060 = vadd.f32 %v992, %v1051
  %v1061 = vadd.f32 %v993, %v1051
  %v1062 = vadd.f32 %v994, %v1051
  %v1063 = vadd.f32 %v995, %v1051
  %v1064 = vadd.f32 %v996, %v1051
  %v1065 = vadd.f32 %v997, %v1051
  %v1066 = vadd.f32 %v998, %v1051
  %v1067 = vadd.f32 %v999, %v1051
  %v1068 = vadd.f32 %v1000, %v1051
  %v1069 = vadd.f32 %v1001, %v1051
  %v1070 = vadd.f32 %v1002, %v1051
  %v1071 = vadd.f32 %v1003, %v1051
  %v1072 = vadd.f32 %v1004, %v1051
  %v1073 = vadd.f32 %v1005, %v1051
  %v1074 = vadd.f32 %v1006, %v1051
  %v1075 = vadd.f32 %v1007, %v1051
  %v1076 = vadd.f32 %v1008, %v1051
  %v1077 = vadd.f32 %v1009, %v1051
  %v1078 = vadd.f32 %v1010, %v1051
  %v1079 = vadd.f32 %v1011, %v1051
  %v1080 = vadd.f32 %v1012, %v1051
  %v1081 = vadd.f32 %v1013, %v1051
  %v1082 = vadd.f32 %v1014, %v1051
  %v1083 = vadd.f32 %v1015, %v1051
  %v1084 = vadd.f32 %v1016, %v1051
  %v1085 = vadd.f32 %v1017, %v1051
  %v1086 = vadd.f32 %v1018, %v1051
  %v1087 = vadd.f32 %v1019, %v1051
  %v1088 = vadd.f32 %v1020, %v1051
  %v1089 = vadd.f32 %v1021, %v1051
  %v1090 = vadd.f32 %v1022, %v1051
  %v1091 = vadd.f32 %v1023, %v1051
  %v1092 = vadd.f32 %v1024, %v1051
  %v1093 = vadd.f32 %v1025, %v1051
  %v1094 = vadd.f32 %v1026, %v1051
  %v1095 = vadd.f32 %v1027, %v1051
  %v1096 = vadd.f32 %v1028, %v1051
  %v1097 = vadd.f32 %v1029, %v1051
  %v1098 = vadd.f32 %v1030, %v1051
  %v1099 = vadd.f32 %v1031, %v1051
  %v1100 = vadd.f32 %v1032, %v1051
  %v1101 = vadd.f32 %v1033, %v1051
  %v1102 = vadd.f32 %v1034, %v1051
  %v1103 = vadd.f32 %v1035, %v1051
  %v1104 = vadd.f32 %v1036, %v1051
  %v1105 = vadd.f32 %v1037, %v1051
  %v1106 = vadd.f32 %v1038, %v1051
  %v1107 = vadd.f32 %v1039, %v1051
  %v1108 = vadd.f32 %v1040, %v1051
  %v1109 = vadd.f32 %v1041, %v1051
  %v1110 = vadd.f32 %v1042, %v1051
  %v1111 = vadd.f32 %v1043, %v1051
  %v1112 = vadd.f32 %v1044, %v1051
  %v1113 = vadd.f32 %v1045, %v1051
  %v1114 = vadd.f32 %v1046, %v1051
  %v1115 = vadd.f32 %v1047, %v1051
  %v1116 = vadd.f32 %v1048, %v1051
  %v1117 = vmax.f32 %v1053, 0.0
  %v1118 = vmax.f32 %v1054, 0.0
  %v1119 = vmax.f32 %v1055, 0.0
  %v1120 = vmax.f32 %v1056, 0.0
  %v1121 = vmax.f32 %v1057, 0.0
  %v1122 = vmax.f32 %v1058, 0.0
  %v1123 = vmax.f32 %v1059, 0.0
  %v1124 = vmax.f32 %v1060, 0.0
  %v1125 = vmax.f32 %v1061, 0.0
  %v1126 = vmax.f32 %v1062, 0.0
  %v1127 = vmax.f32 %v1063, 0.0
  %v1128 = vmax.f32 %v1064, 0.0
  %v1129 = vmax.f32 %v1065, 0.0
  %v1130 = vmax.f32 %v1066, 0.0
  %v1131 = vmax.f32 %v1067, 0.0
  %v1132 = vmax.f32 %v1068, 0.0
  %v1133 = vmax.f32 %v1069, 0.0
  %v1134 = vmax.f32 %v1070, 0.0
  %v1135 = vmax.f32 %v1071, 0.0
  %v1136 = vmax.f32 %v1072, 0.0
  %v1137 = vmax.f32 %v1073, 0.0
  %v1138 = vmax.f32 %v1074, 0.0
  %v1139 = vmax.f32 %v1075, 0.0
  %v1140 = vmax.f32 %v1076, 0.0
  %v1141 = vmax.f32 %v1077, 0.0
  %v1142 = vmax.f32 %v1078, 0.0
  %v1143 = vmax.f32 %v1079, 0.0
  %v1144 = vmax.f32 %v1080, 0.0
  %v1145 = vmax.f32 %v1081, 0.0
  %v1146 = vmax.f32 %v1082, 0.0
  %v1147 = vmax.f32 %v1083, 0.0
  %v1148 = vmax.f32 %v1084, 0.0
  %v1149 = vmax.f32 %v1085, 0.0
  %v1150 = vmax.f32 %v1086, 0.0
  %v1151 = vmax.f32 %v1087, 0.0
  %v1152 = vmax.f32 %v1088, 0.0
  %v1153 = vmax.f32 %v1089, 0.0
  %v1154 = vmax.f32 %v1090, 0.0
  %v1155 = vmax.f32 %v1091, 0.0
  %v1156 = vmax.f32 %v1092, 0.0
  %v1157 = vmax.f32 %v1093, 0.0
  %v1158 = vmax.f32 %v1094, 0.0
  %v1159 = vmax.f32 %v1095, 0.0
  %v1160 = vmax.f32 %v1096, 0.0
  %v1161 = vmax.f32 %v1097, 0.0
  %v1162 = vmax.f32 %v1098, 0.0
  %v1163 = vmax.f32 %v1099, 0.0
  %v1164 = vmax.f32 %v1100, 0.0
  %v1165 = vmax.f32 %v1101, 0.0
  %v1166 = vmax.f32 %v1102, 0.0
  %v1167 = vmax.f32 %v1103, 0.0
  %v1168 = vmax.f32 %v1104, 0.0
  %v1169 = vmax.f32 %v1105, 0.0
  %v1170 = vmax.f32 %v1106, 0.0
  %v1171 = vmax.f32 %v1107, 0.0
  %v1172 = vmax.f32 %v1108, 0.0
  %v1173 = vmax.f32 %v1109, 0.0
  %v1174 = vmax.f32 %v1110, 0.0
  %v1175 = vmax.f32 %v1111, 0.0
  %v1176 = vmax.f32 %v1112, 0.0
  %v1177 = vmax.f32 %v1113, 0.0
  %v1178 = vmax.f32 %v1114, 0.0
  %v1179 = vmax.f32 %v1115, 0.0
  %v1180 = vmax.f32 %v1116, 0.0
  %1181 = vst [vmem:[%s6] sm:$0xff] %v1117
  %1182 = vst [vmem:[%s6 + $0x8] sm:$0xff] %v1118
  %1183 = vst [vmem:[%s6 + $0x10] sm:$0xff] %v1119
  %1184 = vst [vmem:[%s6 + $0x18] sm:$0xff] %v1120
  %1185 = vst [vmem:[%s6 + $0x20] sm:$0xff] %v1121
  %1186 = vst [vmem:[%s6 + $0x28] sm:$0xff] %v1122
  %1187 = vst [vmem:[%s6 + $0x30] sm:$0xff] %v1123
  %1188 = vst [vmem:[%s6 + $0x38] sm:$0xff] %v1124
  %1189 = vst [vmem:[%s6 + $0x40] sm:$0xff] %v1125
  %1190 = vst [vmem:[%s6 + $0x48] sm:$0xff] %v1126
  %1191 = vst [vmem:[%s6 + $0x50] sm:$0xff] %v1127
  %1192 = vst [vmem:[%s6 + $0x58] sm:$0xff] %v1128
  %1193 = vst [vmem:[%s6 + $0x60] sm:$0xff] %v1129
  %1194 = vst [vmem:[%s6 + $0x68] sm:$0xff] %v1130
  %1195 = vst [vmem:[%s6 + $0x70] sm:$0xff] %v1131
  %1196 = vst [vmem:[%s6 + $0x78] sm:$0xff] %v1132
  %1197 = vst [vmem:[%s6 + $0x80] sm:$0xff] %v1133
  %1198 = vst [vmem:[%s6 + $0x88] sm:$0xff] %v1134
  %1199 = vst [vmem:[%s6 + $0x90] sm:$0xff] %v1135
  %1200 = vst [vmem:[%s6 + $0x98] sm:$0xff] %v1136
  %1201 = vst [vmem:[%s6 + $0xa0] sm:$0xff] %v1137
  %1202 = vst [vmem:[%s6 + $0xa8] sm:$0xff] %v1138
  %1203 = vst [vmem:[%s6 + $0xb0] sm:$0xff] %v1139
  %1204 = vst [vmem:[%s6 + $0xb8] sm:$0xff] %v1140
  %1205 = vst [vmem:[%s6 + $0xc0] sm:$0xff] %v1141
  %1206 = vst [vmem:[%s6 + $0xc8] sm:$0xff] %v1142
  %1207 = vst [vmem:[%s6 + $0xd0] sm:$0xff] %v1143
  %1208 = vst [vmem:[%s6 + $0xd8] sm:$0xff] %v1144
  %1209 = vst [vmem:[%s6 + $0xe0] sm:$0xff] %v1145
  %1210 = vst [vmem:[%s6 + $0xe8] sm:$0xff] %v1146
  %1211 = vst [vmem:[%s6 + $0xf0] sm:$0xff] %v1147
  %1212 = vst [vmem:[%s6 + $0xf8] sm:$0xff] %v1148
  %1213 = vst [vmem:[%s6 + $0x100] sm:$0xff] %v1149
  %1214 = vst [vmem:[%s6 + $0x108] sm:$0xff] %v1150
  %1215 = vst [vmem:[%s6 + $0x110] sm:$0xff] %v1151
  %1216 = vst [vmem:[%s6 + $0x118] sm:$0xff] %v1152
  %1217 = vst [vmem:[%s6 + $0x120] sm:$0xff] %v1153
  %1218 = vst [vmem:[%s6 + $0x128] sm:$0xff] %v1154
  %1219 = vst [vmem:[%s6 + $0x130] sm:$0xff] %v1155
  %1220 = vst [vmem:[%s6 + $0x138] sm:$0xff] %v1156
  %1221 = vst [vmem:[%s6 + $0x140] sm:$0xff] %v1157
  %1222 = vst [vmem:[%s6 + $0x148] sm:$0xff] %v1158
  %1223 = vst [vmem:[%s6 + $0x150] sm:$0xff] %v1159
  %1224 = vst [vmem:[%s6 + $0x158] sm:$0xff] %v1160
  %1225 = vst [vmem:[%s6 + $0x160] sm:$0xff] %v1161
  %1226 = vst [vmem:[%s6 + $0x168] sm:$0xff] %v1162
  %1227 = vst [vmem:[%s6 + $0x170] sm:$0xff] %v1163
  %1228 = vst [vmem:[%s6 + $0x178] sm:$0xff] %v1164
  %1229 = vst [vmem:[%s6 + $0x180] sm:$0xff] %v1165
  %1230 = vst [vmem:[%s6 + $0x188] sm:$0xff] %v1166
  %1231 = vst [vmem:[%s6 + $0x190] sm:$0xff] %v1167
  %1232 = vst [vmem:[%s6 + $0x198] sm:$0xff] %v1168
  %1233 = vst [vmem:[%s6 + $0x1a0] sm:$0xff] %v1169
  %1234 = vst [vmem:[%s6 + $0x1a8] sm:$0xff] %v1170
  %1235 = vst [vmem:[%s6 + $0x1b0] sm:$0xff] %v1171
  %1236 = vst [vmem:[%s6 + $0x1b8] sm:$0xff] %v1172
  %1237 = vst [vmem:[%s6 + $0x1c0] sm:$0xff] %v1173
  %1238 = vst [vmem:[%s6 + $0x1c8] sm:$0xff] %v1174
  %1239 = vst [vmem:[%s6 + $0x1d0] sm:$0xff] %v1175
  %1240 = vst [vmem:[%s6 + $0x1d8] sm:$0xff] %v1176
  %1241 = vst [vmem:[%s6 + $0x1e0] sm:$0xff] %v1177
  %1242 = vst [vmem:[%s6 + $0x1e8] sm:$0xff] %v1178
  %1243 = vst [vmem:[%s6 + $0x1f0] sm:$0xff] %v1179
  %1244 = vst [vmem:[%s6 + $0x1f8] sm:$0xff] %v1180
  // Predicated region
  $region26: #{_lraspp_forward.4} parent=0 // pred_check
    _
  $region27: #{_lraspp_forward.4} parent=0 // pred_check_branch
    %1246 = sbr.rel (0) target = $region29
  $region28: #{_lraspp_forward.4} parent=0 // pred_region
    _
  $region29: #{_lraspp_forward.4} parent=0 // pred_fallthru
    _
  // Predicated region
  $region30: #{_lraspp_forward.4} parent=0 // pred_check
    _
  $region31: #{_lraspp_forward.4} parent=0 // pred_check_branch
    %1248 = sbr.rel (0) target = $region33
  $region32: #{_lraspp_forward.4} parent=0 // pred_region
    _
  $region33: #{_lraspp_forward.4} parent=0 // pred_fallthru
    _

// kernel: _lraspp_forward.5
$region0: #{_lraspp_forward.5}
  #allocation0 [shape = 'u32[]', space=smem, size = 0x4, offset = 0x4, fixed_abs, tag = 'smem constant byte address 0x4 - core index']
  #allocation1 [shape = 'u32[72,128]{1,0:T(1,128)}', space=vmem, size = 0x9000, scoped, tag = 'internal scratch']
  %s0 = inlined_call_operand.vmem [shape: bf16[2048,128], index: 0, kind: input, shape index: {}]
  %s1 = inlined_call_operand.vmem [shape: f32[2048,16], index: 1, kind: input, shape index: {}]
  %s2 = inlined_call_operand.vmem [shape: bf16[128,128], index: 2, kind: input, shape index: {}]
  %s3 = inlined_call_operand.vmem [shape: f32[16,128], index: 3, kind: input, shape index: {}]
  %s4 = inlined_call_operand.vmem [shape: f32[1,128], index: 4, kind: input, shape index: {}]
  %s5 = inlined_call_operand.vmem [shape: f32[1,128], index: 5, kind: input, shape index: {}]
  %s6 = inlined_call_operand.vmem [shape: f32[2048,128], index: 6, kind: output, shape index: {}]
  %s7 = sld [smem:[#allocation0]]
  $region57: #{_lraspp_forward.5} parent=0
    _
  %s9 = ssub.s32 1, %s7
  %s10 = scalar_select 0, %s9, %s7
  loop: start=0, step=1, limit=6
  $region2: #{_lraspp_forward.5} parent=0 // loop_pre_header
    _
  $region3: #{_lraspp_forward.5} parent=0 // loop_header
    %s12 = sphi 0, %s16
    %p13 = scmp.ge.s32.totalorder %s12, 6
    %s22 = sphi 0, %s24
    %s25 = sphi 0, %s22
    %s26 = sphi 0, %s25
    %s42 = sphi 0, %s26
    %s48 = sphi 0, %s50
    %s51 = sphi 0, %s48
    %s52 = sphi 0, %s51
    %s68 = sphi 0, %s52
    %s72 = sphi 0, %s72
    %s74 = sphi 0, %s72
    %s75 = sphi 0, %s74
    %s89 = sphi 0, %s75
    %s93 = sphi 0, %s93
    %s95 = sphi 0, %s93
    %s96 = sphi 0, %s95
    %s110 = sphi 0, %s96
    %s114 = sphi 0, %s114
    %s116 = sphi 0, %s114
    %s117 = sphi 0, %s116
    %s131 = sphi 0, %s117
    %s135 = sphi 0, %s135
    %s137 = sphi 0, %s135
    %s138 = sphi 0, %s137
    %s152 = sphi 0, %s138
    %s158 = sphi 0, %s160
    %s161 = sphi 0, %s158
    %s162 = sphi 0, %s161
    %s178 = sphi 0, %s162
  $region4: #{_lraspp_forward.5} parent=0 // loop_header_branch
    %15 = sbr.rel (%p13) target = $region8
  $region5: #{_lraspp_forward.5} parent=0 // loop_body
    %s17 = ssub.s32 %s12, 1
    %s18 = ssub.s32 %s12, 2
    %s19 = sadd.s32 %s12, 1
    %s20 = ssub.s32 %s12, %s19
    %p21 = scmp.eq.s32.totalorder %s20, 0
    %s23 = sadd.s32 %s22, 1
    %s24 = scalar_select %p21, %s22, %s23
    %p27 = pneg %p21
    %p28 = scmp.eq.s32.totalorder %s12, 3
    %p29 = por %p27, %p28
    %p30 = scmp.ne.s32.totalorder %s22, %s25
    %p31 = scmp.eq.s32.totalorder %s12, 0
    %p32 = por %p30, %p31
    %p33 = scmp.ne.s32.totalorder %s22, %s25
    %p34 = scmp.eq.s32.totalorder %s17, 3
    %p35 = por %p33, %p34
    %p36 = scmp.ne.s32.totalorder %s25, %s26
    %p37 = scmp.eq.s32.totalorder %s17, 0
    %p38 = por %p36, %p37
    %p39 = scmp.ne.s32.totalorder %s25, %s26
    %p40 = scmp.eq.s32.totalorder %s18, 3
    %p41 = por %p39, %p40
    %p43 = scmp.ne.s32.totalorder %s26, %s42
    %p44 = scmp.eq.s32.totalorder %s18, 0
    %p45 = por %p43, %p44
    %s46 = ssub.s32 %s12, %s19
    %p47 = scmp.eq.s32.totalorder %s46, 0
    %s49 = sadd.s32 %s48, 1
    %s50 = scalar_select %p47, %s48, %s49
    %p53 = pneg %p47
    %p54 = scmp.eq.s32.totalorder %s12, 3
    %p55 = por %p53, %p54
    %p56 = scmp.ne.s32.totalorder %s48, %s51
    %p57 = scmp.eq.s32.totalorder %s12, 0
    %p58 = por %p56, %p57
    %p59 = scmp.ne.s32.totalorder %s48, %s51
    %p60 = scmp.eq.s32.totalorder %s17, 3
    %p61 = por %p59, %p60
    %p62 = scmp.ne.s32.totalorder %s51, %s52
    %p63 = scmp.eq.s32.totalorder %s17, 0
    %p64 = por %p62, %p63
    %p65 = scmp.ne.s32.totalorder %s51, %s52
    %p66 = scmp.eq.s32.totalorder %s18, 3
    %p67 = por %p65, %p66
    %p69 = scmp.ne.s32.totalorder %s52, %s68
    %p70 = scmp.eq.s32.totalorder %s18, 0
    %p71 = por %p69, %p70
    %s73 = sadd.s32 %s72, 1
    %p76 = scmp.eq.s32.totalorder %s12, 3
    %p77 = scmp.ne.s32.totalorder %s72, %s74
    %p78 = scmp.eq.s32.totalorder %s12, 0
    %p79 = por %p77, %p78
    %p80 = scmp.ne.s32.totalorder %s72, %s74
    %p81 = scmp.eq.s32.totalorder %s17, 3
    %p82 = por %p80, %p81
    %p83 = scmp.ne.s32.totalorder %s74, %s75
    %p84 = scmp.eq.s32.totalorder %s17, 0
    %p85 = por %p83, %p84
    %p86 = scmp.ne.s32.totalorder %s74, %s75
    %p87 = scmp.eq.s32.totalorder %s18, 3
    %p88 = por %p86, %p87
    %p90 = scmp.ne.s32.totalorder %s75, %s89
    %p91 = scmp.eq.s32.totalorder %s18, 0
    %p92 = por %p90, %p91
    %s94 = sadd.s32 %s93, 1
    %p97 = scmp.eq.s32.totalorder %s12, 3
    %p98 = scmp.ne.s32.totalorder %s93, %s95
    %p99 = scmp.eq.s32.totalorder %s12, 0
    %p100 = por %p98, %p99
    %p101 = scmp.ne.s32.totalorder %s93, %s95
    %p102 = scmp.eq.s32.totalorder %s17, 3
    %p103 = por %p101, %p102
    %p104 = scmp.ne.s32.totalorder %s95, %s96
    %p105 = scmp.eq.s32.totalorder %s17, 0
    %p106 = por %p104, %p105
    %p107 = scmp.ne.s32.totalorder %s95, %s96
    %p108 = scmp.eq.s32.totalorder %s18, 3
    %p109 = por %p107, %p108
    %p111 = scmp.ne.s32.totalorder %s96, %s110
    %p112 = scmp.eq.s32.totalorder %s18, 0
    %p113 = por %p111, %p112
    %s115 = sadd.s32 %s114, 1
    %p118 = scmp.eq.s32.totalorder %s12, 3
    %p119 = scmp.ne.s32.totalorder %s114, %s116
    %p120 = scmp.eq.s32.totalorder %s12, 0
    %p121 = por %p119, %p120
    %p122 = scmp.ne.s32.totalorder %s114, %s116
    %p123 = scmp.eq.s32.totalorder %s17, 3
    %p124 = por %p122, %p123
    %p125 = scmp.ne.s32.totalorder %s116, %s117
    %p126 = scmp.eq.s32.totalorder %s17, 0
    %p127 = por %p125, %p126
    %p128 = scmp.ne.s32.totalorder %s116, %s117
    %p129 = scmp.eq.s32.totalorder %s18, 3
    %p130 = por %p128, %p129
    %p132 = scmp.ne.s32.totalorder %s117, %s131
    %p133 = scmp.eq.s32.totalorder %s18, 0
    %p134 = por %p132, %p133
    %s136 = sadd.s32 %s135, 1
    %p139 = scmp.eq.s32.totalorder %s12, 3
    %p140 = scmp.ne.s32.totalorder %s135, %s137
    %p141 = scmp.eq.s32.totalorder %s12, 0
    %p142 = por %p140, %p141
    %p143 = scmp.ne.s32.totalorder %s135, %s137
    %p144 = scmp.eq.s32.totalorder %s17, 3
    %p145 = por %p143, %p144
    %p146 = scmp.ne.s32.totalorder %s137, %s138
    %p147 = scmp.eq.s32.totalorder %s17, 0
    %p148 = por %p146, %p147
    %p149 = scmp.ne.s32.totalorder %s137, %s138
    %p150 = scmp.eq.s32.totalorder %s18, 3
    %p151 = por %p149, %p150
    %p153 = scmp.ne.s32.totalorder %s138, %s152
    %p154 = scmp.eq.s32.totalorder %s18, 0
    %p155 = por %p153, %p154
    %s156 = ssub.s32 %s12, %s19
    %p157 = scmp.eq.s32.totalorder %s156, 0
    %s159 = sadd.s32 %s158, 1
    %s160 = scalar_select %p157, %s158, %s159
    %p163 = pneg %p157
    %p164 = scmp.eq.s32.totalorder %s12, 3
    %p165 = por %p163, %p164
    %p166 = scmp.ne.s32.totalorder %s158, %s161
    %p167 = scmp.eq.s32.totalorder %s12, 0
    %p168 = por %p166, %p167
    %p169 = scmp.ne.s32.totalorder %s158, %s161
    %p170 = scmp.eq.s32.totalorder %s17, 3
    %p171 = por %p169, %p170
    %p172 = scmp.ne.s32.totalorder %s161, %s162
    %p173 = scmp.eq.s32.totalorder %s17, 0
    %p174 = por %p172, %p173
    %p175 = scmp.ne.s32.totalorder %s161, %s162
    %p176 = scmp.eq.s32.totalorder %s18, 3
    %p177 = por %p175, %p176
    %p179 = scmp.ne.s32.totalorder %s162, %s178
    %p180 = scmp.eq.s32.totalorder %s18, 0
    %p181 = por %p179, %p180
    %p182 = scmp.le.s32.totalorder 1, %s12
    %p183 = scmp.lt.s32.totalorder %s12, 5
    %p184 = pnand %p182, %p183
    %p185 = pneg %p184
    // Predicated region
    $region9: #{_lraspp_forward.5} parent=5 // pred_check
      _
    $region10: #{_lraspp_forward.5} parent=5 // pred_check_branch
      %187 = sbr.rel (%p184) target = $region12
    $region11: #{_lraspp_forward.5} parent=5 // pred_region
      %s188 = ssub.s32 %s12, 1
      // Predicated region
      $region13: #{_lraspp_forward.5} parent=11 // pred_check
        %p189 = pneg %p85
      $region14: #{_lraspp_forward.5} parent=11 // pred_check_branch
        %191 = sbr.rel (%p189) target = $region16
      $region15: #{_lraspp_forward.5} parent=11 // pred_region
        _
      $region16: #{_lraspp_forward.5} parent=11 // pred_fallthru
        _
      // Predicated region
      $region17: #{_lraspp_forward.5} parent=11 // pred_check
        %p192 = pneg %p106
      $region18: #{_lraspp_forward.5} parent=11 // pred_check_branch
        %194 = sbr.rel (%p192) target = $region20
      $region19: #{_lraspp_forward.5} parent=11 // pred_region
        _
      $region20: #{_lraspp_forward.5} parent=11 // pred_fallthru
        _
      // Predicated region
      $region21: #{_lraspp_forward.5} parent=11 // pred_check
        %p195 = pneg %p127
      $region22: #{_lraspp_forward.5} parent=11 // pred_check_branch
        %197 = sbr.rel (%p195) target = $region24
      $region23: #{_lraspp_forward.5} parent=11 // pred_region
        _
      $region24: #{_lraspp_forward.5} parent=11 // pred_fallthru
        _
      // Predicated region
      $region25: #{_lraspp_forward.5} parent=11 // pred_check
        %p198 = pneg %p148
      $region26: #{_lraspp_forward.5} parent=11 // pred_check_branch
        %200 = sbr.rel (%p198) target = $region28
      $region27: #{_lraspp_forward.5} parent=11 // pred_region
        _
      $region28: #{_lraspp_forward.5} parent=11 // pred_fallthru
        _
    $region12: #{_lraspp_forward.5} parent=5 // pred_fallthru
      _
    %p201 = scmp.lt.s32.totalorder %s12, 4
    // Predicated region
    $region29: #{_lraspp_forward.5} parent=5 // pred_check
      %p202 = pneg %p201
    $region30: #{_lraspp_forward.5} parent=5 // pred_check_branch
      %204 = sbr.rel (%p202) target = $region32
    $region31: #{_lraspp_forward.5} parent=5 // pred_region
      // Predicated region
      $region33: #{_lraspp_forward.5} parent=31 // pred_check
        %p205 = pneg %p32
      $region34: #{_lraspp_forward.5} parent=31 // pred_check_branch
        %207 = sbr.rel (%p205) target = $region36
      $region35: #{_lraspp_forward.5} parent=31 // pred_region
        %s208 = smul.u32 64, %s12
        %p209 = scmp.lt.s32.totalorder %s208, 255
        %s210 = scalar_select %p209, %s208, 255
        %s211 = smul.addr %s210, 4
        %s212 = scalar_lea.vmem %s0, %s211
        %s213 = smul.u32 64, %s12
      $region36: #{_lraspp_forward.5} parent=31 // pred_fallthru
        _
      // Predicated region
      $region37: #{_lraspp_forward.5} parent=31 // pred_check
        %p214 = pneg %p58
      $region38: #{_lraspp_forward.5} parent=31 // pred_check_branch
        %216 = sbr.rel (%p214) target = $region40
      $region39: #{_lraspp_forward.5} parent=31 // pred_region
        %s217 = smul.u32 64, %s12
        %p218 = scmp.lt.s32.totalorder %s217, 255
        %s219 = scalar_select %p218, %s217, 255
        %s220 = smul.addr %s219, 8
        %s221 = scalar_lea.vmem %s1, %s220
        %s222 = smul.u32 64, %s12
      $region40: #{_lraspp_forward.5} parent=31 // pred_fallthru
        _
    $region32: #{_lraspp_forward.5} parent=5 // pred_fallthru
      _
    %p223 = scmp.le.s32.totalorder 1, %s12
    %p224 = scmp.lt.s32.totalorder %s12, 5
    %p225 = pnand %p223, %p224
    %p226 = pneg %p225
    // Predicated region
    $region41: #{_lraspp_forward.5} parent=5 // pred_check
      _
    $region42: #{_lraspp_forward.5} parent=5 // pred_check_branch
      %228 = sbr.rel (%p225) target = $region44
    $region43: #{_lraspp_forward.5} parent=5 // pred_region
      %s229 = ssub.s32 %s12, 1
      %s230 = smul.u32 64, %s17
      %p231 = scmp.lt.s32.totalorder %s230, 255
      %s232 = scalar_select %p231, %s230, 255
      %s233 = smul.addr %s232, 4
      %s234 = scalar_lea.vmem %s0, %s233
      %p235 = pneg %p38
      %p236 = pneg %p35
      %s237 = smul.u32 64, %s17
      %p238 = scmp.lt.s32.totalorder %s237, 255
      %s239 = scalar_select %p238, %s237, 255
      %s240 = smul.addr %s239, 8
      %s241 = scalar_lea.vmem %s1, %s240
      %p242 = pneg %p64
      %p243 = pneg %p61
      %p244 = pneg %p85
      %p245 = pneg %p82
      %p246 = pneg %p106
      %p247 = pneg %p103
      %p248 = pneg %p127
      %p249 = pneg %p124
      %p250 = pneg %p148
      %p251 = pneg %p145
      %p252 = pneg %p174
      %p253 = pneg %p171
      %s254 = smul.u32 64, %s17
      %p255 = scmp.lt.s32.totalorder %s254, 255
      %s256 = scalar_select %p255, %s254, 255
      %s257 = smul.addr %s256, 8
      %s258 = scalar_lea.vmem %s6, %s257
      %s259 = smul.u32 64, %s17
      %p260 = scmp.lt.s32.totalorder %s259, 255
      %s261 = scalar_select %p260, %s259, 255
      %s262 = smul.addr %s261, 4
      %s263 = scalar_lea.vmem %s0, %s262
      %s264 = smul.u32 64, %s17
      %s265 = smul.u32 64, %s17
      %p266 = scmp.lt.s32.totalorder %s265, 255
      %s267 = scalar_select %p266, %s265, 255
      %s268 = smul.addr %s267, 8
      %s269 = scalar_lea.vmem %s1, %s268
      %s270 = smul.u32 64, %s17
      %s271 = smul.u32 64, %s17
      %p272 = scmp.lt.s32.totalorder %s271, 255
      %s273 = scalar_select %p272, %s271, 255
      %s274 = smul.addr %s273, 8
      %s275 = scalar_lea.vmem %s6, %s274
      %s276 = smul.u32 64, %s17
      %v277 = vld [vmem:[%s263] sm:$0xf]
      %v278 = vld [vmem:[%s263 + $0x4] sm:$0xf]
      %v279 = vld [vmem:[%s263 + $0x8] sm:$0xf]
      %v280 = vld [vmem:[%s263 + $0xc] sm:$0xf]
      %v281 = vld [vmem:[%s263 + $0x10] sm:$0xf]
      %v282 = vld [vmem:[%s263 + $0x14] sm:$0xf]
      %v283 = vld [vmem:[%s263 + $0x18] sm:$0xf]
      %v284 = vld [vmem:[%s263 + $0x1c] sm:$0xf]
      %v285 = vld [vmem:[%s263 + $0x20] sm:$0xf]
      %v286 = vld [vmem:[%s263 + $0x24] sm:$0xf]
      %v287 = vld [vmem:[%s263 + $0x28] sm:$0xf]
      %v288 = vld [vmem:[%s263 + $0x2c] sm:$0xf]
      %v289 = vld [vmem:[%s263 + $0x30] sm:$0xf]
      %v290 = vld [vmem:[%s263 + $0x34] sm:$0xf]
      %v291 = vld [vmem:[%s263 + $0x38] sm:$0xf]
      %v292 = vld [vmem:[%s263 + $0x3c] sm:$0xf]
      %v293 = vld [vmem:[%s263 + $0x40] sm:$0xf]
      %v294 = vld [vmem:[%s263 + $0x44] sm:$0xf]
      %v295 = vld [vmem:[%s263 + $0x48] sm:$0xf]
      %v296 = vld [vmem:[%s263 + $0x4c] sm:$0xf]
      %v297 = vld [vmem:[%s263 + $0x50] sm:$0xf]
      %v298 = vld [vmem:[%s263 + $0x54] sm:$0xf]
      %v299 = vld [vmem:[%s263 + $0x58] sm:$0xf]
      %v300 = vld [vmem:[%s263 + $0x5c] sm:$0xf]
      %v301 = vld [vmem:[%s263 + $0x60] sm:$0xf]
      %v302 = vld [vmem:[%s263 + $0x64] sm:$0xf]
      %v303 = vld [vmem:[%s263 + $0x68] sm:$0xf]
      %v304 = vld [vmem:[%s263 + $0x6c] sm:$0xf]
      %v305 = vld [vmem:[%s263 + $0x70] sm:$0xf]
      %v306 = vld [vmem:[%s263 + $0x74] sm:$0xf]
      %v307 = vld [vmem:[%s263 + $0x78] sm:$0xf]
      %v308 = vld [vmem:[%s263 + $0x7c] sm:$0xf]
      %v309 = vld [vmem:[%s263 + $0x80] sm:$0xf]
      %v310 = vld [vmem:[%s263 + $0x84] sm:$0xf]
      %v311 = vld [vmem:[%s263 + $0x88] sm:$0xf]
      %v312 = vld [vmem:[%s263 + $0x8c] sm:$0xf]
      %v313 = vld [vmem:[%s263 + $0x90] sm:$0xf]
      %v314 = vld [vmem:[%s263 + $0x94] sm:$0xf]
      %v315 = vld [vmem:[%s263 + $0x98] sm:$0xf]
      %v316 = vld [vmem:[%s263 + $0x9c] sm:$0xf]
      %v317 = vld [vmem:[%s263 + $0xa0] sm:$0xf]
      %v318 = vld [vmem:[%s263 + $0xa4] sm:$0xf]
      %v319 = vld [vmem:[%s263 + $0xa8] sm:$0xf]
      %v320 = vld [vmem:[%s263 + $0xac] sm:$0xf]
      %v321 = vld [vmem:[%s263 + $0xb0] sm:$0xf]
      %v322 = vld [vmem:[%s263 + $0xb4] sm:$0xf]
      %v323 = vld [vmem:[%s263 + $0xb8] sm:$0xf]
      %v324 = vld [vmem:[%s263 + $0xbc] sm:$0xf]
      %v325 = vld [vmem:[%s263 + $0xc0] sm:$0xf]
      %v326 = vld [vmem:[%s263 + $0xc4] sm:$0xf]
      %v327 = vld [vmem:[%s263 + $0xc8] sm:$0xf]
      %v328 = vld [vmem:[%s263 + $0xcc] sm:$0xf]
      %v329 = vld [vmem:[%s263 + $0xd0] sm:$0xf]
      %v330 = vld [vmem:[%s263 + $0xd4] sm:$0xf]
      %v331 = vld [vmem:[%s263 + $0xd8] sm:$0xf]
      %v332 = vld [vmem:[%s263 + $0xdc] sm:$0xf]
      %v333 = vld [vmem:[%s263 + $0xe0] sm:$0xf]
      %v334 = vld [vmem:[%s263 + $0xe4] sm:$0xf]
      %v335 = vld [vmem:[%s263 + $0xe8] sm:$0xf]
      %v336 = vld [vmem:[%s263 + $0xec] sm:$0xf]
      %v337 = vld [vmem:[%s263 + $0xf0] sm:$0xf]
      %v338 = vld [vmem:[%s263 + $0xf4] sm:$0xf]
      %v339 = vld [vmem:[%s263 + $0xf8] sm:$0xf]
      %v340 = vld [vmem:[%s263 + $0xfc] sm:$0xf]
      %v341 = vld [vmem:[%s2] sm:$0xf]
      %v342 = vld [vmem:[%s2 + $0x4] sm:$0xf]
      %v343 = vld [vmem:[%s2 + $0x8] sm:$0xf]
      %v344 = vld [vmem:[%s2 + $0xc] sm:$0xf]
      %v345 = vld [vmem:[%s2 + $0x10] sm:$0xf]
      %v346 = vld [vmem:[%s2 + $0x14] sm:$0xf]
      %v347 = vld [vmem:[%s2 + $0x18] sm:$0xf]
      %v348 = vld [vmem:[%s2 + $0x1c] sm:$0xf]
      %v349 = vld [vmem:[%s2 + $0x20] sm:$0xf]
      %v350 = vld [vmem:[%s2 + $0x24] sm:$0xf]
      %v351 = vld [vmem:[%s2 + $0x28] sm:$0xf]
      %v352 = vld [vmem:[%s2 + $0x2c] sm:$0xf]
      %v353 = vld [vmem:[%s2 + $0x30] sm:$0xf]
      %v354 = vld [vmem:[%s2 + $0x34] sm:$0xf]
      %v355 = vld [vmem:[%s2 + $0x38] sm:$0xf]
      %v356 = vld [vmem:[%s2 + $0x3c] sm:$0xf]
      %v357 = vld [vmem:[%s269] sm:$0xff]
      %v358 = vld [vmem:[%s269 + $0x8] sm:$0xff]
      %v359 = vld [vmem:[%s269 + $0x10] sm:$0xff]
      %v360 = vld [vmem:[%s269 + $0x18] sm:$0xff]
      %v361 = vld [vmem:[%s269 + $0x20] sm:$0xff]
      %v362 = vld [vmem:[%s269 + $0x28] sm:$0xff]
      %v363 = vld [vmem:[%s269 + $0x30] sm:$0xff]
      %v364 = vld [vmem:[%s269 + $0x38] sm:$0xff]
      %v365 = vld [vmem:[%s269 + $0x40] sm:$0xff]
      %v366 = vld [vmem:[%s269 + $0x48] sm:$0xff]
      %v367 = vld [vmem:[%s269 + $0x50] sm:$0xff]
      %v368 = vld [vmem:[%s269 + $0x58] sm:$0xff]
      %v369 = vld [vmem:[%s269 + $0x60] sm:$0xff]
      %v370 = vld [vmem:[%s269 + $0x68] sm:$0xff]
      %v371 = vld [vmem:[%s269 + $0x70] sm:$0xff]
      %v372 = vld [vmem:[%s269 + $0x78] sm:$0xff]
      %v373 = vld [vmem:[%s269 + $0x80] sm:$0xff]
      %v374 = vld [vmem:[%s269 + $0x88] sm:$0xff]
      %v375 = vld [vmem:[%s269 + $0x90] sm:$0xff]
      %v376 = vld [vmem:[%s269 + $0x98] sm:$0xff]
      %v377 = vld [vmem:[%s269 + $0xa0] sm:$0xff]
      %v378 = vld [vmem:[%s269 + $0xa8] sm:$0xff]
      %v379 = vld [vmem:[%s269 + $0xb0] sm:$0xff]
      %v380 = vld [vmem:[%s269 + $0xb8] sm:$0xff]
      %v381 = vld [vmem:[%s269 + $0xc0] sm:$0xff]
      %v382 = vld [vmem:[%s269 + $0xc8] sm:$0xff]
      %v383 = vld [vmem:[%s269 + $0xd0] sm:$0xff]
      %v384 = vld [vmem:[%s269 + $0xd8] sm:$0xff]
      %v385 = vld [vmem:[%s269 + $0xe0] sm:$0xff]
      %v386 = vld [vmem:[%s269 + $0xe8] sm:$0xff]
      %v387 = vld [vmem:[%s269 + $0xf0] sm:$0xff]
      %v388 = vld [vmem:[%s269 + $0xf8] sm:$0xff]
      %v389 = vld [vmem:[%s269 + $0x100] sm:$0xff]
      %v390 = vld [vmem:[%s269 + $0x108] sm:$0xff]
      %v391 = vld [vmem:[%s269 + $0x110] sm:$0xff]
      %v392 = vld [vmem:[%s269 + $0x118] sm:$0xff]
      %v393 = vld [vmem:[%s269 + $0x120] sm:$0xff]
      %v394 = vld [vmem:[%s269 + $0x128] sm:$0xff]
      %v395 = vld [vmem:[%s269 + $0x130] sm:$0xff]
      %v396 = vld [vmem:[%s269 + $0x138] sm:$0xff]
      %v397 = vld [vmem:[%s269 + $0x140] sm:$0xff]
      %v398 = vld [vmem:[%s269 + $0x148] sm:$0xff]
      %v399 = vld [vmem:[%s269 + $0x150] sm:$0xff]
      %v400 = vld [vmem:[%s269 + $0x158] sm:$0xff]
      %v401 = vld [vmem:[%s269 + $0x160] sm:$0xff]
      %v402 = vld [vmem:[%s269 + $0x168] sm:$0xff]
      %v403 = vld [vmem:[%s269 + $0x170] sm:$0xff]
      %v404 = vld [vmem:[%s269 + $0x178] sm:$0xff]
      %v405 = vld [vmem:[%s269 + $0x180] sm:$0xff]
      %v406 = vld [vmem:[%s269 + $0x188] sm:$0xff]
      %v407 = vld [vmem:[%s269 + $0x190] sm:$0xff]
      %v408 = vld [vmem:[%s269 + $0x198] sm:$0xff]
      %v409 = vld [vmem:[%s269 + $0x1a0] sm:$0xff]
      %v410 = vld [vmem:[%s269 + $0x1a8] sm:$0xff]
      %v411 = vld [vmem:[%s269 + $0x1b0] sm:$0xff]
      %v412 = vld [vmem:[%s269 + $0x1b8] sm:$0xff]
      %v413 = vld [vmem:[%s269 + $0x1c0] sm:$0xff]
      %v414 = vld [vmem:[%s269 + $0x1c8] sm:$0xff]
      %v415 = vld [vmem:[%s269 + $0x1d0] sm:$0xff]
      %v416 = vld [vmem:[%s269 + $0x1d8] sm:$0xff]
      %v417 = vld [vmem:[%s269 + $0x1e0] sm:$0xff]
      %v418 = vld [vmem:[%s269 + $0x1e8] sm:$0xff]
      %v419 = vld [vmem:[%s269 + $0x1f0] sm:$0xff]
      %v420 = vld [vmem:[%s269 + $0x1f8] sm:$0xff]
      %v421 = vld [vmem:[%s3] sm:$0xff]
      %v422 = vld [vmem:[%s3 + $0x8] sm:$0xff]
      %vm423 = vcmask 130048
      %v425 = vsel %vm423, %v357, 0
      %v428 = vsel %vm423, %v358, 0
      %v431 = vsel %vm423, %v359, 0
      %v434 = vsel %vm423, %v360, 0
      %v437 = vsel %vm423, %v361, 0
      %v440 = vsel %vm423, %v362, 0
      %v443 = vsel %vm423, %v363, 0
      %v446 = vsel %vm423, %v364, 0
      %v449 = vsel %vm423, %v365, 0
      %v452 = vsel %vm423, %v366, 0
      %v455 = vsel %vm423, %v367, 0
      %v458 = vsel %vm423, %v368, 0
      %v461 = vsel %vm423, %v369, 0
      %v464 = vsel %vm423, %v370, 0
      %v467 = vsel %vm423, %v371, 0
      %v470 = vsel %vm423, %v372, 0
      %v473 = vsel %vm423, %v373, 0
      %v476 = vsel %vm423, %v374, 0
      %v479 = vsel %vm423, %v375, 0
      %v482 = vsel %vm423, %v376, 0
      %v485 = vsel %vm423, %v377, 0
      %v488 = vsel %vm423, %v378, 0
      %v491 = vsel %vm423, %v379, 0
      %v494 = vsel %vm423, %v380, 0
      %v497 = vsel %vm423, %v381, 0
      %v500 = vsel %vm423, %v382, 0
      %v503 = vsel %vm423, %v383, 0
      %v506 = vsel %vm423, %v384, 0
      %v509 = vsel %vm423, %v385, 0
      %v512 = vsel %vm423, %v386, 0
      %v515 = vsel %vm423, %v387, 0
      %v518 = vsel %vm423, %v388, 0
      %v521 = vsel %vm423, %v389, 0
      %v524 = vsel %vm423, %v390, 0
      %v527 = vsel %vm423, %v391, 0
      %v530 = vsel %vm423, %v392, 0
      %v533 = vsel %vm423, %v393, 0
      %v536 = vsel %vm423, %v394, 0
      %v539 = vsel %vm423, %v395, 0
      %v542 = vsel %vm423, %v396, 0
      %v545 = vsel %vm423, %v397, 0
      %v548 = vsel %vm423, %v398, 0
      %v551 = vsel %vm423, %v399, 0
      %v554 = vsel %vm423, %v400, 0
      %v557 = vsel %vm423, %v401, 0
      %v560 = vsel %vm423, %v402, 0
      %v563 = vsel %vm423, %v403, 0
      %v566 = vsel %vm423, %v404, 0
      %v569 = vsel %vm423, %v405, 0
      %v572 = vsel %vm423, %v406, 0
      %v575 = vsel %vm423, %v407, 0
      %v578 = vsel %vm423, %v408, 0
      %v581 = vsel %vm423, %v409, 0
      %v584 = vsel %vm423, %v410, 0
      %v587 = vsel %vm423, %v411, 0
      %v590 = vsel %vm423, %v412, 0
      %v593 = vsel %vm423, %v413, 0
      %v596 = vsel %vm423, %v414, 0
      %v599 = vsel %vm423, %v415, 0
      %v602 = vsel %vm423, %v416, 0
      %v605 = vsel %vm423, %v417, 0
      %v608 = vsel %vm423, %v418, 0
      %v611 = vsel %vm423, %v419, 0
      %v614 = vsel %vm423, %v420, 0
      %616 = vmatpush.msra.mxu0 0.0
      %617 = vmatpush.msra.mxu0 0.0
      %618 = vmatpush.msra.mxu0 0.0
      %619 = vmatpush.msra.mxu0 0.0
      %620 = vmatpush.msra.mxu0 0.0
      %621 = vmatpush.msra.mxu0 0.0
      %622 = vmatpush.msra.mxu0 0.0
      %623 = vmatpush.msra.mxu0 0.0
      %624 = vmatpush.msra.mxu0 0.0
      %625 = vmatpush.msra.mxu0 0.0
      %626 = vmatpush.msra.mxu0 0.0
      %627 = vmatpush.msra.mxu0 0.0
      %628 = vmatpush.msra.mxu0 0.0
      %629 = vmatpush.msra.mxu0 0.0
      %630 = vmatpush.msra.mxu0 %v422
      %631 = vmatpush.msra.mxu0 %v421
      %632 = vmatmul.f32.gmra.mxu0 %v425
      %v633 = vpop.f32.mrf.mxu0
      %v634 = vadd.f32 0.0, %v633
      %635 = vmatmul.f32.gmra.mxu0 %v428
      %v636 = vpop.f32.mrf.mxu0
      %v637 = vadd.f32 0.0, %v636
      %638 = vmatmul.f32.gmra.mxu0 %v431
      %v639 = vpop.f32.mrf.mxu0
      %v640 = vadd.f32 0.0, %v639
      %641 = vmatmul.f32.gmra.mxu0 %v434
      %v642 = vpop.f32.mrf.mxu0
      %v643 = vadd.f32 0.0, %v642
      %644 = vmatmul.f32.gmra.mxu0 %v437
      %v645 = vpop.f32.mrf.mxu0
      %v646 = vadd.f32 0.0, %v645
      %647 = vmatmul.f32.gmra.mxu0 %v440
      %v648 = vpop.f32.mrf.mxu0
      %v649 = vadd.f32 0.0, %v648
      %650 = vmatmul.f32.gmra.mxu0 %v443
      %v651 = vpop.f32.mrf.mxu0
      %v652 = vadd.f32 0.0, %v651
      %653 = vmatmul.f32.gmra.mxu0 %v446
      %v654 = vpop.f32.mrf.mxu0
      %v655 = vadd.f32 0.0, %v654
      %656 = vmatmul.f32.gmra.mxu0 %v449
      %v657 = vpop.f32.mrf.mxu0
      %v658 = vadd.f32 0.0, %v657
      %659 = vmatmul.f32.gmra.mxu0 %v452
      %v660 = vpop.f32.mrf.mxu0
      %v661 = vadd.f32 0.0, %v660
      %662 = vmatmul.f32.gmra.mxu0 %v455
      %v663 = vpop.f32.mrf.mxu0
      %v664 = vadd.f32 0.0, %v663
      %665 = vmatmul.f32.gmra.mxu0 %v458
      %v666 = vpop.f32.mrf.mxu0
      %v667 = vadd.f32 0.0, %v666
      %668 = vmatmul.f32.gmra.mxu0 %v461
      %v669 = vpop.f32.mrf.mxu0
      %v670 = vadd.f32 0.0, %v669
      %671 = vmatmul.f32.gmra.mxu0 %v464
      %v672 = vpop.f32.mrf.mxu0
      %v673 = vadd.f32 0.0, %v672
      %674 = vmatmul.f32.gmra.mxu0 %v467
      %v675 = vpop.f32.mrf.mxu0
      %v676 = vadd.f32 0.0, %v675
      %677 = vmatmul.f32.gmra.mxu0 %v470
      %v678 = vpop.f32.mrf.mxu0
      %v679 = vadd.f32 0.0, %v678
      %680 = vmatmul.f32.gmra.mxu0 %v473
      %v681 = vpop.f32.mrf.mxu0
      %v682 = vadd.f32 0.0, %v681
      %683 = vmatmul.f32.gmra.mxu0 %v476
      %v684 = vpop.f32.mrf.mxu0
      %v685 = vadd.f32 0.0, %v684
      %686 = vmatmul.f32.gmra.mxu0 %v479
      %v687 = vpop.f32.mrf.mxu0
      %v688 = vadd.f32 0.0, %v687
      %689 = vmatmul.f32.gmra.mxu0 %v482
      %v690 = vpop.f32.mrf.mxu0
      %v691 = vadd.f32 0.0, %v690
      %692 = vmatmul.f32.gmra.mxu0 %v485
      %v693 = vpop.f32.mrf.mxu0
      %v694 = vadd.f32 0.0, %v693
      %695 = vmatmul.f32.gmra.mxu0 %v488
      %v696 = vpop.f32.mrf.mxu0
      %v697 = vadd.f32 0.0, %v696
      %698 = vmatmul.f32.gmra.mxu0 %v491
      %v699 = vpop.f32.mrf.mxu0
      %v700 = vadd.f32 0.0, %v699
      %701 = vmatmul.f32.gmra.mxu0 %v494
      %v702 = vpop.f32.mrf.mxu0
      %v703 = vadd.f32 0.0, %v702
      %704 = vmatmul.f32.gmra.mxu0 %v497
      %v705 = vpop.f32.mrf.mxu0
      %v706 = vadd.f32 0.0, %v705
      %707 = vmatmul.f32.gmra.mxu0 %v500
      %v708 = vpop.f32.mrf.mxu0
      %v709 = vadd.f32 0.0, %v708
      %710 = vmatmul.f32.gmra.mxu0 %v503
      %v711 = vpop.f32.mrf.mxu0
      %v712 = vadd.f32 0.0, %v711
      %713 = vmatmul.f32.gmra.mxu0 %v506
      %v714 = vpop.f32.mrf.mxu0
      %v715 = vadd.f32 0.0, %v714
      %716 = vmatmul.f32.gmra.mxu0 %v509
      %v717 = vpop.f32.mrf.mxu0
      %v718 = vadd.f32 0.0, %v717
      %719 = vmatmul.f32.gmra.mxu0 %v512
      %v720 = vpop.f32.mrf.mxu0
      %v721 = vadd.f32 0.0, %v720
      %722 = vmatmul.f32.gmra.mxu0 %v515
      %v723 = vpop.f32.mrf.mxu0
      %v724 = vadd.f32 0.0, %v723
      %725 = vmatmul.f32.gmra.mxu0 %v518
      %v726 = vpop.f32.mrf.mxu0
      %v727 = vadd.f32 0.0, %v726
      %728 = vmatmul.f32.gmra.mxu0 %v521
      %v729 = vpop.f32.mrf.mxu0
      %v730 = vadd.f32 0.0, %v729
      %731 = vmatmul.f32.gmra.mxu0 %v524
      %v732 = vpop.f32.mrf.mxu0
      %v733 = vadd.f32 0.0, %v732
      %734 = vmatmul.f32.gmra.mxu0 %v527
      %v735 = vpop.f32.mrf.mxu0
      %v736 = vadd.f32 0.0, %v735
      %737 = vmatmul.f32.gmra.mxu0 %v530
      %v738 = vpop.f32.mrf.mxu0
      %v739 = vadd.f32 0.0, %v738
      %740 = vmatmul.f32.gmra.mxu0 %v533
      %v741 = vpop.f32.mrf.mxu0
      %v742 = vadd.f32 0.0, %v741
      %743 = vmatmul.f32.gmra.mxu0 %v536
      %v744 = vpop.f32.mrf.mxu0
      %v745 = vadd.f32 0.0, %v744
      %746 = vmatmul.f32.gmra.mxu0 %v539
      %v747 = vpop.f32.mrf.mxu0
      %v748 = vadd.f32 0.0, %v747
      %749 = vmatmul.f32.gmra.mxu0 %v542
      %v750 = vpop.f32.mrf.mxu0
      %v751 = vadd.f32 0.0, %v750
      %752 = vmatmul.f32.gmra.mxu0 %v545
      %v753 = vpop.f32.mrf.mxu0
      %v754 = vadd.f32 0.0, %v753
      %755 = vmatmul.f32.gmra.mxu0 %v548
      %v756 = vpop.f32.mrf.mxu0
      %v757 = vadd.f32 0.0, %v756
      %758 = vmatmul.f32.gmra.mxu0 %v551
      %v759 = vpop.f32.mrf.mxu0
      %v760 = vadd.f32 0.0, %v759
      %761 = vmatmul.f32.gmra.mxu0 %v554
      %v762 = vpop.f32.mrf.mxu0
      %v763 = vadd.f32 0.0, %v762
      %764 = vmatmul.f32.gmra.mxu0 %v557
      %v765 = vpop.f32.mrf.mxu0
      %v766 = vadd.f32 0.0, %v765
      %767 = vmatmul.f32.gmra.mxu0 %v560
      %v768 = vpop.f32.mrf.mxu0
      %v769 = vadd.f32 0.0, %v768
      %770 = vmatmul.f32.gmra.mxu0 %v563
      %v771 = vpop.f32.mrf.mxu0
      %v772 = vadd.f32 0.0, %v771
      %773 = vmatmul.f32.gmra.mxu0 %v566
      %v774 = vpop.f32.mrf.mxu0
      %v775 = vadd.f32 0.0, %v774
      %776 = vmatmul.f32.gmra.mxu0 %v569
      %v777 = vpop.f32.mrf.mxu0
      %v778 = vadd.f32 0.0, %v777
      %779 = vmatmul.f32.gmra.mxu0 %v572
      %v780 = vpop.f32.mrf.mxu0
      %v781 = vadd.f32 0.0, %v780
      %782 = vmatmul.f32.gmra.mxu0 %v575
      %v783 = vpop.f32.mrf.mxu0
      %v784 = vadd.f32 0.0, %v783
      %785 = vmatmul.f32.gmra.mxu0 %v578
      %v786 = vpop.f32.mrf.mxu0
      %v787 = vadd.f32 0.0, %v786
      %788 = vmatmul.f32.gmra.mxu0 %v581
      %v789 = vpop.f32.mrf.mxu0
      %v790 = vadd.f32 0.0, %v789
      %791 = vmatmul.f32.gmra.mxu0 %v584
      %v792 = vpop.f32.mrf.mxu0
      %v793 = vadd.f32 0.0, %v792
      %794 = vmatmul.f32.gmra.mxu0 %v587
      %v795 = vpop.f32.mrf.mxu0
      %v796 = vadd.f32 0.0, %v795
      %797 = vmatmul.f32.gmra.mxu0 %v590
      %v798 = vpop.f32.mrf.mxu0
      %v799 = vadd.f32 0.0, %v798
      %800 = vmatmul.f32.gmra.mxu0 %v593
      %v801 = vpop.f32.mrf.mxu0
      %v802 = vadd.f32 0.0, %v801
      %803 = vmatmul.f32.gmra.mxu0 %v596
      %v804 = vpop.f32.mrf.mxu0
      %v805 = vadd.f32 0.0, %v804
      %806 = vmatmul.f32.gmra.mxu0 %v599
      %v807 = vpop.f32.mrf.mxu0
      %v808 = vadd.f32 0.0, %v807
      %809 = vmatmul.f32.gmra.mxu0 %v602
      %v810 = vpop.f32.mrf.mxu0
      %v811 = vadd.f32 0.0, %v810
      %812 = vmatmul.f32.gmra.mxu0 %v605
      %v813 = vpop.f32.mrf.mxu0
      %v814 = vadd.f32 0.0, %v813
      %815 = vmatmul.f32.gmra.mxu0 %v608
      %v816 = vpop.f32.mrf.mxu0
      %v817 = vadd.f32 0.0, %v816
      %818 = vmatmul.f32.gmra.mxu0 %v611
      %v819 = vpop.f32.mrf.mxu0
      %v820 = vadd.f32 0.0, %v819
      %821 = vmatmul.f32.gmra.mxu0 %v614
      %v822 = vpop.f32.mrf.mxu0
      %v823 = vadd.f32 0.0, %v822
      %824 = vdwg.mxu0
      %v889 = vunpack.c.l.b16 %v277
      %v890 = vunpack.c.l.b16 %v278
      %v891 = vunpack.c.l.b16 %v279
      %v892 = vunpack.c.l.b16 %v280
      %v893 = vunpack.c.l.b16 %v281
      %v894 = vunpack.c.l.b16 %v282
      %v895 = vunpack.c.l.b16 %v283
      %v896 = vunpack.c.l.b16 %v284
      %v897 = vunpack.c.l.b16 %v285
      %v898 = vunpack.c.l.b16 %v286
      %v899 = vunpack.c.l.b16 %v287
      %v900 = vunpack.c.l.b16 %v288
      %v901 = vunpack.c.l.b16 %v289
      %v902 = vunpack.c.l.b16 %v290
      %v903 = vunpack.c.l.b16 %v291
      %v904 = vunpack.c.l.b16 %v292
      %v905 = vunpack.c.l.b16 %v293
      %v906 = vunpack.c.l.b16 %v294
      %v907 = vunpack.c.l.b16 %v295
      %v908 = vunpack.c.l.b16 %v296
      %v909 = vunpack.c.l.b16 %v297
      %v910 = vunpack.c.l.b16 %v298
      %v911 = vunpack.c.l.b16 %v299
      %v912 = vunpack.c.l.b16 %v300
      %v913 = vunpack.c.l.b16 %v301
      %v914 = vunpack.c.l.b16 %v302
      %v915 = vunpack.c.l.b16 %v303
      %v916 = vunpack.c.l.b16 %v304
      %v917 = vunpack.c.l.b16 %v305
      %v918 = vunpack.c.l.b16 %v306
      %v919 = vunpack.c.l.b16 %v307
      %v920 = vunpack.c.l.b16 %v308
      %v921 = vunpack.c.l.b16 %v309
      %v922 = vunpack.c.l.b16 %v310
      %v923 = vunpack.c.l.b16 %v311
      %v924 = vunpack.c.l.b16 %v312
      %v925 = vunpack.c.l.b16 %v313
      %v926 = vunpack.c.l.b16 %v314
      %v927 = vunpack.c.l.b16 %v315
      %v928 = vunpack.c.l.b16 %v316
      %v929 = vunpack.c.l.b16 %v317
      %v930 = vunpack.c.l.b16 %v318
      %v931 = vunpack.c.l.b16 %v319
      %v932 = vunpack.c.l.b16 %v320
      %v933 = vunpack.c.l.b16 %v321
      %v934 = vunpack.c.l.b16 %v322
      %v935 = vunpack.c.l.b16 %v323
      %v936 = vunpack.c.l.b16 %v324
      %v937 = vunpack.c.l.b16 %v325
      %v938 = vunpack.c.l.b16 %v326
      %v939 = vunpack.c.l.b16 %v327
      %v940 = vunpack.c.l.b16 %v328
      %v941 = vunpack.c.l.b16 %v329
      %v942 = vunpack.c.l.b16 %v330
      %v943 = vunpack.c.l.b16 %v331
      %v944 = vunpack.c.l.b16 %v332
      %v945 = vunpack.c.l.b16 %v333
      %v946 = vunpack.c.l.b16 %v334
      %v947 = vunpack.c.l.b16 %v335
      %v948 = vunpack.c.l.b16 %v336
      %v949 = vunpack.c.l.b16 %v337
      %v950 = vunpack.c.l.b16 %v338
      %v951 = vunpack.c.l.b16 %v339
      %v952 = vunpack.c.l.b16 %v340
      %v953 = vpack.c.b16 %v890, %v889
      %v954 = vpack.c.b16 %v892, %v891
      %v955 = vpack.c.b16 %v894, %v893
      %v956 = vpack.c.b16 %v896, %v895
      %v957 = vpack.c.b16 %v898, %v897
      %v958 = vpack.c.b16 %v900, %v899
      %v959 = vpack.c.b16 %v902, %v901
      %v960 = vpack.c.b16 %v904, %v903
      %v961 = vpack.c.b16 %v906, %v905
      %v962 = vpack.c.b16 %v908, %v907
      %v963 = vpack.c.b16 %v910, %v909
      %v964 = vpack.c.b16 %v912, %v911
      %v965 = vpack.c.b16 %v914, %v913
      %v966 = vpack.c.b16 %v916, %v915
      %v967 = vpack.c.b16 %v918, %v917
      %v968 = vpack.c.b16 %v920, %v919
      %v969 = vpack.c.b16 %v922, %v921
      %v970 = vpack.c.b16 %v924, %v923
      %v971 = vpack.c.b16 %v926, %v925
      %v972 = vpack.c.b16 %v928, %v927
      %v973 = vpack.c.b16 %v930, %v929
      %v974 = vpack.c.b16 %v932, %v931
      %v975 = vpack.c.b16 %v934, %v933
      %v976 = vpack.c.b16 %v936, %v935
      %v977 = vpack.c.b16 %v938, %v937
      %v978 = vpack.c.b16 %v940, %v939
      %v979 = vpack.c.b16 %v942, %v941
      %v980 = vpack.c.b16 %v944, %v943
      %v981 = vpack.c.b16 %v946, %v945
      %v982 = vpack.c.b16 %v948, %v947
      %v983 = vpack.c.b16 %v950, %v949
      %v984 = vpack.c.b16 %v952, %v951
      %v1033 = vunpack.c.l.b16 %v341
      %v1034 = vunpack.c.l.b16 %v342
      %v1035 = vunpack.c.l.b16 %v343
      %v1036 = vunpack.c.l.b16 %v344
      %v1037 = vunpack.c.l.b16 %v345
      %v1038 = vunpack.c.l.b16 %v346
      %v1039 = vunpack.c.l.b16 %v347
      %v1040 = vunpack.c.l.b16 %v348
      %v1041 = vunpack.c.l.b16 %v349
      %v1042 = vunpack.c.l.b16 %v350
      %v1043 = vunpack.c.l.b16 %v351
      %v1044 = vunpack.c.l.b16 %v352
      %v1045 = vunpack.c.l.b16 %v353
      %v1046 = vunpack.c.l.b16 %v354
      %v1047 = vunpack.c.l.b16 %v355
      %v1048 = vunpack.c.l.b16 %v356
      %v1049 = vpack.c.b16 %v1034, %v1033
      %v1050 = vpack.c.b16 %v1036, %v1035
      %v1051 = vpack.c.b16 %v1038, %v1037
      %v1052 = vpack.c.b16 %v1040, %v1039
      %v1053 = vpack.c.b16 %v1042, %v1041
      %v1054 = vpack.c.b16 %v1044, %v1043
      %v1055 = vpack.c.b16 %v1046, %v1045
      %v1056 = vpack.c.b16 %v1048, %v1047
      %1065 = vmatpush.bf16.msra.mxu0 %v1056
      %1066 = vmatpush.bf16.msra.mxu0 %v1055
      %1067 = vmatpush.bf16.msra.mxu0 %v1054
      %1068 = vmatpush.bf16.msra.mxu0 %v1053
      %1069 = vmatpush.bf16.msra.mxu0 %v1052
      %1070 = vmatpush.bf16.msra.mxu0 %v1051
      %1071 = vmatpush.bf16.msra.mxu0 %v1050
      %1072 = vmatpush.bf16.msra.mxu0 %v1049
      %1073 = vmatmul.bf16.gmra.mxu0 %v953
      %v1074 = vpop.f32.mrf.mxu0
      %v1075 = vadd.f32 %v634, %v1074
      %v1076 = vpop.f32.mrf.mxu0
      %v1077 = vadd.f32 %v637, %v1076
      %1078 = vmatmul.bf16.gmra.mxu0 %v954
      %v1079 = vpop.f32.mrf.mxu0
      %v1080 = vadd.f32 %v640, %v1079
      %v1081 = vpop.f32.mrf.mxu0
      %v1082 = vadd.f32 %v643, %v1081
      %1083 = vmatmul.bf16.gmra.mxu0 %v955
      %v1084 = vpop.f32.mrf.mxu0
      %v1085 = vadd.f32 %v646, %v1084
      %v1086 = vpop.f32.mrf.mxu0
      %v1087 = vadd.f32 %v649, %v1086
      %1088 = vmatmul.bf16.gmra.mxu0 %v956
      %v1089 = vpop.f32.mrf.mxu0
      %v1090 = vadd.f32 %v652, %v1089
      %v1091 = vpop.f32.mrf.mxu0
      %v1092 = vadd.f32 %v655, %v1091
      %1093 = vmatmul.bf16.gmra.mxu0 %v957
      %v1094 = vpop.f32.mrf.mxu0
      %v1095 = vadd.f32 %v658, %v1094
      %v1096 = vpop.f32.mrf.mxu0
      %v1097 = vadd.f32 %v661, %v1096
      %1098 = vmatmul.bf16.gmra.mxu0 %v958
      %v1099 = vpop.f32.mrf.mxu0
      %v1100 = vadd.f32 %v664, %v1099
      %v1101 = vpop.f32.mrf.mxu0
      %v1102 = vadd.f32 %v667, %v1101
      %1103 = vmatmul.bf16.gmra.mxu0 %v959
      %v1104 = vpop.f32.mrf.mxu0
      %v1105 = vadd.f32 %v670, %v1104
      %v1106 = vpop.f32.mrf.mxu0
      %v1107 = vadd.f32 %v673, %v1106
      %1108 = vmatmul.bf16.gmra.mxu0 %v960
      %v1109 = vpop.f32.mrf.mxu0
      %v1110 = vadd.f32 %v676, %v1109
      %v1111 = vpop.f32.mrf.mxu0
      %v1112 = vadd.f32 %v679, %v1111
      %1113 = vmatmul.bf16.gmra.mxu0 %v961
      %v1114 = vpop.f32.mrf.mxu0
      %v1115 = vadd.f32 %v682, %v1114
      %v1116 = vpop.f32.mrf.mxu0
      %v1117 = vadd.f32 %v685, %v1116
      %1118 = vmatmul.bf16.gmra.mxu0 %v962
      %v1119 = vpop.f32.mrf.mxu0
      %v1120 = vadd.f32 %v688, %v1119
      %v1121 = vpop.f32.mrf.mxu0
      %v1122 = vadd.f32 %v691, %v1121
      %1123 = vmatmul.bf16.gmra.mxu0 %v963
      %v1124 = vpop.f32.mrf.mxu0
      %v1125 = vadd.f32 %v694, %v1124
      %v1126 = vpop.f32.mrf.mxu0
      %v1127 = vadd.f32 %v697, %v1126
      %1128 = vmatmul.bf16.gmra.mxu0 %v964
      %v1129 = vpop.f32.mrf.mxu0
      %v1130 = vadd.f32 %v700, %v1129
      %v1131 = vpop.f32.mrf.mxu0
      %v1132 = vadd.f32 %v703, %v1131
      %1133 = vmatmul.bf16.gmra.mxu0 %v965
      %v1134 = vpop.f32.mrf.mxu0
      %v1135 = vadd.f32 %v706, %v1134
      %v1136 = vpop.f32.mrf.mxu0
      %v1137 = vadd.f32 %v709, %v1136
      %1138 = vmatmul.bf16.gmra.mxu0 %v966
      %v1139 = vpop.f32.mrf.mxu0
      %v1140 = vadd.f32 %v712, %v1139
      %v1141 = vpop.f32.mrf.mxu0
      %v1142 = vadd.f32 %v715, %v1141
      %1143 = vmatmul.bf16.gmra.mxu0 %v967
      %v1144 = vpop.f32.mrf.mxu0
      %v1145 = vadd.f32 %v718, %v1144
      %v1146 = vpop.f32.mrf.mxu0
      %v1147 = vadd.f32 %v721, %v1146
      %1148 = vmatmul.bf16.gmra.mxu0 %v968
      %v1149 = vpop.f32.mrf.mxu0
      %v1150 = vadd.f32 %v724, %v1149
      %v1151 = vpop.f32.mrf.mxu0
      %v1152 = vadd.f32 %v727, %v1151
      %1153 = vmatmul.bf16.gmra.mxu0 %v969
      %v1154 = vpop.f32.mrf.mxu0
      %v1155 = vadd.f32 %v730, %v1154
      %v1156 = vpop.f32.mrf.mxu0
      %v1157 = vadd.f32 %v733, %v1156
      %1158 = vmatmul.bf16.gmra.mxu0 %v970
      %v1159 = vpop.f32.mrf.mxu0
      %v1160 = vadd.f32 %v736, %v1159
      %v1161 = vpop.f32.mrf.mxu0
      %v1162 = vadd.f32 %v739, %v1161
      %1163 = vmatmul.bf16.gmra.mxu0 %v971
      %v1164 = vpop.f32.mrf.mxu0
      %v1165 = vadd.f32 %v742, %v1164
      %v1166 = vpop.f32.mrf.mxu0
      %v1167 = vadd.f32 %v745, %v1166
      %1168 = vmatmul.bf16.gmra.mxu0 %v972
      %v1169 = vpop.f32.mrf.mxu0
      %v1170 = vadd.f32 %v748, %v1169
      %v1171 = vpop.f32.mrf.mxu0
      %v1172 = vadd.f32 %v751, %v1171
      %1173 = vmatmul.bf16.gmra.mxu0 %v973
      %v1174 = vpop.f32.mrf.mxu0
      %v1175 = vadd.f32 %v754, %v1174
      %v1176 = vpop.f32.mrf.mxu0
      %v1177 = vadd.f32 %v757, %v1176
      %1178 = vmatmul.bf16.gmra.mxu0 %v974
      %v1179 = vpop.f32.mrf.mxu0
      %v1180 = vadd.f32 %v760, %v1179
      %v1181 = vpop.f32.mrf.mxu0
      %v1182 = vadd.f32 %v763, %v1181
      %1183 = vmatmul.bf16.gmra.mxu0 %v975
      %v1184 = vpop.f32.mrf.mxu0
      %v1185 = vadd.f32 %v766, %v1184
      %v1186 = vpop.f32.mrf.mxu0
      %v1187 = vadd.f32 %v769, %v1186
      %1188 = vmatmul.bf16.gmra.mxu0 %v976
      %v1189 = vpop.f32.mrf.mxu0
      %v1190 = vadd.f32 %v772, %v1189
      %v1191 = vpop.f32.mrf.mxu0
      %v1192 = vadd.f32 %v775, %v1191
      %1193 = vmatmul.bf16.gmra.mxu0 %v977
      %v1194 = vpop.f32.mrf.mxu0
      %v1195 = vadd.f32 %v778, %v1194
      %v1196 = vpop.f32.mrf.mxu0
      %v1197 = vadd.f32 %v781, %v1196
      %1198 = vmatmul.bf16.gmra.mxu0 %v978
      %v1199 = vpop.f32.mrf.mxu0
      %v1200 = vadd.f32 %v784, %v1199
      %v1201 = vpop.f32.mrf.mxu0
      %v1202 = vadd.f32 %v787, %v1201
      %1203 = vmatmul.bf16.gmra.mxu0 %v979
      %v1204 = vpop.f32.mrf.mxu0
      %v1205 = vadd.f32 %v790, %v1204
      %v1206 = vpop.f32.mrf.mxu0
      %v1207 = vadd.f32 %v793, %v1206
      %1208 = vmatmul.bf16.gmra.mxu0 %v980
      %v1209 = vpop.f32.mrf.mxu0
      %v1210 = vadd.f32 %v796, %v1209
      %v1211 = vpop.f32.mrf.mxu0
      %v1212 = vadd.f32 %v799, %v1211
      %1213 = vmatmul.bf16.gmra.mxu0 %v981
      %v1214 = vpop.f32.mrf.mxu0
      %v1215 = vadd.f32 %v802, %v1214
      %v1216 = vpop.f32.mrf.mxu0
      %v1217 = vadd.f32 %v805, %v1216
      %1218 = vmatmul.bf16.gmra.mxu0 %v982
      %v1219 = vpop.f32.mrf.mxu0
      %v1220 = vadd.f32 %v808, %v1219
      %v1221 = vpop.f32.mrf.mxu0
      %v1222 = vadd.f32 %v811, %v1221
      %1223 = vmatmul.bf16.gmra.mxu0 %v983
      %v1224 = vpop.f32.mrf.mxu0
      %v1225 = vadd.f32 %v814, %v1224
      %v1226 = vpop.f32.mrf.mxu0
      %v1227 = vadd.f32 %v817, %v1226
      %1228 = vmatmul.bf16.gmra.mxu0 %v984
      %v1229 = vpop.f32.mrf.mxu0
      %v1230 = vadd.f32 %v820, %v1229
      %v1231 = vpop.f32.mrf.mxu0
      %v1232 = vadd.f32 %v823, %v1231
      %1233 = vdwg.mxu0
      %v1234 = vld [vmem:[%s4] sm:$0x1]
      %v1236 = vperm.slane %v1234, 0
      %v1238 = vmul.f32 %v1075, %v1236
      %v1239 = vmul.f32 %v1077, %v1236
      %v1240 = vmul.f32 %v1080, %v1236
      %v1241 = vmul.f32 %v1082, %v1236
      %v1242 = vmul.f32 %v1085, %v1236
      %v1243 = vmul.f32 %v1087, %v1236
      %v1244 = vmul.f32 %v1090, %v1236
      %v1245 = vmul.f32 %v1092, %v1236
      %v1246 = vmul.f32 %v1095, %v1236
      %v1247 = vmul.f32 %v1097, %v1236
      %v1248 = vmul.f32 %v1100, %v1236
      %v1249 = vmul.f32 %v1102, %v1236
      %v1250 = vmul.f32 %v1105, %v1236
      %v1251 = vmul.f32 %v1107, %v1236
      %v1252 = vmul.f32 %v1110, %v1236
      %v1253 = vmul.f32 %v1112, %v1236
      %v1254 = vmul.f32 %v1115, %v1236
      %v1255 = vmul.f32 %v1117, %v1236
      %v1256 = vmul.f32 %v1120, %v1236
      %v1257 = vmul.f32 %v1122, %v1236
      %v1258 = vmul.f32 %v1125, %v1236
      %v1259 = vmul.f32 %v1127, %v1236
      %v1260 = vmul.f32 %v1130, %v1236
      %v1261 = vmul.f32 %v1132, %v1236
      %v1262 = vmul.f32 %v1135, %v1236
      %v1263 = vmul.f32 %v1137, %v1236
      %v1264 = vmul.f32 %v1140, %v1236
      %v1265 = vmul.f32 %v1142, %v1236
      %v1266 = vmul.f32 %v1145, %v1236
      %v1267 = vmul.f32 %v1147, %v1236
      %v1268 = vmul.f32 %v1150, %v1236
      %v1269 = vmul.f32 %v1152, %v1236
      %v1270 = vmul.f32 %v1155, %v1236
      %v1271 = vmul.f32 %v1157, %v1236
      %v1272 = vmul.f32 %v1160, %v1236
      %v1273 = vmul.f32 %v1162, %v1236
      %v1274 = vmul.f32 %v1165, %v1236
      %v1275 = vmul.f32 %v1167, %v1236
      %v1276 = vmul.f32 %v1170, %v1236
      %v1277 = vmul.f32 %v1172, %v1236
      %v1278 = vmul.f32 %v1175, %v1236
      %v1279 = vmul.f32 %v1177, %v1236
      %v1280 = vmul.f32 %v1180, %v1236
      %v1281 = vmul.f32 %v1182, %v1236
      %v1282 = vmul.f32 %v1185, %v1236
      %v1283 = vmul.f32 %v1187, %v1236
      %v1284 = vmul.f32 %v1190, %v1236
      %v1285 = vmul.f32 %v1192, %v1236
      %v1286 = vmul.f32 %v1195, %v1236
      %v1287 = vmul.f32 %v1197, %v1236
      %v1288 = vmul.f32 %v1200, %v1236
      %v1289 = vmul.f32 %v1202, %v1236
      %v1290 = vmul.f32 %v1205, %v1236
      %v1291 = vmul.f32 %v1207, %v1236
      %v1292 = vmul.f32 %v1210, %v1236
      %v1293 = vmul.f32 %v1212, %v1236
      %v1294 = vmul.f32 %v1215, %v1236
      %v1295 = vmul.f32 %v1217, %v1236
      %v1296 = vmul.f32 %v1220, %v1236
      %v1297 = vmul.f32 %v1222, %v1236
      %v1298 = vmul.f32 %v1225, %v1236
      %v1299 = vmul.f32 %v1227, %v1236
      %v1300 = vmul.f32 %v1230, %v1236
      %v1301 = vmul.f32 %v1232, %v1236
      %v1302 = vld [vmem:[%s5] sm:$0x1]
      %v1304 = vperm.slane %v1302, 0
      %v1306 = vadd.f32 %v1238, %v1304
      %v1307 = vadd.f32 %v1239, %v1304
      %v1308 = vadd.f32 %v1240, %v1304
      %v1309 = vadd.f32 %v1241, %v1304
      %v1310 = vadd.f32 %v1242, %v1304
      %v1311 = vadd.f32 %v1243, %v1304
      %v1312 = vadd.f32 %v1244, %v1304
      %v1313 = vadd.f32 %v1245, %v1304
      %v1314 = vadd.f32 %v1246, %v1304
      %v1315 = vadd.f32 %v1247, %v1304
      %v1316 = vadd.f32 %v1248, %v1304
      %v1317 = vadd.f32 %v1249, %v1304
      %v1318 = vadd.f32 %v1250, %v1304
      %v1319 = vadd.f32 %v1251, %v1304
      %v1320 = vadd.f32 %v1252, %v1304
      %v1321 = vadd.f32 %v1253, %v1304
      %v1322 = vadd.f32 %v1254, %v1304
      %v1323 = vadd.f32 %v1255, %v1304
      %v1324 = vadd.f32 %v1256, %v1304
      %v1325 = vadd.f32 %v1257, %v1304
      %v1326 = vadd.f32 %v1258, %v1304
      %v1327 = vadd.f32 %v1259, %v1304
      %v1328 = vadd.f32 %v1260, %v1304
      %v1329 = vadd.f32 %v1261, %v1304
      %v1330 = vadd.f32 %v1262, %v1304
      %v1331 = vadd.f32 %v1263, %v1304
      %v1332 = vadd.f32 %v1264, %v1304
      %v1333 = vadd.f32 %v1265, %v1304
      %v1334 = vadd.f32 %v1266, %v1304
      %v1335 = vadd.f32 %v1267, %v1304
      %v1336 = vadd.f32 %v1268, %v1304
      %v1337 = vadd.f32 %v1269, %v1304
      %v1338 = vadd.f32 %v1270, %v1304
      %v1339 = vadd.f32 %v1271, %v1304
      %v1340 = vadd.f32 %v1272, %v1304
      %v1341 = vadd.f32 %v1273, %v1304
      %v1342 = vadd.f32 %v1274, %v1304
      %v1343 = vadd.f32 %v1275, %v1304
      %v1344 = vadd.f32 %v1276, %v1304
      %v1345 = vadd.f32 %v1277, %v1304
      %v1346 = vadd.f32 %v1278, %v1304
      %v1347 = vadd.f32 %v1279, %v1304
      %v1348 = vadd.f32 %v1280, %v1304
      %v1349 = vadd.f32 %v1281, %v1304
      %v1350 = vadd.f32 %v1282, %v1304
      %v1351 = vadd.f32 %v1283, %v1304
      %v1352 = vadd.f32 %v1284, %v1304
      %v1353 = vadd.f32 %v1285, %v1304
      %v1354 = vadd.f32 %v1286, %v1304
      %v1355 = vadd.f32 %v1287, %v1304
      %v1356 = vadd.f32 %v1288, %v1304
      %v1357 = vadd.f32 %v1289, %v1304
      %v1358 = vadd.f32 %v1290, %v1304
      %v1359 = vadd.f32 %v1291, %v1304
      %v1360 = vadd.f32 %v1292, %v1304
      %v1361 = vadd.f32 %v1293, %v1304
      %v1362 = vadd.f32 %v1294, %v1304
      %v1363 = vadd.f32 %v1295, %v1304
      %v1364 = vadd.f32 %v1296, %v1304
      %v1365 = vadd.f32 %v1297, %v1304
      %v1366 = vadd.f32 %v1298, %v1304
      %v1367 = vadd.f32 %v1299, %v1304
      %v1368 = vadd.f32 %v1300, %v1304
      %v1369 = vadd.f32 %v1301, %v1304
      %v1370 = vmax.f32 %v1306, 0.0
      %v1371 = vmax.f32 %v1307, 0.0
      %v1372 = vmax.f32 %v1308, 0.0
      %v1373 = vmax.f32 %v1309, 0.0
      %v1374 = vmax.f32 %v1310, 0.0
      %v1375 = vmax.f32 %v1311, 0.0
      %v1376 = vmax.f32 %v1312, 0.0
      %v1377 = vmax.f32 %v1313, 0.0
      %v1378 = vmax.f32 %v1314, 0.0
      %v1379 = vmax.f32 %v1315, 0.0
      %v1380 = vmax.f32 %v1316, 0.0
      %v1381 = vmax.f32 %v1317, 0.0
      %v1382 = vmax.f32 %v1318, 0.0
      %v1383 = vmax.f32 %v1319, 0.0
      %v1384 = vmax.f32 %v1320, 0.0
      %v1385 = vmax.f32 %v1321, 0.0
      %v1386 = vmax.f32 %v1322, 0.0
      %v1387 = vmax.f32 %v1323, 0.0
      %v1388 = vmax.f32 %v1324, 0.0
      %v1389 = vmax.f32 %v1325, 0.0
      %v1390 = vmax.f32 %v1326, 0.0
      %v1391 = vmax.f32 %v1327, 0.0
      %v1392 = vmax.f32 %v1328, 0.0
      %v1393 = vmax.f32 %v1329, 0.0
      %v1394 = vmax.f32 %v1330, 0.0
      %v1395 = vmax.f32 %v1331, 0.0
      %v1396 = vmax.f32 %v1332, 0.0
      %v1397 = vmax.f32 %v1333, 0.0
      %v1398 = vmax.f32 %v1334, 0.0
      %v1399 = vmax.f32 %v1335, 0.0
      %v1400 = vmax.f32 %v1336, 0.0
      %v1401 = vmax.f32 %v1337, 0.0
      %v1402 = vmax.f32 %v1338, 0.0
      %v1403 = vmax.f32 %v1339, 0.0
      %v1404 = vmax.f32 %v1340, 0.0
      %v1405 = vmax.f32 %v1341, 0.0
      %v1406 = vmax.f32 %v1342, 0.0
      %v1407 = vmax.f32 %v1343, 0.0
      %v1408 = vmax.f32 %v1344, 0.0
      %v1409 = vmax.f32 %v1345, 0.0
      %v1410 = vmax.f32 %v1346, 0.0
      %v1411 = vmax.f32 %v1347, 0.0
      %v1412 = vmax.f32 %v1348, 0.0
      %v1413 = vmax.f32 %v1349, 0.0
      %v1414 = vmax.f32 %v1350, 0.0
      %v1415 = vmax.f32 %v1351, 0.0
      %v1416 = vmax.f32 %v1352, 0.0
      %v1417 = vmax.f32 %v1353, 0.0
      %v1418 = vmax.f32 %v1354, 0.0
      %v1419 = vmax.f32 %v1355, 0.0
      %v1420 = vmax.f32 %v1356, 0.0
      %v1421 = vmax.f32 %v1357, 0.0
      %v1422 = vmax.f32 %v1358, 0.0
      %v1423 = vmax.f32 %v1359, 0.0
      %v1424 = vmax.f32 %v1360, 0.0
      %v1425 = vmax.f32 %v1361, 0.0
      %v1426 = vmax.f32 %v1362, 0.0
      %v1427 = vmax.f32 %v1363, 0.0
      %v1428 = vmax.f32 %v1364, 0.0
      %v1429 = vmax.f32 %v1365, 0.0
      %v1430 = vmax.f32 %v1366, 0.0
      %v1431 = vmax.f32 %v1367, 0.0
      %v1432 = vmax.f32 %v1368, 0.0
      %v1433 = vmax.f32 %v1369, 0.0
      %1434 = vst [vmem:[%s275] sm:$0xff] %v1370
      %1435 = vst [vmem:[%s275 + $0x8] sm:$0xff] %v1371
      %1436 = vst [vmem:[%s275 + $0x10] sm:$0xff] %v1372
      %1437 = vst [vmem:[%s275 + $0x18] sm:$0xff] %v1373
      %1438 = vst [vmem:[%s275 + $0x20] sm:$0xff] %v1374
      %1439 = vst [vmem:[%s275 + $0x28] sm:$0xff] %v1375
      %1440 = vst [vmem:[%s275 + $0x30] sm:$0xff] %v1376
      %1441 = vst [vmem:[%s275 + $0x38] sm:$0xff] %v1377
      %1442 = vst [vmem:[%s275 + $0x40] sm:$0xff] %v1378
      %1443 = vst [vmem:[%s275 + $0x48] sm:$0xff] %v1379
      %1444 = vst [vmem:[%s275 + $0x50] sm:$0xff] %v1380
      %1445 = vst [vmem:[%s275 + $0x58] sm:$0xff] %v1381
      %1446 = vst [vmem:[%s275 + $0x60] sm:$0xff] %v1382
      %1447 = vst [vmem:[%s275 + $0x68] sm:$0xff] %v1383
      %1448 = vst [vmem:[%s275 + $0x70] sm:$0xff] %v1384
      %1449 = vst [vmem:[%s275 + $0x78] sm:$0xff] %v1385
      %1450 = vst [vmem:[%s275 + $0x80] sm:$0xff] %v1386
      %1451 = vst [vmem:[%s275 + $0x88] sm:$0xff] %v1387
      %1452 = vst [vmem:[%s275 + $0x90] sm:$0xff] %v1388
      %1453 = vst [vmem:[%s275 + $0x98] sm:$0xff] %v1389
      %1454 = vst [vmem:[%s275 + $0xa0] sm:$0xff] %v1390
      %1455 = vst [vmem:[%s275 + $0xa8] sm:$0xff] %v1391
      %1456 = vst [vmem:[%s275 + $0xb0] sm:$0xff] %v1392
      %1457 = vst [vmem:[%s275 + $0xb8] sm:$0xff] %v1393
      %1458 = vst [vmem:[%s275 + $0xc0] sm:$0xff] %v1394
      %1459 = vst [vmem:[%s275 + $0xc8] sm:$0xff] %v1395
      %1460 = vst [vmem:[%s275 + $0xd0] sm:$0xff] %v1396
      %1461 = vst [vmem:[%s275 + $0xd8] sm:$0xff] %v1397
      %1462 = vst [vmem:[%s275 + $0xe0] sm:$0xff] %v1398
      %1463 = vst [vmem:[%s275 + $0xe8] sm:$0xff] %v1399
      %1464 = vst [vmem:[%s275 + $0xf0] sm:$0xff] %v1400
      %1465 = vst [vmem:[%s275 + $0xf8] sm:$0xff] %v1401
      %1466 = vst [vmem:[%s275 + $0x100] sm:$0xff] %v1402
      %1467 = vst [vmem:[%s275 + $0x108] sm:$0xff] %v1403
      %1468 = vst [vmem:[%s275 + $0x110] sm:$0xff] %v1404
      %1469 = vst [vmem:[%s275 + $0x118] sm:$0xff] %v1405
      %1470 = vst [vmem:[%s275 + $0x120] sm:$0xff] %v1406
      %1471 = vst [vmem:[%s275 + $0x128] sm:$0xff] %v1407
      %1472 = vst [vmem:[%s275 + $0x130] sm:$0xff] %v1408
      %1473 = vst [vmem:[%s275 + $0x138] sm:$0xff] %v1409
      %1474 = vst [vmem:[%s275 + $0x140] sm:$0xff] %v1410
      %1475 = vst [vmem:[%s275 + $0x148] sm:$0xff] %v1411
      %1476 = vst [vmem:[%s275 + $0x150] sm:$0xff] %v1412
      %1477 = vst [vmem:[%s275 + $0x158] sm:$0xff] %v1413
      %1478 = vst [vmem:[%s275 + $0x160] sm:$0xff] %v1414
      %1479 = vst [vmem:[%s275 + $0x168] sm:$0xff] %v1415
      %1480 = vst [vmem:[%s275 + $0x170] sm:$0xff] %v1416
      %1481 = vst [vmem:[%s275 + $0x178] sm:$0xff] %v1417
      %1482 = vst [vmem:[%s275 + $0x180] sm:$0xff] %v1418
      %1483 = vst [vmem:[%s275 + $0x188] sm:$0xff] %v1419
      %1484 = vst [vmem:[%s275 + $0x190] sm:$0xff] %v1420
      %1485 = vst [vmem:[%s275 + $0x198] sm:$0xff] %v1421
      %1486 = vst [vmem:[%s275 + $0x1a0] sm:$0xff] %v1422
      %1487 = vst [vmem:[%s275 + $0x1a8] sm:$0xff] %v1423
      %1488 = vst [vmem:[%s275 + $0x1b0] sm:$0xff] %v1424
      %1489 = vst [vmem:[%s275 + $0x1b8] sm:$0xff] %v1425
      %1490 = vst [vmem:[%s275 + $0x1c0] sm:$0xff] %v1426
      %1491 = vst [vmem:[%s275 + $0x1c8] sm:$0xff] %v1427
      %1492 = vst [vmem:[%s275 + $0x1d0] sm:$0xff] %v1428
      %1493 = vst [vmem:[%s275 + $0x1d8] sm:$0xff] %v1429
      %1494 = vst [vmem:[%s275 + $0x1e0] sm:$0xff] %v1430
      %1495 = vst [vmem:[%s275 + $0x1e8] sm:$0xff] %v1431
      %1496 = vst [vmem:[%s275 + $0x1f0] sm:$0xff] %v1432
      %1497 = vst [vmem:[%s275 + $0x1f8] sm:$0xff] %v1433
      %s1498 = smul.u32 64, %s17
      %p1499 = scmp.lt.s32.totalorder %s1498, 255
      %s1500 = scalar_select %p1499, %s1498, 255
      %s1501 = smul.addr %s1500, 8
      %s1502 = scalar_lea.vmem %s6, %s1501
      // Predicated region
      $region45: #{_lraspp_forward.5} parent=43 // pred_check
        %p1503 = pneg %p171
      $region46: #{_lraspp_forward.5} parent=43 // pred_check_branch
        %1505 = sbr.rel (%p1503) target = $region48
      $region47: #{_lraspp_forward.5} parent=43 // pred_region
        %s1506 = smul.u32 64, %s17
      $region48: #{_lraspp_forward.5} parent=43 // pred_fallthru
        _
    $region44: #{_lraspp_forward.5} parent=5 // pred_fallthru
      _
    %p1507 = scmp.le.s32.totalorder 2, %s12
    // Predicated region
    $region49: #{_lraspp_forward.5} parent=5 // pred_check
      %p1508 = pneg %p1507
    $region50: #{_lraspp_forward.5} parent=5 // pred_check_branch
      %1510 = sbr.rel (%p1508) target = $region52
    $region51: #{_lraspp_forward.5} parent=5 // pred_region
      %s1511 = ssub.s32 %s12, 2
      // Predicated region
      $region53: #{_lraspp_forward.5} parent=51 // pred_check
        %p1512 = pneg %p177
      $region54: #{_lraspp_forward.5} parent=51 // pred_check_branch
        %1514 = sbr.rel (%p1512) target = $region56
      $region55: #{_lraspp_forward.5} parent=51 // pred_region
        %s1515 = smul.u32 64, %s18
        %p1516 = scmp.lt.s32.totalorder %s1515, 255
        %s1517 = scalar_select %p1516, %s1515, 255
        %s1518 = smul.addr %s1517, 8
        %s1519 = scalar_lea.vmem %s6, %s1518
      $region56: #{_lraspp_forward.5} parent=51 // pred_fallthru
        _
    $region52: #{_lraspp_forward.5} parent=5 // pred_fallthru
      _
  $region6: #{_lraspp_forward.5} parent=0 // loop_footer
    %s16 = sadd.s32 1, %s12
  $region7: #{_lraspp_forward.5} parent=0 // loop_footer_branch
    %11 = sbr.rel target = $region3
  $region8: #{_lraspp_forward.5} parent=0 // loop_exit
    _

</llo_original>
